<compile_context>
chip_gen: v6e
topology: v6e:2x2x1
jax: 0.10.0
libtpu: 0.0.40
codegen_flags: <defaults>
</compile_context>

<pallas_src>
import jax
import jax.numpy as jnp
from jax.experimental import pallas as pl
from jax.experimental.pallas import tpu as pltpu


def _make_decoder_block_kernel(has_skip):
    """Fused upsampled-concat -> pad -> conv/BN/ReLU -> pad -> conv/BN/ReLU kernel."""

    def kernel(*refs):
        if has_skip:
            (xup_ref, skip_ref, w1_ref, b1_ref, w2_ref, b2_ref,
             o_ref, buf1_ref, buf2_ref) = refs
        else:
            (xup_ref, w1_ref, b1_ref, w2_ref, b2_ref,
             o_ref, buf1_ref, buf2_ref) = refs
            skip_ref = None

        _, Ho, Wo, _ = xup_ref.shape
        Cout = o_ref.shape[3]
        WB = Wo + 2          # padded (flattened) row width
        L = Ho * WB          # flat conv-output rows (incl. 2 garbage cols per row)

        # Zero the padded buffers (1-pixel zero border + tail guard row).
        buf1_ref[...] = jnp.zeros_like(buf1_ref)
        buf2_ref[...] = jnp.zeros_like(buf2_ref)

        # Fused channel-concat + zero-pad: scatter each image row of
        # concat([upsampled x, skip]) into the row-flattened padded buffer.
        for y in range(Ho):
            r0 = (1 + y) * WB + 1
            if has_skip:
                row = jnp.concatenate([xup_ref[0, y], skip_ref[0, y]], axis=-1)
            else:
                row = xup_ref[0, y]
            buf1_ref[r0:r0 + Wo, :] = row.astype(buf1_ref.dtype)

        def conv3x3_bias_relu(buf_ref, w_ref, b_ref):
            # im2col over the flattened padded image: tap (dy, dx) is the
            # contiguous row-slice starting at dy*WB + dx.  A single MXU matmul
            # with K = 9*Cin replaces 9 tiny K=Cin matmuls; no non-contiguous
            # reshapes are needed.  Columns >= Wo of each flat row are garbage
            # and are dropped when the result is consumed.
            taps = [buf_ref[dy * WB + dx: dy * WB + dx + L, :]
                    for dy in range(3) for dx in range(3)]
            patches = jnp.concatenate(taps, axis=-1).astype(jnp.bfloat16)
            acc = jnp.dot(patches, w_ref[...],
                          preferred_element_type=jnp.float32)      # (L, Cout) f32
            return jnp.maximum(acc + b_ref[...], 0.0)               # folded BN bias + ReLU

        # conv1 + BN1 + ReLU
        y1 = conv3x3_bias_relu(buf1_ref, w1_ref, b1_ref)

        # Keep the intermediate activation in VMEM: re-pad it as the conv2 input
        # (valid columns only), no HBM round trip between the two convs.
        for y in range(Ho):
            r0 = (1 + y) * WB + 1
            buf2_ref[r0:r0 + Wo, :] = y1[y * WB: y * WB + Wo, :].astype(buf2_ref.dtype)

        # conv2 + BN2 + ReLU
        y2 = conv3x3_bias_relu(buf2_ref, w2_ref, b2_ref)
        for y in range(Ho):
            o_ref[0, y, :, :] = y2[y * WB: y * WB + Wo, :].astype(o_ref.dtype)

    return kernel


def _fold_bn(gamma, beta, mean, var, eps=1e-5):
    scale = gamma / jnp.sqrt(var + eps)
    bias = beta - mean * scale
    return scale, bias


def decoder_block_forward(params, x_nchw, skip_nchw=None):
    """DecoderBlock.forward.  x, skip in NCHW; output in NCHW (PyTorch convention)."""
    N, Cin, H, W = x_nchw.shape
    Ho, Wo = 2 * H, 2 * W
    Cout = params["w1"].shape[-1]
    c1_in = params["w1"].shape[2]           # Cin (+ Cskip if skip is used)

    # --- XLA glue at the block boundary (see module TODO): layout + nearest 2x ---
    x = jnp.transpose(x_nchw, (0, 2, 3, 1))                       # NCHW -> NHWC
    x = jnp.repeat(jnp.repeat(x, 2, axis=1), 2, axis=2)           # nearest, scale 2
    x = x.astype(jnp.bfloat16)                                    # halve HBM reads

    has_skip = skip_nchw is not None
    inputs = [x]
    in_specs = [pl.BlockSpec((1, Ho, Wo, Cin), lambda n: (n, 0, 0, 0))]
    if has_skip:
        Cskip = skip_nchw.shape[1]
        skip = jnp.transpose(skip_nchw, (0, 2, 3, 1)).astype(jnp.bfloat16)
        inputs.append(skip)
        in_specs.append(pl.BlockSpec((1, Ho, Wo, Cskip), lambda n: (n, 0, 0, 0)))
        # attention1(attention_type=None) == Identity

    # Fold eval-mode BatchNorm: scale goes into the conv weights, bias stays.
    s1, b1 = _fold_bn(params["g1"], params["b1"], params["m1"], params["v1"])
    s2, b2 = _fold_bn(params["g2"], params["b2"], params["m2"], params["v2"])
    w1 = (params["w1"] * s1[None, None, None, :]).reshape(9 * c1_in, Cout).astype(jnp.bfloat16)
    w2 = (params["w2"] * s2[None, None, None, :]).reshape(9 * Cout, Cout).astype(jnp.bfloat16)
    inputs += [w1, b1.reshape(1, Cout).astype(jnp.float32),
               w2, b2.reshape(1, Cout).astype(jnp.float32)]
    in_specs += [
        pl.BlockSpec((9 * c1_in, Cout), lambda n: (0, 0)),
        pl.BlockSpec((1, Cout), lambda n: (0, 0)),
        pl.BlockSpec((9 * Cout, Cout), lambda n: (0, 0)),
        pl.BlockSpec((1, Cout), lambda n: (0, 0)),
    ]

    R = (Ho + 3) * (Wo + 2)   # flat padded image rows + one guard row of zeros
    out_nhwc = pl.pallas_call(
        _make_decoder_block_kernel(has_skip),
        out_shape=jax.ShapeDtypeStruct((N, Ho, Wo, Cout), jnp.float32),
        grid=(N,),
        in_specs=in_specs,
        out_specs=pl.BlockSpec((1, Ho, Wo, Cout), lambda n: (n, 0, 0, 0)),
        scratch_shapes=[pltpu.VMEM((R, c1_in), jnp.float32),   # padded conv1 input
                        pltpu.VMEM((R, Cout), jnp.float32)],   # padded conv2 input
        compiler_params=pltpu.CompilerParams(
            dimension_semantics=("parallel",)),                # batch axis -> 2 TCs on v7x
    )(*inputs)
    # attention2(attention_type=None) == Identity
    return jnp.transpose(out_nhwc, (0, 3, 1, 2))               # NHWC -> NCHW


def init_decoder_block_params(key, in_channels, skip_channels, out_channels):
    cin1 = in_channels + skip_channels
    ks = jax.random.split(key, 8)
    return {
        "w1": 0.1 * jax.random.normal(ks[0], (3, 3, cin1, out_channels), jnp.float32),
        "w2": 0.1 * jax.random.normal(ks[1], (3, 3, out_channels, out_channels), jnp.float32),
        "g1": 1.0 + 0.05 * jax.random.normal(ks[2], (out_channels,), jnp.float32),
        "b1": 0.05 * jax.random.normal(ks[3], (out_channels,), jnp.float32),
        "m1": 0.01 * jax.random.normal(ks[4], (out_channels,), jnp.float32),
        "v1": 1.0 + 0.1 * jax.nn.softplus(jax.random.normal(ks[5], (out_channels,), jnp.float32)),
        "g2": 1.0 + 0.05 * jax.random.normal(ks[6], (out_channels,), jnp.float32),
        "b2": 0.05 * jax.random.normal(ks[7], (out_channels,), jnp.float32),
        "m2": jnp.zeros((out_channels,), jnp.float32),
        "v2": jnp.ones((out_channels,), jnp.float32),
    }


def _reference_forward(params, x_nchw, skip_nchw=None):
    """Pure-XLA reference with identical bf16 quantization points."""
    x = jnp.repeat(jnp.repeat(x_nchw, 2, axis=2), 2, axis=3)
    if skip_nchw is not None:
        x = jnp.concatenate([x, skip_nchw], axis=1)
    s1, b1 = _fold_bn(params["g1"], params["b1"], params["m1"], params["v1"])
    s2, b2 = _fold_bn(params["g2"], params["b2"], params["m2"], params["v2"])

    def conv_bn_relu(x, w_hwio, scale, bias):
        w = (w_hwio * scale[None, None, None, :]).astype(jnp.bfloat16)
        y = jax.lax.conv_general_dilated(
            x.astype(jnp.bfloat16), w, window_strides=(1, 1),
            padding=((1, 1), (1, 1)),
            dimension_numbers=("NCHW", "HWIO", "NCHW"),
            preferred_element_type=jnp.float32)
        return jnp.maximum(y + bias[None, :, None, None], 0.0)

    x = conv_bn_relu(x, params["w1"], s1, b1)
    x = conv_bn_relu(x, params["w2"], s2, b2)
    return x


if __name__ == "__main__":
    N = 2
    in_channels, skip_channels, out_channels = 4, 4, 8
    H, W = 8, 8                       # x spatial; skip is 2x (16x16)

    key = jax.random.PRNGKey(0)
    kx, kskip, kparams = jax.random.split(key, 3)
    x = jax.random.normal(kx, (N, in_channels, H, W), jnp.float32)
    skip = jax.random.normal(kskip, (N, skip_channels, 2 * H, 2 * W), jnp.float32)
    params = init_decoder_block_params(kparams, in_channels, skip_channels, out_channels)

    fwd = jax.jit(decoder_block_forward)
    out = jax.block_until_ready(fwd(params, x, skip))

    assert out.shape == (N, out_channels, 2 * H, 2 * W), out.shape
    assert bool(jnp.all(out >= 0.0))                      # ReLU output
    ref = jax.block_until_ready(_reference_forward(params, x, skip))
    max_err = float(jnp.max(jnp.abs(out - ref)))
    assert bool(jnp.allclose(out, ref, atol=5e-2, rtol=5e-2)), max_err
    print("KERNEL_OK")
</pallas_src>

<mosaic_0001>
module attributes {stable_mosaic.version = 11 : i64} {
  func.func @kernel(%arg0: i32, %arg1: memref<1x16x16x4xbf16, #tpu.memory_space<vmem>>, %arg2: memref<1x16x16x4xbf16, #tpu.memory_space<vmem>>, %arg3: memref<72x8xbf16, #tpu.memory_space<vmem>>, %arg4: memref<1x8xf32, #tpu.memory_space<vmem>>, %arg5: memref<72x8xbf16, #tpu.memory_space<vmem>>, %arg6: memref<1x8xf32, #tpu.memory_space<vmem>>, %arg7: memref<1x16x16x8xf32, #tpu.memory_space<vmem>>, %arg8: memref<342x8xf32, #tpu.memory_space<vmem>>, %arg9: memref<342x8xf32, #tpu.memory_space<vmem>>) attributes {dimension_semantics = [#tpu.dimension_semantics<parallel>], iteration_bounds = array<i64: 2>, scalar_prefetch = 0 : i64, scratch_operands = 2 : i64, tpu.core_type = #tpu.core_type<tc>, window_params = [{transform_indices = @transform_0, window_bounds = array<i64: 1, 16, 16, 4>}, {transform_indices = @transform_1, window_bounds = array<i64: 1, 16, 16, 4>}, {pipeline_mode = #tpu.pipeline_mode<synchronous>, transform_indices = @transform_2, window_bounds = array<i64: 72, 8>}, {pipeline_mode = #tpu.pipeline_mode<synchronous>, transform_indices = @transform_3, window_bounds = array<i64: 1, 8>}, {pipeline_mode = #tpu.pipeline_mode<synchronous>, transform_indices = @transform_4, window_bounds = array<i64: 72, 8>}, {pipeline_mode = #tpu.pipeline_mode<synchronous>, transform_indices = @transform_5, window_bounds = array<i64: 1, 8>}, {transform_indices = @transform_6, window_bounds = array<i64: 1, 16, 16, 8>}]} {
    %cst = arith.constant 0.000000e+00 : f32
    %0 = vector.broadcast %cst : f32 to vector<342x8xf32>
    %c0 = arith.constant 0 : index
    %c0_0 = arith.constant 0 : index
    %1 = vector.load %arg8[%c0, %c0_0] : memref<342x8xf32, #tpu.memory_space<vmem>>, vector<342x8xf32>
    tpu.vector_store %arg8[%c0, %c0_0], %0 {strides = array<i32>} : memref<342x8xf32, #tpu.memory_space<vmem>>, vector<342x8xf32>,
    %cst_1 = arith.constant 0.000000e+00 : f32
    %2 = vector.broadcast %cst_1 : f32 to vector<342x8xf32>
    %c0_2 = arith.constant 0 : index
    %c0_3 = arith.constant 0 : index
    %3 = vector.load %arg9[%c0_2, %c0_3] : memref<342x8xf32, #tpu.memory_space<vmem>>, vector<342x8xf32>
    tpu.vector_store %arg9[%c0_2, %c0_3], %2 {strides = array<i32>} : memref<342x8xf32, #tpu.memory_space<vmem>>, vector<342x8xf32>,
    %c0_4 = arith.constant 0 : index
    %c0_5 = arith.constant 0 : index
    %c0_6 = arith.constant 0 : index
    %c0_7 = arith.constant 0 : index
    %4 = vector.load %arg1[%c0_4, %c0_5, %c0_6, %c0_7] : memref<1x16x16x4xbf16, #tpu.memory_space<vmem>>, vector<1x1x16x4xbf16>
    %5 = vector.shape_cast %4 : vector<1x1x16x4xbf16> to vector<16x4xbf16>
    %c0_8 = arith.constant 0 : index
    %c0_9 = arith.constant 0 : index
    %c0_10 = arith.constant 0 : index
    %c0_11 = arith.constant 0 : index
    %6 = vector.load %arg2[%c0_8, %c0_9, %c0_10, %c0_11] : memref<1x16x16x4xbf16, #tpu.memory_space<vmem>>, vector<1x1x16x4xbf16>
    %7 = vector.shape_cast %6 : vector<1x1x16x4xbf16> to vector<16x4xbf16>
    %8 = tpu.concatenate %5, %7 in 1 : vector<16x4xbf16>, vector<16x4xbf16> -> vector<16x8xbf16>
    %9 = arith.extf %8 : vector<16x8xbf16> to vector<16x8xf32>
    %c19 = arith.constant 19 : index
    %c0_12 = arith.constant 0 : index
    %10 = vector.load %arg8[%c19, %c0_12] : memref<342x8xf32, #tpu.memory_space<vmem>>, vector<16x8xf32>
    tpu.vector_store %arg8[%c19, %c0_12], %9 {strides = array<i32>} : memref<342x8xf32, #tpu.memory_space<vmem>>, vector<16x8xf32>,
    %c0_13 = arith.constant 0 : index
    %c1 = arith.constant 1 : index
    %c0_14 = arith.constant 0 : index
    %c0_15 = arith.constant 0 : index
    %11 = vector.load %arg1[%c0_13, %c1, %c0_14, %c0_15] : memref<1x16x16x4xbf16, #tpu.memory_space<vmem>>, vector<1x1x16x4xbf16>
    %12 = vector.shape_cast %11 : vector<1x1x16x4xbf16> to vector<16x4xbf16>
    %c0_16 = arith.constant 0 : index
    %c1_17 = arith.constant 1 : index
    %c0_18 = arith.constant 0 : index
    %c0_19 = arith.constant 0 : index
    %13 = vector.load %arg2[%c0_16, %c1_17, %c0_18, %c0_19] : memref<1x16x16x4xbf16, #tpu.memory_space<vmem>>, vector<1x1x16x4xbf16>
    %14 = vector.shape_cast %13 : vector<1x1x16x4xbf16> to vector<16x4xbf16>
    %15 = tpu.concatenate %12, %14 in 1 : vector<16x4xbf16>, vector<16x4xbf16> -> vector<16x8xbf16>
    %16 = arith.extf %15 : vector<16x8xbf16> to vector<16x8xf32>
    %c37 = arith.constant 37 : index
    %c0_20 = arith.constant 0 : index
    %17 = vector.load %arg8[%c37, %c0_20] : memref<342x8xf32, #tpu.memory_space<vmem>>, vector<16x8xf32>
    tpu.vector_store %arg8[%c37, %c0_20], %16 {strides = array<i32>} : memref<342x8xf32, #tpu.memory_space<vmem>>, vector<16x8xf32>,
    %c0_21 = arith.constant 0 : index
    %c2 = arith.constant 2 : index
    %c0_22 = arith.constant 0 : index
    %c0_23 = arith.constant 0 : index
    %18 = vector.load %arg1[%c0_21, %c2, %c0_22, %c0_23] : memref<1x16x16x4xbf16, #tpu.memory_space<vmem>>, vector<1x1x16x4xbf16>
    %19 = vector.shape_cast %18 : vector<1x1x16x4xbf16> to vector<16x4xbf16>
    %c0_24 = arith.constant 0 : index
    %c2_25 = arith.constant 2 : index
    %c0_26 = arith.constant 0 : index
    %c0_27 = arith.constant 0 : index
    %20 = vector.load %arg2[%c0_24, %c2_25, %c0_26, %c0_27] : memref<1x16x16x4xbf16, #tpu.memory_space<vmem>>, vector<1x1x16x4xbf16>
    %21 = vector.shape_cast %20 : vector<1x1x16x4xbf16> to vector<16x4xbf16>
    %22 = tpu.concatenate %19, %21 in 1 : vector<16x4xbf16>, vector<16x4xbf16> -> vector<16x8xbf16>
    %23 = arith.extf %22 : vector<16x8xbf16> to vector<16x8xf32>
    %c55 = arith.constant 55 : index
    %c0_28 = arith.constant 0 : index
    %24 = vector.load %arg8[%c55, %c0_28] : memref<342x8xf32, #tpu.memory_space<vmem>>, vector<16x8xf32>
    tpu.vector_store %arg8[%c55, %c0_28], %23 {strides = array<i32>} : memref<342x8xf32, #tpu.memory_space<vmem>>, vector<16x8xf32>,
    %c0_29 = arith.constant 0 : index
    %c3 = arith.constant 3 : index
    %c0_30 = arith.constant 0 : index
    %c0_31 = arith.constant 0 : index
    %25 = vector.load %arg1[%c0_29, %c3, %c0_30, %c0_31] : memref<1x16x16x4xbf16, #tpu.memory_space<vmem>>, vector<1x1x16x4xbf16>
    %26 = vector.shape_cast %25 : vector<1x1x16x4xbf16> to vector<16x4xbf16>
    %c0_32 = arith.constant 0 : index
    %c3_33 = arith.constant 3 : index
    %c0_34 = arith.constant 0 : index
    %c0_35 = arith.constant 0 : index
    %27 = vector.load %arg2[%c0_32, %c3_33, %c0_34, %c0_35] : memref<1x16x16x4xbf16, #tpu.memory_space<vmem>>, vector<1x1x16x4xbf16>
    %28 = vector.shape_cast %27 : vector<1x1x16x4xbf16> to vector<16x4xbf16>
    %29 = tpu.concatenate %26, %28 in 1 : vector<16x4xbf16>, vector<16x4xbf16> -> vector<16x8xbf16>
    %30 = arith.extf %29 : vector<16x8xbf16> to vector<16x8xf32>
    %c73 = arith.constant 73 : index
    %c0_36 = arith.constant 0 : index
    %31 = vector.load %arg8[%c73, %c0_36] : memref<342x8xf32, #tpu.memory_space<vmem>>, vector<16x8xf32>
    tpu.vector_store %arg8[%c73, %c0_36], %30 {strides = array<i32>} : memref<342x8xf32, #tpu.memory_space<vmem>>, vector<16x8xf32>,
    %c0_37 = arith.constant 0 : index
    %c4 = arith.constant 4 : index
    %c0_38 = arith.constant 0 : index
    %c0_39 = arith.constant 0 : index
    %32 = vector.load %arg1[%c0_37, %c4, %c0_38, %c0_39] : memref<1x16x16x4xbf16, #tpu.memory_space<vmem>>, vector<1x1x16x4xbf16>
    %33 = vector.shape_cast %32 : vector<1x1x16x4xbf16> to vector<16x4xbf16>
    %c0_40 = arith.constant 0 : index
    %c4_41 = arith.constant 4 : index
    %c0_42 = arith.constant 0 : index
    %c0_43 = arith.constant 0 : index
    %34 = vector.load %arg2[%c0_40, %c4_41, %c0_42, %c0_43] : memref<1x16x16x4xbf16, #tpu.memory_space<vmem>>, vector<1x1x16x4xbf16>
    %35 = vector.shape_cast %34 : vector<1x1x16x4xbf16> to vector<16x4xbf16>
    %36 = tpu.concatenate %33, %35 in 1 : vector<16x4xbf16>, vector<16x4xbf16> -> vector<16x8xbf16>
    %37 = arith.extf %36 : vector<16x8xbf16> to vector<16x8xf32>
    %c91 = arith.constant 91 : index
    %c0_44 = arith.constant 0 : index
    %38 = vector.load %arg8[%c91, %c0_44] : memref<342x8xf32, #tpu.memory_space<vmem>>, vector<16x8xf32>
    tpu.vector_store %arg8[%c91, %c0_44], %37 {strides = array<i32>} : memref<342x8xf32, #tpu.memory_space<vmem>>, vector<16x8xf32>,
    %c0_45 = arith.constant 0 : index
    %c5 = arith.constant 5 : index
    %c0_46 = arith.constant 0 : index
    %c0_47 = arith.constant 0 : index
    %39 = vector.load %arg1[%c0_45, %c5, %c0_46, %c0_47] : memref<1x16x16x4xbf16, #tpu.memory_space<vmem>>, vector<1x1x16x4xbf16>
    %40 = vector.shape_cast %39 : vector<1x1x16x4xbf16> to vector<16x4xbf16>
    %c0_48 = arith.constant 0 : index
    %c5_49 = arith.constant 5 : index
    %c0_50 = arith.constant 0 : index
    %c0_51 = arith.constant 0 : index
    %41 = vector.load %arg2[%c0_48, %c5_49, %c0_50, %c0_51] : memref<1x16x16x4xbf16, #tpu.memory_space<vmem>>, vector<1x1x16x4xbf16>
    %42 = vector.shape_cast %41 : vector<1x1x16x4xbf16> to vector<16x4xbf16>
    %43 = tpu.concatenate %40, %42 in 1 : vector<16x4xbf16>, vector<16x4xbf16> -> vector<16x8xbf16>
    %44 = arith.extf %43 : vector<16x8xbf16> to vector<16x8xf32>
    %c109 = arith.constant 109 : index
    %c0_52 = arith.constant 0 : index
    %45 = vector.load %arg8[%c109, %c0_52] : memref<342x8xf32, #tpu.memory_space<vmem>>, vector<16x8xf32>
    tpu.vector_store %arg8[%c109, %c0_52], %44 {strides = array<i32>} : memref<342x8xf32, #tpu.memory_space<vmem>>, vector<16x8xf32>,
    %c0_53 = arith.constant 0 : index
    %c6 = arith.constant 6 : index
    %c0_54 = arith.constant 0 : index
    %c0_55 = arith.constant 0 : index
    %46 = vector.load %arg1[%c0_53, %c6, %c0_54, %c0_55] : memref<1x16x16x4xbf16, #tpu.memory_space<vmem>>, vector<1x1x16x4xbf16>
    %47 = vector.shape_cast %46 : vector<1x1x16x4xbf16> to vector<16x4xbf16>
    %c0_56 = arith.constant 0 : index
    %c6_57 = arith.constant 6 : index
    %c0_58 = arith.constant 0 : index
    %c0_59 = arith.constant 0 : index
    %48 = vector.load %arg2[%c0_56, %c6_57, %c0_58, %c0_59] : memref<1x16x16x4xbf16, #tpu.memory_space<vmem>>, vector<1x1x16x4xbf16>
    %49 = vector.shape_cast %48 : vector<1x1x16x4xbf16> to vector<16x4xbf16>
    %50 = tpu.concatenate %47, %49 in 1 : vector<16x4xbf16>, vector<16x4xbf16> -> vector<16x8xbf16>
    %51 = arith.extf %50 : vector<16x8xbf16> to vector<16x8xf32>
    %c127 = arith.constant 127 : index
    %c0_60 = arith.constant 0 : index
    %52 = vector.load %arg8[%c127, %c0_60] : memref<342x8xf32, #tpu.memory_space<vmem>>, vector<16x8xf32>
    tpu.vector_store %arg8[%c127, %c0_60], %51 {strides = array<i32>} : memref<342x8xf32, #tpu.memory_space<vmem>>, vector<16x8xf32>,
    %c0_61 = arith.constant 0 : index
    %c7 = arith.constant 7 : index
    %c0_62 = arith.constant 0 : index
    %c0_63 = arith.constant 0 : index
    %53 = vector.load %arg1[%c0_61, %c7, %c0_62, %c0_63] : memref<1x16x16x4xbf16, #tpu.memory_space<vmem>>, vector<1x1x16x4xbf16>
    %54 = vector.shape_cast %53 : vector<1x1x16x4xbf16> to vector<16x4xbf16>
    %c0_64 = arith.constant 0 : index
    %c7_65 = arith.constant 7 : index
    %c0_66 = arith.constant 0 : index
    %c0_67 = arith.constant 0 : index
    %55 = vector.load %arg2[%c0_64, %c7_65, %c0_66, %c0_67] : memref<1x16x16x4xbf16, #tpu.memory_space<vmem>>, vector<1x1x16x4xbf16>
    %56 = vector.shape_cast %55 : vector<1x1x16x4xbf16> to vector<16x4xbf16>
    %57 = tpu.concatenate %54, %56 in 1 : vector<16x4xbf16>, vector<16x4xbf16> -> vector<16x8xbf16>
    %58 = arith.extf %57 : vector<16x8xbf16> to vector<16x8xf32>
    %c145 = arith.constant 145 : index
    %c0_68 = arith.constant 0 : index
    %59 = vector.load %arg8[%c145, %c0_68] : memref<342x8xf32, #tpu.memory_space<vmem>>, vector<16x8xf32>
    tpu.vector_store %arg8[%c145, %c0_68], %58 {strides = array<i32>} : memref<342x8xf32, #tpu.memory_space<vmem>>, vector<16x8xf32>,
    %c0_69 = arith.constant 0 : index
    %c8 = arith.constant 8 : index
    %c0_70 = arith.constant 0 : index
    %c0_71 = arith.constant 0 : index
    %60 = vector.load %arg1[%c0_69, %c8, %c0_70, %c0_71] : memref<1x16x16x4xbf16, #tpu.memory_space<vmem>>, vector<1x1x16x4xbf16>
    %61 = vector.shape_cast %60 : vector<1x1x16x4xbf16> to vector<16x4xbf16>
    %c0_72 = arith.constant 0 : index
    %c8_73 = arith.constant 8 : index
    %c0_74 = arith.constant 0 : index
    %c0_75 = arith.constant 0 : index
    %62 = vector.load %arg2[%c0_72, %c8_73, %c0_74, %c0_75] : memref<1x16x16x4xbf16, #tpu.memory_space<vmem>>, vector<1x1x16x4xbf16>
    %63 = vector.shape_cast %62 : vector<1x1x16x4xbf16> to vector<16x4xbf16>
    %64 = tpu.concatenate %61, %63 in 1 : vector<16x4xbf16>, vector<16x4xbf16> -> vector<16x8xbf16>
    %65 = arith.extf %64 : vector<16x8xbf16> to vector<16x8xf32>
    %c163 = arith.constant 163 : index
    %c0_76 = arith.constant 0 : index
    %66 = vector.load %arg8[%c163, %c0_76] : memref<342x8xf32, #tpu.memory_space<vmem>>, vector<16x8xf32>
    tpu.vector_store %arg8[%c163, %c0_76], %65 {strides = array<i32>} : memref<342x8xf32, #tpu.memory_space<vmem>>, vector<16x8xf32>,
    %c0_77 = arith.constant 0 : index
    %c9 = arith.constant 9 : index
    %c0_78 = arith.constant 0 : index
    %c0_79 = arith.constant 0 : index
    %67 = vector.load %arg1[%c0_77, %c9, %c0_78, %c0_79] : memref<1x16x16x4xbf16, #tpu.memory_space<vmem>>, vector<1x1x16x4xbf16>
    %68 = vector.shape_cast %67 : vector<1x1x16x4xbf16> to vector<16x4xbf16>
    %c0_80 = arith.constant 0 : index
    %c9_81 = arith.constant 9 : index
    %c0_82 = arith.constant 0 : index
    %c0_83 = arith.constant 0 : index
    %69 = vector.load %arg2[%c0_80, %c9_81, %c0_82, %c0_83] : memref<1x16x16x4xbf16, #tpu.memory_space<vmem>>, vector<1x1x16x4xbf16>
    %70 = vector.shape_cast %69 : vector<1x1x16x4xbf16> to vector<16x4xbf16>
    %71 = tpu.concatenate %68, %70 in 1 : vector<16x4xbf16>, vector<16x4xbf16> -> vector<16x8xbf16>
    %72 = arith.extf %71 : vector<16x8xbf16> to vector<16x8xf32>
    %c181 = arith.constant 181 : index
    %c0_84 = arith.constant 0 : index
    %73 = vector.load %arg8[%c181, %c0_84] : memref<342x8xf32, #tpu.memory_space<vmem>>, vector<16x8xf32>
    tpu.vector_store %arg8[%c181, %c0_84], %72 {strides = array<i32>} : memref<342x8xf32, #tpu.memory_space<vmem>>, vector<16x8xf32>,
    %c0_85 = arith.constant 0 : index
    %c10 = arith.constant 10 : index
    %c0_86 = arith.constant 0 : index
    %c0_87 = arith.constant 0 : index
    %74 = vector.load %arg1[%c0_85, %c10, %c0_86, %c0_87] : memref<1x16x16x4xbf16, #tpu.memory_space<vmem>>, vector<1x1x16x4xbf16>
    %75 = vector.shape_cast %74 : vector<1x1x16x4xbf16> to vector<16x4xbf16>
    %c0_88 = arith.constant 0 : index
    %c10_89 = arith.constant 10 : index
    %c0_90 = arith.constant 0 : index
    %c0_91 = arith.constant 0 : index
    %76 = vector.load %arg2[%c0_88, %c10_89, %c0_90, %c0_91] : memref<1x16x16x4xbf16, #tpu.memory_space<vmem>>, vector<1x1x16x4xbf16>
    %77 = vector.shape_cast %76 : vector<1x1x16x4xbf16> to vector<16x4xbf16>
    %78 = tpu.concatenate %75, %77 in 1 : vector<16x4xbf16>, vector<16x4xbf16> -> vector<16x8xbf16>
    %79 = arith.extf %78 : vector<16x8xbf16> to vector<16x8xf32>
    %c199 = arith.constant 199 : index
    %c0_92 = arith.constant 0 : index
    %80 = vector.load %arg8[%c199, %c0_92] : memref<342x8xf32, #tpu.memory_space<vmem>>, vector<16x8xf32>
    tpu.vector_store %arg8[%c199, %c0_92], %79 {strides = array<i32>} : memref<342x8xf32, #tpu.memory_space<vmem>>, vector<16x8xf32>,
    %c0_93 = arith.constant 0 : index
    %c11 = arith.constant 11 : index
    %c0_94 = arith.constant 0 : index
    %c0_95 = arith.constant 0 : index
    %81 = vector.load %arg1[%c0_93, %c11, %c0_94, %c0_95] : memref<1x16x16x4xbf16, #tpu.memory_space<vmem>>, vector<1x1x16x4xbf16>
    %82 = vector.shape_cast %81 : vector<1x1x16x4xbf16> to vector<16x4xbf16>
    %c0_96 = arith.constant 0 : index
    %c11_97 = arith.constant 11 : index
    %c0_98 = arith.constant 0 : index
    %c0_99 = arith.constant 0 : index
    %83 = vector.load %arg2[%c0_96, %c11_97, %c0_98, %c0_99] : memref<1x16x16x4xbf16, #tpu.memory_space<vmem>>, vector<1x1x16x4xbf16>
    %84 = vector.shape_cast %83 : vector<1x1x16x4xbf16> to vector<16x4xbf16>
    %85 = tpu.concatenate %82, %84 in 1 : vector<16x4xbf16>, vector<16x4xbf16> -> vector<16x8xbf16>
    %86 = arith.extf %85 : vector<16x8xbf16> to vector<16x8xf32>
    %c217 = arith.constant 217 : index
    %c0_100 = arith.constant 0 : index
    %87 = vector.load %arg8[%c217, %c0_100] : memref<342x8xf32, #tpu.memory_space<vmem>>, vector<16x8xf32>
    tpu.vector_store %arg8[%c217, %c0_100], %86 {strides = array<i32>} : memref<342x8xf32, #tpu.memory_space<vmem>>, vector<16x8xf32>,
    %c0_101 = arith.constant 0 : index
    %c12 = arith.constant 12 : index
    %c0_102 = arith.constant 0 : index
    %c0_103 = arith.constant 0 : index
    %88 = vector.load %arg1[%c0_101, %c12, %c0_102, %c0_103] : memref<1x16x16x4xbf16, #tpu.memory_space<vmem>>, vector<1x1x16x4xbf16>
    %89 = vector.shape_cast %88 : vector<1x1x16x4xbf16> to vector<16x4xbf16>
    %c0_104 = arith.constant 0 : index
    %c12_105 = arith.constant 12 : index
    %c0_106 = arith.constant 0 : index
    %c0_107 = arith.constant 0 : index
    %90 = vector.load %arg2[%c0_104, %c12_105, %c0_106, %c0_107] : memref<1x16x16x4xbf16, #tpu.memory_space<vmem>>, vector<1x1x16x4xbf16>
    %91 = vector.shape_cast %90 : vector<1x1x16x4xbf16> to vector<16x4xbf16>
    %92 = tpu.concatenate %89, %91 in 1 : vector<16x4xbf16>, vector<16x4xbf16> -> vector<16x8xbf16>
    %93 = arith.extf %92 : vector<16x8xbf16> to vector<16x8xf32>
    %c235 = arith.constant 235 : index
    %c0_108 = arith.constant 0 : index
    %94 = vector.load %arg8[%c235, %c0_108] : memref<342x8xf32, #tpu.memory_space<vmem>>, vector<16x8xf32>
    tpu.vector_store %arg8[%c235, %c0_108], %93 {strides = array<i32>} : memref<342x8xf32, #tpu.memory_space<vmem>>, vector<16x8xf32>,
    %c0_109 = arith.constant 0 : index
    %c13 = arith.constant 13 : index
    %c0_110 = arith.constant 0 : index
    %c0_111 = arith.constant 0 : index
    %95 = vector.load %arg1[%c0_109, %c13, %c0_110, %c0_111] : memref<1x16x16x4xbf16, #tpu.memory_space<vmem>>, vector<1x1x16x4xbf16>
    %96 = vector.shape_cast %95 : vector<1x1x16x4xbf16> to vector<16x4xbf16>
    %c0_112 = arith.constant 0 : index
    %c13_113 = arith.constant 13 : index
    %c0_114 = arith.constant 0 : index
    %c0_115 = arith.constant 0 : index
    %97 = vector.load %arg2[%c0_112, %c13_113, %c0_114, %c0_115] : memref<1x16x16x4xbf16, #tpu.memory_space<vmem>>, vector<1x1x16x4xbf16>
    %98 = vector.shape_cast %97 : vector<1x1x16x4xbf16> to vector<16x4xbf16>
    %99 = tpu.concatenate %96, %98 in 1 : vector<16x4xbf16>, vector<16x4xbf16> -> vector<16x8xbf16>
    %100 = arith.extf %99 : vector<16x8xbf16> to vector<16x8xf32>
    %c253 = arith.constant 253 : index
    %c0_116 = arith.constant 0 : index
    %101 = vector.load %arg8[%c253, %c0_116] : memref<342x8xf32, #tpu.memory_space<vmem>>, vector<16x8xf32>
    tpu.vector_store %arg8[%c253, %c0_116], %100 {strides = array<i32>} : memref<342x8xf32, #tpu.memory_space<vmem>>, vector<16x8xf32>,
    %c0_117 = arith.constant 0 : index
    %c14 = arith.constant 14 : index
    %c0_118 = arith.constant 0 : index
    %c0_119 = arith.constant 0 : index
    %102 = vector.load %arg1[%c0_117, %c14, %c0_118, %c0_119] : memref<1x16x16x4xbf16, #tpu.memory_space<vmem>>, vector<1x1x16x4xbf16>
    %103 = vector.shape_cast %102 : vector<1x1x16x4xbf16> to vector<16x4xbf16>
    %c0_120 = arith.constant 0 : index
    %c14_121 = arith.constant 14 : index
    %c0_122 = arith.constant 0 : index
    %c0_123 = arith.constant 0 : index
    %104 = vector.load %arg2[%c0_120, %c14_121, %c0_122, %c0_123] : memref<1x16x16x4xbf16, #tpu.memory_space<vmem>>, vector<1x1x16x4xbf16>
    %105 = vector.shape_cast %104 : vector<1x1x16x4xbf16> to vector<16x4xbf16>
    %106 = tpu.concatenate %103, %105 in 1 : vector<16x4xbf16>, vector<16x4xbf16> -> vector<16x8xbf16>
    %107 = arith.extf %106 : vector<16x8xbf16> to vector<16x8xf32>
    %c271 = arith.constant 271 : index
    %c0_124 = arith.constant 0 : index
    %108 = vector.load %arg8[%c271, %c0_124] : memref<342x8xf32, #tpu.memory_space<vmem>>, vector<16x8xf32>
    tpu.vector_store %arg8[%c271, %c0_124], %107 {strides = array<i32>} : memref<342x8xf32, #tpu.memory_space<vmem>>, vector<16x8xf32>,
    %c0_125 = arith.constant 0 : index
    %c15 = arith.constant 15 : index
    %c0_126 = arith.constant 0 : index
    %c0_127 = arith.constant 0 : index
    %109 = vector.load %arg1[%c0_125, %c15, %c0_126, %c0_127] : memref<1x16x16x4xbf16, #tpu.memory_space<vmem>>, vector<1x1x16x4xbf16>
    %110 = vector.shape_cast %109 : vector<1x1x16x4xbf16> to vector<16x4xbf16>
    %c0_128 = arith.constant 0 : index
    %c15_129 = arith.constant 15 : index
    %c0_130 = arith.constant 0 : index
    %c0_131 = arith.constant 0 : index
    %111 = vector.load %arg2[%c0_128, %c15_129, %c0_130, %c0_131] : memref<1x16x16x4xbf16, #tpu.memory_space<vmem>>, vector<1x1x16x4xbf16>
    %112 = vector.shape_cast %111 : vector<1x1x16x4xbf16> to vector<16x4xbf16>
    %113 = tpu.concatenate %110, %112 in 1 : vector<16x4xbf16>, vector<16x4xbf16> -> vector<16x8xbf16>
    %114 = arith.extf %113 : vector<16x8xbf16> to vector<16x8xf32>
    %c289 = arith.constant 289 : index
    %c0_132 = arith.constant 0 : index
    %115 = vector.load %arg8[%c289, %c0_132] : memref<342x8xf32, #tpu.memory_space<vmem>>, vector<16x8xf32>
    tpu.vector_store %arg8[%c289, %c0_132], %114 {strides = array<i32>} : memref<342x8xf32, #tpu.memory_space<vmem>>, vector<16x8xf32>,
    %c0_133 = arith.constant 0 : index
    %c0_134 = arith.constant 0 : index
    %116 = vector.load %arg8[%c0_133, %c0_134] : memref<342x8xf32, #tpu.memory_space<vmem>>, vector<288x8xf32>
    %c1_135 = arith.constant 1 : index
    %c0_136 = arith.constant 0 : index
    %117 = vector.load %arg8[%c1_135, %c0_136] : memref<342x8xf32, #tpu.memory_space<vmem>>, vector<288x8xf32>
    %c2_137 = arith.constant 2 : index
    %c0_138 = arith.constant 0 : index
    %118 = vector.load %arg8[%c2_137, %c0_138] : memref<342x8xf32, #tpu.memory_space<vmem>>, vector<288x8xf32>
    %c18 = arith.constant 18 : index
    %c0_139 = arith.constant 0 : index
    %119 = vector.load %arg8[%c18, %c0_139] : memref<342x8xf32, #tpu.memory_space<vmem>>, vector<288x8xf32>
    %c19_140 = arith.constant 19 : index
    %c0_141 = arith.constant 0 : index
    %120 = vector.load %arg8[%c19_140, %c0_141] : memref<342x8xf32, #tpu.memory_space<vmem>>, vector<288x8xf32>
    %c20 = arith.constant 20 : index
    %c0_142 = arith.constant 0 : index
    %121 = vector.load %arg8[%c20, %c0_142] : memref<342x8xf32, #tpu.memory_space<vmem>>, vector<288x8xf32>
    %c36 = arith.constant 36 : index
    %c0_143 = arith.constant 0 : index
    %122 = vector.load %arg8[%c36, %c0_143] : memref<342x8xf32, #tpu.memory_space<vmem>>, vector<288x8xf32>
    %c37_144 = arith.constant 37 : index
    %c0_145 = arith.constant 0 : index
    %123 = vector.load %arg8[%c37_144, %c0_145] : memref<342x8xf32, #tpu.memory_space<vmem>>, vector<288x8xf32>
    %c38 = arith.constant 38 : index
    %c0_146 = arith.constant 0 : index
    %124 = vector.load %arg8[%c38, %c0_146] : memref<342x8xf32, #tpu.memory_space<vmem>>, vector<288x8xf32>
    %125 = tpu.concatenate %116, %117, %118, %119, %120, %121, %122, %123, %124 in 1 : vector<288x8xf32>, vector<288x8xf32>, vector<288x8xf32>, vector<288x8xf32>, vector<288x8xf32>, vector<288x8xf32>, vector<288x8xf32>, vector<288x8xf32>, vector<288x8xf32> -> vector<288x72xf32>
    %126 = arith.truncf %125 : vector<288x72xf32> to vector<288x72xbf16>
    %c0_147 = arith.constant 0 : index
    %c0_148 = arith.constant 0 : index
    %127 = vector.load %arg3[%c0_147, %c0_148] : memref<72x8xbf16, #tpu.memory_space<vmem>>, vector<72x8xbf16>
    %cst_149 = arith.constant dense<0.000000e+00> : vector<288x8xf32>
    %128 = tpu.matmul %126, %127, %cst_149 {dimension_numbers = #tpu.dot_dimension_numbers<[1], [0], [0], [1], [0, 0, 1, 1], [], []>} : vector<288x72xbf16>, vector<72x8xbf16>, vector<288x8xf32> -> vector<288x8xf32>
    %c0_150 = arith.constant 0 : index
    %c0_151 = arith.constant 0 : index
    %129 = vector.load %arg4[%c0_150, %c0_151] : memref<1x8xf32, #tpu.memory_space<vmem>>, vector<1x8xf32>
    %130 = vector.broadcast %129 : vector<1x8xf32> to vector<288x8xf32>
    %131 = arith.addf %128, %130 : vector<288x8xf32>
    %cst_152 = arith.constant 0.000000e+00 : f32
    %132 = vector.broadcast %cst_152 : f32 to vector<288x8xf32>
    %133 = arith.maximumf %131, %132 : vector<288x8xf32>
    %134 = vector.extract_strided_slice %133 {offsets = [0, 0], sizes = [16, 8], strides = [1, 1]} : vector<288x8xf32> to vector<16x8xf32>
    %c19_153 = arith.constant 19 : index
    %c0_154 = arith.constant 0 : index
    %135 = vector.load %arg9[%c19_153, %c0_154] : memref<342x8xf32, #tpu.memory_space<vmem>>, vector<16x8xf32>
    tpu.vector_store %arg9[%c19_153, %c0_154], %134 {strides = array<i32>} : memref<342x8xf32, #tpu.memory_space<vmem>>, vector<16x8xf32>,
    %136 = vector.extract_strided_slice %133 {offsets = [18, 0], sizes = [16, 8], strides = [1, 1]} : vector<288x8xf32> to vector<16x8xf32>
    %c37_155 = arith.constant 37 : index
    %c0_156 = arith.constant 0 : index
    %137 = vector.load %arg9[%c37_155, %c0_156] : memref<342x8xf32, #tpu.memory_space<vmem>>, vector<16x8xf32>
    tpu.vector_store %arg9[%c37_155, %c0_156], %136 {strides = array<i32>} : memref<342x8xf32, #tpu.memory_space<vmem>>, vector<16x8xf32>,
    %138 = vector.extract_strided_slice %133 {offsets = [36, 0], sizes = [16, 8], strides = [1, 1]} : vector<288x8xf32> to vector<16x8xf32>
    %c55_157 = arith.constant 55 : index
    %c0_158 = arith.constant 0 : index
    %139 = vector.load %arg9[%c55_157, %c0_158] : memref<342x8xf32, #tpu.memory_space<vmem>>, vector<16x8xf32>
    tpu.vector_store %arg9[%c55_157, %c0_158], %138 {strides = array<i32>} : memref<342x8xf32, #tpu.memory_space<vmem>>, vector<16x8xf32>,
    %140 = vector.extract_strided_slice %133 {offsets = [54, 0], sizes = [16, 8], strides = [1, 1]} : vector<288x8xf32> to vector<16x8xf32>
    %c73_159 = arith.constant 73 : index
    %c0_160 = arith.constant 0 : index
    %141 = vector.load %arg9[%c73_159, %c0_160] : memref<342x8xf32, #tpu.memory_space<vmem>>, vector<16x8xf32>
    tpu.vector_store %arg9[%c73_159, %c0_160], %140 {strides = array<i32>} : memref<342x8xf32, #tpu.memory_space<vmem>>, vector<16x8xf32>,
    %142 = vector.extract_strided_slice %133 {offsets = [72, 0], sizes = [16, 8], strides = [1, 1]} : vector<288x8xf32> to vector<16x8xf32>
    %c91_161 = arith.constant 91 : index
    %c0_162 = arith.constant 0 : index
    %143 = vector.load %arg9[%c91_161, %c0_162] : memref<342x8xf32, #tpu.memory_space<vmem>>, vector<16x8xf32>
    tpu.vector_store %arg9[%c91_161, %c0_162], %142 {strides = array<i32>} : memref<342x8xf32, #tpu.memory_space<vmem>>, vector<16x8xf32>,
    %144 = vector.extract_strided_slice %133 {offsets = [90, 0], sizes = [16, 8], strides = [1, 1]} : vector<288x8xf32> to vector<16x8xf32>
    %c109_163 = arith.constant 109 : index
    %c0_164 = arith.constant 0 : index
    %145 = vector.load %arg9[%c109_163, %c0_164] : memref<342x8xf32, #tpu.memory_space<vmem>>, vector<16x8xf32>
    tpu.vector_store %arg9[%c109_163, %c0_164], %144 {strides = array<i32>} : memref<342x8xf32, #tpu.memory_space<vmem>>, vector<16x8xf32>,
    %146 = vector.extract_strided_slice %133 {offsets = [108, 0], sizes = [16, 8], strides = [1, 1]} : vector<288x8xf32> to vector<16x8xf32>
    %c127_165 = arith.constant 127 : index
    %c0_166 = arith.constant 0 : index
    %147 = vector.load %arg9[%c127_165, %c0_166] : memref<342x8xf32, #tpu.memory_space<vmem>>, vector<16x8xf32>
    tpu.vector_store %arg9[%c127_165, %c0_166], %146 {strides = array<i32>} : memref<342x8xf32, #tpu.memory_space<vmem>>, vector<16x8xf32>,
    %148 = vector.extract_strided_slice %133 {offsets = [126, 0], sizes = [16, 8], strides = [1, 1]} : vector<288x8xf32> to vector<16x8xf32>
    %c145_167 = arith.constant 145 : index
    %c0_168 = arith.constant 0 : index
    %149 = vector.load %arg9[%c145_167, %c0_168] : memref<342x8xf32, #tpu.memory_space<vmem>>, vector<16x8xf32>
    tpu.vector_store %arg9[%c145_167, %c0_168], %148 {strides = array<i32>} : memref<342x8xf32, #tpu.memory_space<vmem>>, vector<16x8xf32>,
    %150 = vector.extract_strided_slice %133 {offsets = [144, 0], sizes = [16, 8], strides = [1, 1]} : vector<288x8xf32> to vector<16x8xf32>
    %c163_169 = arith.constant 163 : index
    %c0_170 = arith.constant 0 : index
    %151 = vector.load %arg9[%c163_169, %c0_170] : memref<342x8xf32, #tpu.memory_space<vmem>>, vector<16x8xf32>
    tpu.vector_store %arg9[%c163_169, %c0_170], %150 {strides = array<i32>} : memref<342x8xf32, #tpu.memory_space<vmem>>, vector<16x8xf32>,
    %152 = vector.extract_strided_slice %133 {offsets = [162, 0], sizes = [16, 8], strides = [1, 1]} : vector<288x8xf32> to vector<16x8xf32>
    %c181_171 = arith.constant 181 : index
    %c0_172 = arith.constant 0 : index
    %153 = vector.load %arg9[%c181_171, %c0_172] : memref<342x8xf32, #tpu.memory_space<vmem>>, vector<16x8xf32>
    tpu.vector_store %arg9[%c181_171, %c0_172], %152 {strides = array<i32>} : memref<342x8xf32, #tpu.memory_space<vmem>>, vector<16x8xf32>,
    %154 = vector.extract_strided_slice %133 {offsets = [180, 0], sizes = [16, 8], strides = [1, 1]} : vector<288x8xf32> to vector<16x8xf32>
    %c199_173 = arith.constant 199 : index
    %c0_174 = arith.constant 0 : index
    %155 = vector.load %arg9[%c199_173, %c0_174] : memref<342x8xf32, #tpu.memory_space<vmem>>, vector<16x8xf32>
    tpu.vector_store %arg9[%c199_173, %c0_174], %154 {strides = array<i32>} : memref<342x8xf32, #tpu.memory_space<vmem>>, vector<16x8xf32>,
    %156 = vector.extract_strided_slice %133 {offsets = [198, 0], sizes = [16, 8], strides = [1, 1]} : vector<288x8xf32> to vector<16x8xf32>
    %c217_175 = arith.constant 217 : index
    %c0_176 = arith.constant 0 : index
    %157 = vector.load %arg9[%c217_175, %c0_176] : memref<342x8xf32, #tpu.memory_space<vmem>>, vector<16x8xf32>
    tpu.vector_store %arg9[%c217_175, %c0_176], %156 {strides = array<i32>} : memref<342x8xf32, #tpu.memory_space<vmem>>, vector<16x8xf32>,
    %158 = vector.extract_strided_slice %133 {offsets = [216, 0], sizes = [16, 8], strides = [1, 1]} : vector<288x8xf32> to vector<16x8xf32>
    %c235_177 = arith.constant 235 : index
    %c0_178 = arith.constant 0 : index
    %159 = vector.load %arg9[%c235_177, %c0_178] : memref<342x8xf32, #tpu.memory_space<vmem>>, vector<16x8xf32>
    tpu.vector_store %arg9[%c235_177, %c0_178], %158 {strides = array<i32>} : memref<342x8xf32, #tpu.memory_space<vmem>>, vector<16x8xf32>,
    %160 = vector.extract_strided_slice %133 {offsets = [234, 0], sizes = [16, 8], strides = [1, 1]} : vector<288x8xf32> to vector<16x8xf32>
    %c253_179 = arith.constant 253 : index
    %c0_180 = arith.constant 0 : index
    %161 = vector.load %arg9[%c253_179, %c0_180] : memref<342x8xf32, #tpu.memory_space<vmem>>, vector<16x8xf32>
    tpu.vector_store %arg9[%c253_179, %c0_180], %160 {strides = array<i32>} : memref<342x8xf32, #tpu.memory_space<vmem>>, vector<16x8xf32>,
    %162 = vector.extract_strided_slice %133 {offsets = [252, 0], sizes = [16, 8], strides = [1, 1]} : vector<288x8xf32> to vector<16x8xf32>
    %c271_181 = arith.constant 271 : index
    %c0_182 = arith.constant 0 : index
    %163 = vector.load %arg9[%c271_181, %c0_182] : memref<342x8xf32, #tpu.memory_space<vmem>>, vector<16x8xf32>
    tpu.vector_store %arg9[%c271_181, %c0_182], %162 {strides = array<i32>} : memref<342x8xf32, #tpu.memory_space<vmem>>, vector<16x8xf32>,
    %164 = vector.extract_strided_slice %133 {offsets = [270, 0], sizes = [16, 8], strides = [1, 1]} : vector<288x8xf32> to vector<16x8xf32>
    %c289_183 = arith.constant 289 : index
    %c0_184 = arith.constant 0 : index
    %165 = vector.load %arg9[%c289_183, %c0_184] : memref<342x8xf32, #tpu.memory_space<vmem>>, vector<16x8xf32>
    tpu.vector_store %arg9[%c289_183, %c0_184], %164 {strides = array<i32>} : memref<342x8xf32, #tpu.memory_space<vmem>>, vector<16x8xf32>,
    %c0_185 = arith.constant 0 : index
    %c0_186 = arith.constant 0 : index
    %166 = vector.load %arg9[%c0_185, %c0_186] : memref<342x8xf32, #tpu.memory_space<vmem>>, vector<288x8xf32>
    %c1_187 = arith.constant 1 : index
    %c0_188 = arith.constant 0 : index
    %167 = vector.load %arg9[%c1_187, %c0_188] : memref<342x8xf32, #tpu.memory_space<vmem>>, vector<288x8xf32>
    %c2_189 = arith.constant 2 : index
    %c0_190 = arith.constant 0 : index
    %168 = vector.load %arg9[%c2_189, %c0_190] : memref<342x8xf32, #tpu.memory_space<vmem>>, vector<288x8xf32>
    %c18_191 = arith.constant 18 : index
    %c0_192 = arith.constant 0 : index
    %169 = vector.load %arg9[%c18_191, %c0_192] : memref<342x8xf32, #tpu.memory_space<vmem>>, vector<288x8xf32>
    %c19_193 = arith.constant 19 : index
    %c0_194 = arith.constant 0 : index
    %170 = vector.load %arg9[%c19_193, %c0_194] : memref<342x8xf32, #tpu.memory_space<vmem>>, vector<288x8xf32>
    %c20_195 = arith.constant 20 : index
    %c0_196 = arith.constant 0 : index
    %171 = vector.load %arg9[%c20_195, %c0_196] : memref<342x8xf32, #tpu.memory_space<vmem>>, vector<288x8xf32>
    %c36_197 = arith.constant 36 : index
    %c0_198 = arith.constant 0 : index
    %172 = vector.load %arg9[%c36_197, %c0_198] : memref<342x8xf32, #tpu.memory_space<vmem>>, vector<288x8xf32>
    %c37_199 = arith.constant 37 : index
    %c0_200 = arith.constant 0 : index
    %173 = vector.load %arg9[%c37_199, %c0_200] : memref<342x8xf32, #tpu.memory_space<vmem>>, vector<288x8xf32>
    %c38_201 = arith.constant 38 : index
    %c0_202 = arith.constant 0 : index
    %174 = vector.load %arg9[%c38_201, %c0_202] : memref<342x8xf32, #tpu.memory_space<vmem>>, vector<288x8xf32>
    %175 = tpu.concatenate %166, %167, %168, %169, %170, %171, %172, %173, %174 in 1 : vector<288x8xf32>, vector<288x8xf32>, vector<288x8xf32>, vector<288x8xf32>, vector<288x8xf32>, vector<288x8xf32>, vector<288x8xf32>, vector<288x8xf32>, vector<288x8xf32> -> vector<288x72xf32>
    %176 = arith.truncf %175 : vector<288x72xf32> to vector<288x72xbf16>
    %c0_203 = arith.constant 0 : index
    %c0_204 = arith.constant 0 : index
    %177 = vector.load %arg5[%c0_203, %c0_204] : memref<72x8xbf16, #tpu.memory_space<vmem>>, vector<72x8xbf16>
    %cst_205 = arith.constant dense<0.000000e+00> : vector<288x8xf32>
    %178 = tpu.matmul %176, %177, %cst_205 {dimension_numbers = #tpu.dot_dimension_numbers<[1], [0], [0], [1], [0, 0, 1, 1], [], []>} : vector<288x72xbf16>, vector<72x8xbf16>, vector<288x8xf32> -> vector<288x8xf32>
    %c0_206 = arith.constant 0 : index
    %c0_207 = arith.constant 0 : index
    %179 = vector.load %arg6[%c0_206, %c0_207] : memref<1x8xf32, #tpu.memory_space<vmem>>, vector<1x8xf32>
    %180 = vector.broadcast %179 : vector<1x8xf32> to vector<288x8xf32>
    %181 = arith.addf %178, %180 : vector<288x8xf32>
    %cst_208 = arith.constant 0.000000e+00 : f32
    %182 = vector.broadcast %cst_208 : f32 to vector<288x8xf32>
    %183 = arith.maximumf %181, %182 : vector<288x8xf32>
    %184 = vector.extract_strided_slice %183 {offsets = [0, 0], sizes = [16, 8], strides = [1, 1]} : vector<288x8xf32> to vector<16x8xf32>
    %c0_209 = arith.constant 0 : index
    %c0_210 = arith.constant 0 : index
    %c0_211 = arith.constant 0 : index
    %c0_212 = arith.constant 0 : index
    %185 = vector.load %arg7[%c0_209, %c0_210, %c0_211, %c0_212] : memref<1x16x16x8xf32, #tpu.memory_space<vmem>>, vector<1x1x16x8xf32>
    %186 = vector.shape_cast %185 : vector<1x1x16x8xf32> to vector<16x8xf32>
    %187 = vector.shape_cast %184 : vector<16x8xf32> to vector<1x1x16x8xf32>
    tpu.vector_store %arg7[%c0_209, %c0_210, %c0_211, %c0_212], %187 {strides = array<i32>} : memref<1x16x16x8xf32, #tpu.memory_space<vmem>>, vector<1x1x16x8xf32>,
    %188 = vector.extract_strided_slice %183 {offsets = [18, 0], sizes = [16, 8], strides = [1, 1]} : vector<288x8xf32> to vector<16x8xf32>
    %c0_213 = arith.constant 0 : index
    %c1_214 = arith.constant 1 : index
    %c0_215 = arith.constant 0 : index
    %c0_216 = arith.constant 0 : index
    %189 = vector.load %arg7[%c0_213, %c1_214, %c0_215, %c0_216] : memref<1x16x16x8xf32, #tpu.memory_space<vmem>>, vector<1x1x16x8xf32>
    %190 = vector.shape_cast %189 : vector<1x1x16x8xf32> to vector<16x8xf32>
    %191 = vector.shape_cast %188 : vector<16x8xf32> to vector<1x1x16x8xf32>
    tpu.vector_store %arg7[%c0_213, %c1_214, %c0_215, %c0_216], %191 {strides = array<i32>} : memref<1x16x16x8xf32, #tpu.memory_space<vmem>>, vector<1x1x16x8xf32>,
    %192 = vector.extract_strided_slice %183 {offsets = [36, 0], sizes = [16, 8], strides = [1, 1]} : vector<288x8xf32> to vector<16x8xf32>
    %c0_217 = arith.constant 0 : index
    %c2_218 = arith.constant 2 : index
    %c0_219 = arith.constant 0 : index
    %c0_220 = arith.constant 0 : index
    %193 = vector.load %arg7[%c0_217, %c2_218, %c0_219, %c0_220] : memref<1x16x16x8xf32, #tpu.memory_space<vmem>>, vector<1x1x16x8xf32>
    %194 = vector.shape_cast %193 : vector<1x1x16x8xf32> to vector<16x8xf32>
    %195 = vector.shape_cast %192 : vector<16x8xf32> to vector<1x1x16x8xf32>
    tpu.vector_store %arg7[%c0_217, %c2_218, %c0_219, %c0_220], %195 {strides = array<i32>} : memref<1x16x16x8xf32, #tpu.memory_space<vmem>>, vector<1x1x16x8xf32>,
    %196 = vector.extract_strided_slice %183 {offsets = [54, 0], sizes = [16, 8], strides = [1, 1]} : vector<288x8xf32> to vector<16x8xf32>
    %c0_221 = arith.constant 0 : index
    %c3_222 = arith.constant 3 : index
    %c0_223 = arith.constant 0 : index
    %c0_224 = arith.constant 0 : index
    %197 = vector.load %arg7[%c0_221, %c3_222, %c0_223, %c0_224] : memref<1x16x16x8xf32, #tpu.memory_space<vmem>>, vector<1x1x16x8xf32>
    %198 = vector.shape_cast %197 : vector<1x1x16x8xf32> to vector<16x8xf32>
    %199 = vector.shape_cast %196 : vector<16x8xf32> to vector<1x1x16x8xf32>
    tpu.vector_store %arg7[%c0_221, %c3_222, %c0_223, %c0_224], %199 {strides = array<i32>} : memref<1x16x16x8xf32, #tpu.memory_space<vmem>>, vector<1x1x16x8xf32>,
    %200 = vector.extract_strided_slice %183 {offsets = [72, 0], sizes = [16, 8], strides = [1, 1]} : vector<288x8xf32> to vector<16x8xf32>
    %c0_225 = arith.constant 0 : index
    %c4_226 = arith.constant 4 : index
    %c0_227 = arith.constant 0 : index
    %c0_228 = arith.constant 0 : index
    %201 = vector.load %arg7[%c0_225, %c4_226, %c0_227, %c0_228] : memref<1x16x16x8xf32, #tpu.memory_space<vmem>>, vector<1x1x16x8xf32>
    %202 = vector.shape_cast %201 : vector<1x1x16x8xf32> to vector<16x8xf32>
    %203 = vector.shape_cast %200 : vector<16x8xf32> to vector<1x1x16x8xf32>
    tpu.vector_store %arg7[%c0_225, %c4_226, %c0_227, %c0_228], %203 {strides = array<i32>} : memref<1x16x16x8xf32, #tpu.memory_space<vmem>>, vector<1x1x16x8xf32>,
    %204 = vector.extract_strided_slice %183 {offsets = [90, 0], sizes = [16, 8], strides = [1, 1]} : vector<288x8xf32> to vector<16x8xf32>
    %c0_229 = arith.constant 0 : index
    %c5_230 = arith.constant 5 : index
    %c0_231 = arith.constant 0 : index
    %c0_232 = arith.constant 0 : index
    %205 = vector.load %arg7[%c0_229, %c5_230, %c0_231, %c0_232] : memref<1x16x16x8xf32, #tpu.memory_space<vmem>>, vector<1x1x16x8xf32>
    %206 = vector.shape_cast %205 : vector<1x1x16x8xf32> to vector<16x8xf32>
    %207 = vector.shape_cast %204 : vector<16x8xf32> to vector<1x1x16x8xf32>
    tpu.vector_store %arg7[%c0_229, %c5_230, %c0_231, %c0_232], %207 {strides = array<i32>} : memref<1x16x16x8xf32, #tpu.memory_space<vmem>>, vector<1x1x16x8xf32>,
    %208 = vector.extract_strided_slice %183 {offsets = [108, 0], sizes = [16, 8], strides = [1, 1]} : vector<288x8xf32> to vector<16x8xf32>
    %c0_233 = arith.constant 0 : index
    %c6_234 = arith.constant 6 : index
    %c0_235 = arith.constant 0 : index
    %c0_236 = arith.constant 0 : index
    %209 = vector.load %arg7[%c0_233, %c6_234, %c0_235, %c0_236] : memref<1x16x16x8xf32, #tpu.memory_space<vmem>>, vector<1x1x16x8xf32>
    %210 = vector.shape_cast %209 : vector<1x1x16x8xf32> to vector<16x8xf32>
    %211 = vector.shape_cast %208 : vector<16x8xf32> to vector<1x1x16x8xf32>
    tpu.vector_store %arg7[%c0_233, %c6_234, %c0_235, %c0_236], %211 {strides = array<i32>} : memref<1x16x16x8xf32, #tpu.memory_space<vmem>>, vector<1x1x16x8xf32>,
    %212 = vector.extract_strided_slice %183 {offsets = [126, 0], sizes = [16, 8], strides = [1, 1]} : vector<288x8xf32> to vector<16x8xf32>
    %c0_237 = arith.constant 0 : index
    %c7_238 = arith.constant 7 : index
    %c0_239 = arith.constant 0 : index
    %c0_240 = arith.constant 0 : index
    %213 = vector.load %arg7[%c0_237, %c7_238, %c0_239, %c0_240] : memref<1x16x16x8xf32, #tpu.memory_space<vmem>>, vector<1x1x16x8xf32>
    %214 = vector.shape_cast %213 : vector<1x1x16x8xf32> to vector<16x8xf32>
    %215 = vector.shape_cast %212 : vector<16x8xf32> to vector<1x1x16x8xf32>
    tpu.vector_store %arg7[%c0_237, %c7_238, %c0_239, %c0_240], %215 {strides = array<i32>} : memref<1x16x16x8xf32, #tpu.memory_space<vmem>>, vector<1x1x16x8xf32>,
    %216 = vector.extract_strided_slice %183 {offsets = [144, 0], sizes = [16, 8], strides = [1, 1]} : vector<288x8xf32> to vector<16x8xf32>
    %c0_241 = arith.constant 0 : index
    %c8_242 = arith.constant 8 : index
    %c0_243 = arith.constant 0 : index
    %c0_244 = arith.constant 0 : index
    %217 = vector.load %arg7[%c0_241, %c8_242, %c0_243, %c0_244] : memref<1x16x16x8xf32, #tpu.memory_space<vmem>>, vector<1x1x16x8xf32>
    %218 = vector.shape_cast %217 : vector<1x1x16x8xf32> to vector<16x8xf32>
    %219 = vector.shape_cast %216 : vector<16x8xf32> to vector<1x1x16x8xf32>
    tpu.vector_store %arg7[%c0_241, %c8_242, %c0_243, %c0_244], %219 {strides = array<i32>} : memref<1x16x16x8xf32, #tpu.memory_space<vmem>>, vector<1x1x16x8xf32>,
    %220 = vector.extract_strided_slice %183 {offsets = [162, 0], sizes = [16, 8], strides = [1, 1]} : vector<288x8xf32> to vector<16x8xf32>
    %c0_245 = arith.constant 0 : index
    %c9_246 = arith.constant 9 : index
    %c0_247 = arith.constant 0 : index
    %c0_248 = arith.constant 0 : index
    %221 = vector.load %arg7[%c0_245, %c9_246, %c0_247, %c0_248] : memref<1x16x16x8xf32, #tpu.memory_space<vmem>>, vector<1x1x16x8xf32>
    %222 = vector.shape_cast %221 : vector<1x1x16x8xf32> to vector<16x8xf32>
    %223 = vector.shape_cast %220 : vector<16x8xf32> to vector<1x1x16x8xf32>
    tpu.vector_store %arg7[%c0_245, %c9_246, %c0_247, %c0_248], %223 {strides = array<i32>} : memref<1x16x16x8xf32, #tpu.memory_space<vmem>>, vector<1x1x16x8xf32>,
    %224 = vector.extract_strided_slice %183 {offsets = [180, 0], sizes = [16, 8], strides = [1, 1]} : vector<288x8xf32> to vector<16x8xf32>
    %c0_249 = arith.constant 0 : index
    %c10_250 = arith.constant 10 : index
    %c0_251 = arith.constant 0 : index
    %c0_252 = arith.constant 0 : index
    %225 = vector.load %arg7[%c0_249, %c10_250, %c0_251, %c0_252] : memref<1x16x16x8xf32, #tpu.memory_space<vmem>>, vector<1x1x16x8xf32>
    %226 = vector.shape_cast %225 : vector<1x1x16x8xf32> to vector<16x8xf32>
    %227 = vector.shape_cast %224 : vector<16x8xf32> to vector<1x1x16x8xf32>
    tpu.vector_store %arg7[%c0_249, %c10_250, %c0_251, %c0_252], %227 {strides = array<i32>} : memref<1x16x16x8xf32, #tpu.memory_space<vmem>>, vector<1x1x16x8xf32>,
    %228 = vector.extract_strided_slice %183 {offsets = [198, 0], sizes = [16, 8], strides = [1, 1]} : vector<288x8xf32> to vector<16x8xf32>
    %c0_253 = arith.constant 0 : index
    %c11_254 = arith.constant 11 : index
    %c0_255 = arith.constant 0 : index
    %c0_256 = arith.constant 0 : index
    %229 = vector.load %arg7[%c0_253, %c11_254, %c0_255, %c0_256] : memref<1x16x16x8xf32, #tpu.memory_space<vmem>>, vector<1x1x16x8xf32>
    %230 = vector.shape_cast %229 : vector<1x1x16x8xf32> to vector<16x8xf32>
    %231 = vector.shape_cast %228 : vector<16x8xf32> to vector<1x1x16x8xf32>
    tpu.vector_store %arg7[%c0_253, %c11_254, %c0_255, %c0_256], %231 {strides = array<i32>} : memref<1x16x16x8xf32, #tpu.memory_space<vmem>>, vector<1x1x16x8xf32>,
    %232 = vector.extract_strided_slice %183 {offsets = [216, 0], sizes = [16, 8], strides = [1, 1]} : vector<288x8xf32> to vector<16x8xf32>
    %c0_257 = arith.constant 0 : index
    %c12_258 = arith.constant 12 : index
    %c0_259 = arith.constant 0 : index
    %c0_260 = arith.constant 0 : index
    %233 = vector.load %arg7[%c0_257, %c12_258, %c0_259, %c0_260] : memref<1x16x16x8xf32, #tpu.memory_space<vmem>>, vector<1x1x16x8xf32>
    %234 = vector.shape_cast %233 : vector<1x1x16x8xf32> to vector<16x8xf32>
    %235 = vector.shape_cast %232 : vector<16x8xf32> to vector<1x1x16x8xf32>
    tpu.vector_store %arg7[%c0_257, %c12_258, %c0_259, %c0_260], %235 {strides = array<i32>} : memref<1x16x16x8xf32, #tpu.memory_space<vmem>>, vector<1x1x16x8xf32>,
    %236 = vector.extract_strided_slice %183 {offsets = [234, 0], sizes = [16, 8], strides = [1, 1]} : vector<288x8xf32> to vector<16x8xf32>
    %c0_261 = arith.constant 0 : index
    %c13_262 = arith.constant 13 : index
    %c0_263 = arith.constant 0 : index
    %c0_264 = arith.constant 0 : index
    %237 = vector.load %arg7[%c0_261, %c13_262, %c0_263, %c0_264] : memref<1x16x16x8xf32, #tpu.memory_space<vmem>>, vector<1x1x16x8xf32>
    %238 = vector.shape_cast %237 : vector<1x1x16x8xf32> to vector<16x8xf32>
    %239 = vector.shape_cast %236 : vector<16x8xf32> to vector<1x1x16x8xf32>
    tpu.vector_store %arg7[%c0_261, %c13_262, %c0_263, %c0_264], %239 {strides = array<i32>} : memref<1x16x16x8xf32, #tpu.memory_space<vmem>>, vector<1x1x16x8xf32>,
    %240 = vector.extract_strided_slice %183 {offsets = [252, 0], sizes = [16, 8], strides = [1, 1]} : vector<288x8xf32> to vector<16x8xf32>
    %c0_265 = arith.constant 0 : index
    %c14_266 = arith.constant 14 : index
    %c0_267 = arith.constant 0 : index
    %c0_268 = arith.constant 0 : index
    %241 = vector.load %arg7[%c0_265, %c14_266, %c0_267, %c0_268] : memref<1x16x16x8xf32, #tpu.memory_space<vmem>>, vector<1x1x16x8xf32>
    %242 = vector.shape_cast %241 : vector<1x1x16x8xf32> to vector<16x8xf32>
    %243 = vector.shape_cast %240 : vector<16x8xf32> to vector<1x1x16x8xf32>
    tpu.vector_store %arg7[%c0_265, %c14_266, %c0_267, %c0_268], %243 {strides = array<i32>} : memref<1x16x16x8xf32, #tpu.memory_space<vmem>>, vector<1x1x16x8xf32>,
    %244 = vector.extract_strided_slice %183 {offsets = [270, 0], sizes = [16, 8], strides = [1, 1]} : vector<288x8xf32> to vector<16x8xf32>
    %c0_269 = arith.constant 0 : index
    %c15_270 = arith.constant 15 : index
    %c0_271 = arith.constant 0 : index
    %c0_272 = arith.constant 0 : index
    %245 = vector.load %arg7[%c0_269, %c15_270, %c0_271, %c0_272] : memref<1x16x16x8xf32, #tpu.memory_space<vmem>>, vector<1x1x16x8xf32>
    %246 = vector.shape_cast %245 : vector<1x1x16x8xf32> to vector<16x8xf32>
    %247 = vector.shape_cast %244 : vector<16x8xf32> to vector<1x1x16x8xf32>
    tpu.vector_store %arg7[%c0_269, %c15_270, %c0_271, %c0_272], %247 {strides = array<i32>} : memref<1x16x16x8xf32, #tpu.memory_space<vmem>>, vector<1x1x16x8xf32>,
    return
  }
  func.func @transform_0(%arg0: i32) -> (i32, i32, i32, i32) {
    %c0_i32 = arith.constant 0 : i32
    %c0_i32_0 = arith.constant 0 : i32
    %c0_i32_1 = arith.constant 0 : i32
    %c0_i32_2 = arith.constant 0 : i32
    return %arg0, %c0_i32, %c0_i32_0, %c0_i32_1 : i32, i32, i32, i32
  }
  func.func @transform_1(%arg0: i32) -> (i32, i32, i32, i32) {
    %c0_i32 = arith.constant 0 : i32
    %c0_i32_0 = arith.constant 0 : i32
    %c0_i32_1 = arith.constant 0 : i32
    %c0_i32_2 = arith.constant 0 : i32
    return %arg0, %c0_i32, %c0_i32_0, %c0_i32_1 : i32, i32, i32, i32
  }
  func.func @transform_2(%arg0: i32) -> (i32, i32) {
    %c0_i32 = arith.constant 0 : i32
    %c0_i32_0 = arith.constant 0 : i32
    %c0_i32_1 = arith.constant 0 : i32
    return %c0_i32, %c0_i32_0 : i32, i32
  }
  func.func @transform_3(%arg0: i32) -> (i32, i32) {
    %c0_i32 = arith.constant 0 : i32
    %c0_i32_0 = arith.constant 0 : i32
    %c0_i32_1 = arith.constant 0 : i32
    return %c0_i32, %c0_i32_0 : i32, i32
  }
  func.func @transform_4(%arg0: i32) -> (i32, i32) {
    %c0_i32 = arith.constant 0 : i32
    %c0_i32_0 = arith.constant 0 : i32
    %c0_i32_1 = arith.constant 0 : i32
    return %c0_i32, %c0_i32_0 : i32, i32
  }
  func.func @transform_5(%arg0: i32) -> (i32, i32) {
    %c0_i32 = arith.constant 0 : i32
    %c0_i32_0 = arith.constant 0 : i32
    %c0_i32_1 = arith.constant 0 : i32
    return %c0_i32, %c0_i32_0 : i32, i32
  }
  func.func @transform_6(%arg0: i32) -> (i32, i32, i32, i32) {
    %c0_i32 = arith.constant 0 : i32
    %c0_i32_0 = arith.constant 0 : i32
    %c0_i32_1 = arith.constant 0 : i32
    %c0_i32_2 = arith.constant 0 : i32
    return %arg0, %c0_i32, %c0_i32_0, %c0_i32_1 : i32, i32, i32, i32
  }
}

</mosaic_0001>

<llo_original>
// kernel: decoder_block_forward.1
$region0: #{decoder_block_forward.1}
  #allocation0 [shape = 'u32[]', space=smem, size = 0x4, offset = 0x4, fixed_abs, tag = 'smem constant byte address 0x4 - core index']
  #allocation1 [shape = 'u32[144,128]{1,0:T(1,128)}', space=vmem, size = 0x12000, scoped, tag = 'internal scratch']
  #allocation2 [shape = 'f32[342,8]{1,0:T(8,128)}', space=vmem, size = 0x2b000, scoped, tag = 'scratch operand']
  #allocation3 [shape = 'f32[342,8]{1,0:T(8,128)}', space=vmem, size = 0x2b000, scoped, tag = 'scratch operand']
  %s0 = inlined_call_operand.vmem [shape: bf16[2,16,16,4], index: 0, kind: input, shape index: {}]
  %s1 = inlined_call_operand.vmem [shape: bf16[2,16,16,4], index: 1, kind: input, shape index: {}]
  %s2 = inlined_call_operand.vmem [shape: bf16[72,8], index: 2, kind: input, shape index: {}]
  %s3 = inlined_call_operand.vmem [shape: f32[1,8], index: 3, kind: input, shape index: {}]
  %s4 = inlined_call_operand.vmem [shape: bf16[72,8], index: 4, kind: input, shape index: {}]
  %s5 = inlined_call_operand.vmem [shape: f32[1,8], index: 5, kind: input, shape index: {}]
  %s6 = inlined_call_operand.vmem [shape: f32[2,16,16,8], index: 6, kind: output, shape index: {}]
  %s7 = sld [smem:[#allocation0]]
  $region57: #{decoder_block_forward.1} parent=0
    _
  %s9 = ssub.s32 1, %s7
  %s10 = scalar_select 0, %s9, %s7
  loop: start=0, step=1, limit=4
  $region2: #{decoder_block_forward.1} parent=0 // loop_pre_header
    _
  $region3: #{decoder_block_forward.1} parent=0 // loop_header
    %s12 = sphi 0, %s16
    %p13 = scmp.ge.s32.totalorder %s12, 4
    %s22 = sphi 0, %s24
    %s25 = sphi 0, %s22
    %s26 = sphi 0, %s25
    %s42 = sphi 0, %s26
    %s48 = sphi 0, %s50
    %s51 = sphi 0, %s48
    %s52 = sphi 0, %s51
    %s68 = sphi 0, %s52
    %s72 = sphi 0, %s72
    %s74 = sphi 0, %s72
    %s75 = sphi 0, %s74
    %s89 = sphi 0, %s75
    %s93 = sphi 0, %s93
    %s95 = sphi 0, %s93
    %s96 = sphi 0, %s95
    %s110 = sphi 0, %s96
    %s114 = sphi 0, %s114
    %s116 = sphi 0, %s114
    %s117 = sphi 0, %s116
    %s131 = sphi 0, %s117
    %s135 = sphi 0, %s135
    %s137 = sphi 0, %s135
    %s138 = sphi 0, %s137
    %s152 = sphi 0, %s138
    %s158 = sphi 0, %s160
    %s161 = sphi 0, %s158
    %s162 = sphi 0, %s161
    %s178 = sphi 0, %s162
  $region4: #{decoder_block_forward.1} parent=0 // loop_header_branch
    %15 = sbr.rel (%p13) target = $region8
  $region5: #{decoder_block_forward.1} parent=0 // loop_body
    %s17 = ssub.s32 %s12, 1
    %s18 = ssub.s32 %s12, 2
    %s19 = sadd.s32 %s12, 1
    %s20 = ssub.s32 %s12, %s19
    %p21 = scmp.eq.s32.totalorder %s20, 0
    %s23 = sadd.s32 %s22, 1
    %s24 = scalar_select %p21, %s22, %s23
    %p27 = pneg %p21
    %p28 = scmp.eq.s32.totalorder %s12, 1
    %p29 = por %p27, %p28
    %p30 = scmp.ne.s32.totalorder %s22, %s25
    %p31 = scmp.eq.s32.totalorder %s12, 0
    %p32 = por %p30, %p31
    %p33 = scmp.ne.s32.totalorder %s22, %s25
    %p34 = scmp.eq.s32.totalorder %s17, 1
    %p35 = por %p33, %p34
    %p36 = scmp.ne.s32.totalorder %s25, %s26
    %p37 = scmp.eq.s32.totalorder %s17, 0
    %p38 = por %p36, %p37
    %p39 = scmp.ne.s32.totalorder %s25, %s26
    %p40 = scmp.eq.s32.totalorder %s18, 1
    %p41 = por %p39, %p40
    %p43 = scmp.ne.s32.totalorder %s26, %s42
    %p44 = scmp.eq.s32.totalorder %s18, 0
    %p45 = por %p43, %p44
    %s46 = ssub.s32 %s12, %s19
    %p47 = scmp.eq.s32.totalorder %s46, 0
    %s49 = sadd.s32 %s48, 1
    %s50 = scalar_select %p47, %s48, %s49
    %p53 = pneg %p47
    %p54 = scmp.eq.s32.totalorder %s12, 1
    %p55 = por %p53, %p54
    %p56 = scmp.ne.s32.totalorder %s48, %s51
    %p57 = scmp.eq.s32.totalorder %s12, 0
    %p58 = por %p56, %p57
    %p59 = scmp.ne.s32.totalorder %s48, %s51
    %p60 = scmp.eq.s32.totalorder %s17, 1
    %p61 = por %p59, %p60
    %p62 = scmp.ne.s32.totalorder %s51, %s52
    %p63 = scmp.eq.s32.totalorder %s17, 0
    %p64 = por %p62, %p63
    %p65 = scmp.ne.s32.totalorder %s51, %s52
    %p66 = scmp.eq.s32.totalorder %s18, 1
    %p67 = por %p65, %p66
    %p69 = scmp.ne.s32.totalorder %s52, %s68
    %p70 = scmp.eq.s32.totalorder %s18, 0
    %p71 = por %p69, %p70
    %s73 = sadd.s32 %s72, 1
    %p76 = scmp.eq.s32.totalorder %s12, 1
    %p77 = scmp.ne.s32.totalorder %s72, %s74
    %p78 = scmp.eq.s32.totalorder %s12, 0
    %p79 = por %p77, %p78
    %p80 = scmp.ne.s32.totalorder %s72, %s74
    %p81 = scmp.eq.s32.totalorder %s17, 1
    %p82 = por %p80, %p81
    %p83 = scmp.ne.s32.totalorder %s74, %s75
    %p84 = scmp.eq.s32.totalorder %s17, 0
    %p85 = por %p83, %p84
    %p86 = scmp.ne.s32.totalorder %s74, %s75
    %p87 = scmp.eq.s32.totalorder %s18, 1
    %p88 = por %p86, %p87
    %p90 = scmp.ne.s32.totalorder %s75, %s89
    %p91 = scmp.eq.s32.totalorder %s18, 0
    %p92 = por %p90, %p91
    %s94 = sadd.s32 %s93, 1
    %p97 = scmp.eq.s32.totalorder %s12, 1
    %p98 = scmp.ne.s32.totalorder %s93, %s95
    %p99 = scmp.eq.s32.totalorder %s12, 0
    %p100 = por %p98, %p99
    %p101 = scmp.ne.s32.totalorder %s93, %s95
    %p102 = scmp.eq.s32.totalorder %s17, 1
    %p103 = por %p101, %p102
    %p104 = scmp.ne.s32.totalorder %s95, %s96
    %p105 = scmp.eq.s32.totalorder %s17, 0
    %p106 = por %p104, %p105
    %p107 = scmp.ne.s32.totalorder %s95, %s96
    %p108 = scmp.eq.s32.totalorder %s18, 1
    %p109 = por %p107, %p108
    %p111 = scmp.ne.s32.totalorder %s96, %s110
    %p112 = scmp.eq.s32.totalorder %s18, 0
    %p113 = por %p111, %p112
    %s115 = sadd.s32 %s114, 1
    %p118 = scmp.eq.s32.totalorder %s12, 1
    %p119 = scmp.ne.s32.totalorder %s114, %s116
    %p120 = scmp.eq.s32.totalorder %s12, 0
    %p121 = por %p119, %p120
    %p122 = scmp.ne.s32.totalorder %s114, %s116
    %p123 = scmp.eq.s32.totalorder %s17, 1
    %p124 = por %p122, %p123
    %p125 = scmp.ne.s32.totalorder %s116, %s117
    %p126 = scmp.eq.s32.totalorder %s17, 0
    %p127 = por %p125, %p126
    %p128 = scmp.ne.s32.totalorder %s116, %s117
    %p129 = scmp.eq.s32.totalorder %s18, 1
    %p130 = por %p128, %p129
    %p132 = scmp.ne.s32.totalorder %s117, %s131
    %p133 = scmp.eq.s32.totalorder %s18, 0
    %p134 = por %p132, %p133
    %s136 = sadd.s32 %s135, 1
    %p139 = scmp.eq.s32.totalorder %s12, 1
    %p140 = scmp.ne.s32.totalorder %s135, %s137
    %p141 = scmp.eq.s32.totalorder %s12, 0
    %p142 = por %p140, %p141
    %p143 = scmp.ne.s32.totalorder %s135, %s137
    %p144 = scmp.eq.s32.totalorder %s17, 1
    %p145 = por %p143, %p144
    %p146 = scmp.ne.s32.totalorder %s137, %s138
    %p147 = scmp.eq.s32.totalorder %s17, 0
    %p148 = por %p146, %p147
    %p149 = scmp.ne.s32.totalorder %s137, %s138
    %p150 = scmp.eq.s32.totalorder %s18, 1
    %p151 = por %p149, %p150
    %p153 = scmp.ne.s32.totalorder %s138, %s152
    %p154 = scmp.eq.s32.totalorder %s18, 0
    %p155 = por %p153, %p154
    %s156 = ssub.s32 %s12, %s19
    %p157 = scmp.eq.s32.totalorder %s156, 0
    %s159 = sadd.s32 %s158, 1
    %s160 = scalar_select %p157, %s158, %s159
    %p163 = pneg %p157
    %p164 = scmp.eq.s32.totalorder %s12, 1
    %p165 = por %p163, %p164
    %p166 = scmp.ne.s32.totalorder %s158, %s161
    %p167 = scmp.eq.s32.totalorder %s12, 0
    %p168 = por %p166, %p167
    %p169 = scmp.ne.s32.totalorder %s158, %s161
    %p170 = scmp.eq.s32.totalorder %s17, 1
    %p171 = por %p169, %p170
    %p172 = scmp.ne.s32.totalorder %s161, %s162
    %p173 = scmp.eq.s32.totalorder %s17, 0
    %p174 = por %p172, %p173
    %p175 = scmp.ne.s32.totalorder %s161, %s162
    %p176 = scmp.eq.s32.totalorder %s18, 1
    %p177 = por %p175, %p176
    %p179 = scmp.ne.s32.totalorder %s162, %s178
    %p180 = scmp.eq.s32.totalorder %s18, 0
    %p181 = por %p179, %p180
    %p182 = scmp.le.s32.totalorder 1, %s12
    %p183 = scmp.lt.s32.totalorder %s12, 3
    %p184 = pnand %p182, %p183
    %p185 = pneg %p184
    // Predicated region
    $region9: #{decoder_block_forward.1} parent=5 // pred_check
      _
    $region10: #{decoder_block_forward.1} parent=5 // pred_check_branch
      %187 = sbr.rel (%p184) target = $region12
    $region11: #{decoder_block_forward.1} parent=5 // pred_region
      %s188 = ssub.s32 %s12, 1
      // Predicated region
      $region13: #{decoder_block_forward.1} parent=11 // pred_check
        %p189 = pneg %p85
      $region14: #{decoder_block_forward.1} parent=11 // pred_check_branch
        %191 = sbr.rel (%p189) target = $region16
      $region15: #{decoder_block_forward.1} parent=11 // pred_region
        _
      $region16: #{decoder_block_forward.1} parent=11 // pred_fallthru
        _
      // Predicated region
      $region17: #{decoder_block_forward.1} parent=11 // pred_check
        %p192 = pneg %p106
      $region18: #{decoder_block_forward.1} parent=11 // pred_check_branch
        %194 = sbr.rel (%p192) target = $region20
      $region19: #{decoder_block_forward.1} parent=11 // pred_region
        _
      $region20: #{decoder_block_forward.1} parent=11 // pred_fallthru
        _
      // Predicated region
      $region21: #{decoder_block_forward.1} parent=11 // pred_check
        %p195 = pneg %p127
      $region22: #{decoder_block_forward.1} parent=11 // pred_check_branch
        %197 = sbr.rel (%p195) target = $region24
      $region23: #{decoder_block_forward.1} parent=11 // pred_region
        _
      $region24: #{decoder_block_forward.1} parent=11 // pred_fallthru
        _
      // Predicated region
      $region25: #{decoder_block_forward.1} parent=11 // pred_check
        %p198 = pneg %p148
      $region26: #{decoder_block_forward.1} parent=11 // pred_check_branch
        %200 = sbr.rel (%p198) target = $region28
      $region27: #{decoder_block_forward.1} parent=11 // pred_region
        _
      $region28: #{decoder_block_forward.1} parent=11 // pred_fallthru
        _
    $region12: #{decoder_block_forward.1} parent=5 // pred_fallthru
      _
    %p201 = scmp.lt.s32.totalorder %s12, 2
    // Predicated region
    $region29: #{decoder_block_forward.1} parent=5 // pred_check
      %p202 = pneg %p201
    $region30: #{decoder_block_forward.1} parent=5 // pred_check_branch
      %204 = sbr.rel (%p202) target = $region32
    $region31: #{decoder_block_forward.1} parent=5 // pred_region
      // Predicated region
      $region33: #{decoder_block_forward.1} parent=31 // pred_check
        %p205 = pneg %p32
      $region34: #{decoder_block_forward.1} parent=31 // pred_check_branch
        %207 = sbr.rel (%p205) target = $region36
      $region35: #{decoder_block_forward.1} parent=31 // pred_region
        %p208 = scmp.lt.s32.totalorder %s12, 1
        %s209 = scalar_select %p208, %s12, 1
        %s210 = smul.addr %s209, 32
        %s211 = smul.addr %s210, 4
        %s212 = scalar_lea.vmem %s0, %s211
      $region36: #{decoder_block_forward.1} parent=31 // pred_fallthru
        _
      // Predicated region
      $region37: #{decoder_block_forward.1} parent=31 // pred_check
        %p213 = pneg %p58
      $region38: #{decoder_block_forward.1} parent=31 // pred_check_branch
        %215 = sbr.rel (%p213) target = $region40
      $region39: #{decoder_block_forward.1} parent=31 // pred_region
        %p216 = scmp.lt.s32.totalorder %s12, 1
        %s217 = scalar_select %p216, %s12, 1
        %s218 = smul.addr %s217, 32
        %s219 = smul.addr %s218, 4
        %s220 = scalar_lea.vmem %s1, %s219
      $region40: #{decoder_block_forward.1} parent=31 // pred_fallthru
        _
    $region32: #{decoder_block_forward.1} parent=5 // pred_fallthru
      _
    %p221 = scmp.le.s32.totalorder 1, %s12
    %p222 = scmp.lt.s32.totalorder %s12, 3
    %p223 = pnand %p221, %p222
    %p224 = pneg %p223
    // Predicated region
    $region41: #{decoder_block_forward.1} parent=5 // pred_check
      _
    $region42: #{decoder_block_forward.1} parent=5 // pred_check_branch
      %226 = sbr.rel (%p223) target = $region44
    $region43: #{decoder_block_forward.1} parent=5 // pred_region
      %s227 = ssub.s32 %s12, 1
      %p228 = scmp.lt.s32.totalorder %s17, 1
      %s229 = scalar_select %p228, %s17, 1
      %s230 = smul.addr %s229, 32
      %s231 = smul.addr %s230, 4
      %s232 = scalar_lea.vmem %s0, %s231
      %p233 = pneg %p38
      %p234 = pneg %p35
      %p235 = scmp.lt.s32.totalorder %s17, 1
      %s236 = scalar_select %p235, %s17, 1
      %s237 = smul.addr %s236, 32
      %s238 = smul.addr %s237, 4
      %s239 = scalar_lea.vmem %s1, %s238
      %p240 = pneg %p64
      %p241 = pneg %p61
      %p242 = pneg %p85
      %p243 = pneg %p82
      %p244 = pneg %p106
      %p245 = pneg %p103
      %p246 = pneg %p127
      %p247 = pneg %p124
      %p248 = pneg %p148
      %p249 = pneg %p145
      %p250 = pneg %p174
      %p251 = pneg %p171
      %p252 = scmp.lt.s32.totalorder %s17, 1
      %s253 = scalar_select %p252, %s17, 1
      %s254 = smul.addr %s253, 32
      %s255 = smul.addr %s254, 8
      %s256 = scalar_lea.vmem %s6, %s255
      %p257 = scmp.lt.s32.totalorder %s17, 1
      %s258 = scalar_select %p257, %s17, 1
      %s259 = smul.addr %s258, 32
      %s260 = smul.addr %s259, 4
      %s261 = scalar_lea.vmem %s0, %s260
      %p262 = scmp.lt.s32.totalorder %s17, 1
      %s263 = scalar_select %p262, %s17, 1
      %s264 = smul.addr %s263, 32
      %s265 = smul.addr %s264, 4
      %s266 = scalar_lea.vmem %s1, %s265
      %p267 = scmp.lt.s32.totalorder %s17, 1
      %s268 = scalar_select %p267, %s17, 1
      %s269 = smul.addr %s268, 32
      %s270 = smul.addr %s269, 8
      %s271 = scalar_lea.vmem %s6, %s270
      %vm273 = vcmask 64512
      %274 = vst.msk [vmem:[#allocation2] sm:$0xff] %vm273, 0.0
      %275 = vst.msk [vmem:[#allocation2 + $0x8] sm:$0xff] %vm273, 0.0
      %276 = vst.msk [vmem:[#allocation2 + $0x10] sm:$0xff] %vm273, 0.0
      %277 = vst.msk [vmem:[#allocation2 + $0x18] sm:$0xff] %vm273, 0.0
      %278 = vst.msk [vmem:[#allocation2 + $0x20] sm:$0xff] %vm273, 0.0
      %279 = vst.msk [vmem:[#allocation2 + $0x28] sm:$0xff] %vm273, 0.0
      %280 = vst.msk [vmem:[#allocation2 + $0x30] sm:$0xff] %vm273, 0.0
      %281 = vst.msk [vmem:[#allocation2 + $0x38] sm:$0xff] %vm273, 0.0
      %282 = vst.msk [vmem:[#allocation2 + $0x40] sm:$0xff] %vm273, 0.0
      %283 = vst.msk [vmem:[#allocation2 + $0x48] sm:$0xff] %vm273, 0.0
      %284 = vst.msk [vmem:[#allocation2 + $0x50] sm:$0xff] %vm273, 0.0
      %285 = vst.msk [vmem:[#allocation2 + $0x58] sm:$0xff] %vm273, 0.0
      %286 = vst.msk [vmem:[#allocation2 + $0x60] sm:$0xff] %vm273, 0.0
      %287 = vst.msk [vmem:[#allocation2 + $0x68] sm:$0xff] %vm273, 0.0
      %288 = vst.msk [vmem:[#allocation2 + $0x70] sm:$0xff] %vm273, 0.0
      %289 = vst.msk [vmem:[#allocation2 + $0x78] sm:$0xff] %vm273, 0.0
      %290 = vst.msk [vmem:[#allocation2 + $0x80] sm:$0xff] %vm273, 0.0
      %291 = vst.msk [vmem:[#allocation2 + $0x88] sm:$0xff] %vm273, 0.0
      %292 = vst.msk [vmem:[#allocation2 + $0x90] sm:$0xff] %vm273, 0.0
      %293 = vst.msk [vmem:[#allocation2 + $0x98] sm:$0xff] %vm273, 0.0
      %294 = vst.msk [vmem:[#allocation2 + $0xa0] sm:$0xff] %vm273, 0.0
      %295 = vst.msk [vmem:[#allocation2 + $0xa8] sm:$0xff] %vm273, 0.0
      %296 = vst.msk [vmem:[#allocation2 + $0xb0] sm:$0xff] %vm273, 0.0
      %297 = vst.msk [vmem:[#allocation2 + $0xb8] sm:$0xff] %vm273, 0.0
      %298 = vst.msk [vmem:[#allocation2 + $0xc0] sm:$0xff] %vm273, 0.0
      %299 = vst.msk [vmem:[#allocation2 + $0xc8] sm:$0xff] %vm273, 0.0
      %300 = vst.msk [vmem:[#allocation2 + $0xd0] sm:$0xff] %vm273, 0.0
      %301 = vst.msk [vmem:[#allocation2 + $0xd8] sm:$0xff] %vm273, 0.0
      %302 = vst.msk [vmem:[#allocation2 + $0xe0] sm:$0xff] %vm273, 0.0
      %303 = vst.msk [vmem:[#allocation2 + $0xe8] sm:$0xff] %vm273, 0.0
      %304 = vst.msk [vmem:[#allocation2 + $0xf0] sm:$0xff] %vm273, 0.0
      %305 = vst.msk [vmem:[#allocation2 + $0xf8] sm:$0xff] %vm273, 0.0
      %306 = vst.msk [vmem:[#allocation2 + $0x100] sm:$0xff] %vm273, 0.0
      %307 = vst.msk [vmem:[#allocation2 + $0x108] sm:$0xff] %vm273, 0.0
      %308 = vst.msk [vmem:[#allocation2 + $0x110] sm:$0xff] %vm273, 0.0
      %309 = vst.msk [vmem:[#allocation2 + $0x118] sm:$0xff] %vm273, 0.0
      %310 = vst.msk [vmem:[#allocation2 + $0x120] sm:$0xff] %vm273, 0.0
      %311 = vst.msk [vmem:[#allocation2 + $0x128] sm:$0xff] %vm273, 0.0
      %312 = vst.msk [vmem:[#allocation2 + $0x130] sm:$0xff] %vm273, 0.0
      %313 = vst.msk [vmem:[#allocation2 + $0x138] sm:$0xff] %vm273, 0.0
      %314 = vst.msk [vmem:[#allocation2 + $0x140] sm:$0xff] %vm273, 0.0
      %315 = vst.msk [vmem:[#allocation2 + $0x148] sm:$0xff] %vm273, 0.0
      %vm316 = vcmask 62464
      %317 = vst.msk [vmem:[#allocation2 + $0x150] sm:$0x3f] %vm316, 0.0
      %318 = vst.msk [vmem:[#allocation3] sm:$0xff] %vm273, 0.0
      %319 = vst.msk [vmem:[#allocation3 + $0x8] sm:$0xff] %vm273, 0.0
      %320 = vst.msk [vmem:[#allocation3 + $0x10] sm:$0xff] %vm273, 0.0
      %321 = vst.msk [vmem:[#allocation3 + $0x18] sm:$0xff] %vm273, 0.0
      %322 = vst.msk [vmem:[#allocation3 + $0x20] sm:$0xff] %vm273, 0.0
      %323 = vst.msk [vmem:[#allocation3 + $0x28] sm:$0xff] %vm273, 0.0
      %324 = vst.msk [vmem:[#allocation3 + $0x30] sm:$0xff] %vm273, 0.0
      %325 = vst.msk [vmem:[#allocation3 + $0x38] sm:$0xff] %vm273, 0.0
      %326 = vst.msk [vmem:[#allocation3 + $0x40] sm:$0xff] %vm273, 0.0
      %327 = vst.msk [vmem:[#allocation3 + $0x48] sm:$0xff] %vm273, 0.0
      %328 = vst.msk [vmem:[#allocation3 + $0x50] sm:$0xff] %vm273, 0.0
      %329 = vst.msk [vmem:[#allocation3 + $0x58] sm:$0xff] %vm273, 0.0
      %330 = vst.msk [vmem:[#allocation3 + $0x60] sm:$0xff] %vm273, 0.0
      %331 = vst.msk [vmem:[#allocation3 + $0x68] sm:$0xff] %vm273, 0.0
      %332 = vst.msk [vmem:[#allocation3 + $0x70] sm:$0xff] %vm273, 0.0
      %333 = vst.msk [vmem:[#allocation3 + $0x78] sm:$0xff] %vm273, 0.0
      %334 = vst.msk [vmem:[#allocation3 + $0x80] sm:$0xff] %vm273, 0.0
      %335 = vst.msk [vmem:[#allocation3 + $0x88] sm:$0xff] %vm273, 0.0
      %336 = vst.msk [vmem:[#allocation3 + $0x90] sm:$0xff] %vm273, 0.0
      %337 = vst.msk [vmem:[#allocation3 + $0x98] sm:$0xff] %vm273, 0.0
      %338 = vst.msk [vmem:[#allocation3 + $0xa0] sm:$0xff] %vm273, 0.0
      %339 = vst.msk [vmem:[#allocation3 + $0xa8] sm:$0xff] %vm273, 0.0
      %340 = vst.msk [vmem:[#allocation3 + $0xb0] sm:$0xff] %vm273, 0.0
      %341 = vst.msk [vmem:[#allocation3 + $0xb8] sm:$0xff] %vm273, 0.0
      %342 = vst.msk [vmem:[#allocation3 + $0xc0] sm:$0xff] %vm273, 0.0
      %343 = vst.msk [vmem:[#allocation3 + $0xc8] sm:$0xff] %vm273, 0.0
      %344 = vst.msk [vmem:[#allocation3 + $0xd0] sm:$0xff] %vm273, 0.0
      %345 = vst.msk [vmem:[#allocation3 + $0xd8] sm:$0xff] %vm273, 0.0
      %346 = vst.msk [vmem:[#allocation3 + $0xe0] sm:$0xff] %vm273, 0.0
      %347 = vst.msk [vmem:[#allocation3 + $0xe8] sm:$0xff] %vm273, 0.0
      %348 = vst.msk [vmem:[#allocation3 + $0xf0] sm:$0xff] %vm273, 0.0
      %349 = vst.msk [vmem:[#allocation3 + $0xf8] sm:$0xff] %vm273, 0.0
      %350 = vst.msk [vmem:[#allocation3 + $0x100] sm:$0xff] %vm273, 0.0
      %351 = vst.msk [vmem:[#allocation3 + $0x108] sm:$0xff] %vm273, 0.0
      %352 = vst.msk [vmem:[#allocation3 + $0x110] sm:$0xff] %vm273, 0.0
      %353 = vst.msk [vmem:[#allocation3 + $0x118] sm:$0xff] %vm273, 0.0
      %354 = vst.msk [vmem:[#allocation3 + $0x120] sm:$0xff] %vm273, 0.0
      %355 = vst.msk [vmem:[#allocation3 + $0x128] sm:$0xff] %vm273, 0.0
      %356 = vst.msk [vmem:[#allocation3 + $0x130] sm:$0xff] %vm273, 0.0
      %357 = vst.msk [vmem:[#allocation3 + $0x138] sm:$0xff] %vm273, 0.0
      %358 = vst.msk [vmem:[#allocation3 + $0x140] sm:$0xff] %vm273, 0.0
      %359 = vst.msk [vmem:[#allocation3 + $0x148] sm:$0xff] %vm273, 0.0
      %360 = vst.msk [vmem:[#allocation3 + $0x150] sm:$0x3f] %vm316, 0.0
      %v361 = vld [vmem:[%s261] sm:$0xf]
      %v362 = vld [vmem:[%s261 + $0x4] sm:$0xf]
      %v363 = vld [vmem:[%s266] sm:$0xf]
      %v364 = vld [vmem:[%s266 + $0x4] sm:$0xf]
      %v367 = vunpack.c.l.b16 %v361
      %v368 = vunpack.c.l.b16 %v362
      %v369 = vpack.c.b16 %v368, %v367
      %v372 = vunpack.c.l.b16 %v363
      %v373 = vunpack.c.l.b16 %v364
      %v374 = vpack.c.b16 %v373, %v372
      %375 = vrot.lane.b32.xlu0 %v374, 4
      %v376 = vpop.permute.xlu0 %375
      %vm377 = vcmask 31744
      %v380 = vsel %vm377, %v369, %v376
      %v382 = vunpack.c.l.bf16 %v380
      %v383 = vunpack.c.h.bf16 %v380
      %384 = vst.msk [vmem:[#allocation2 + $0x13] sm:$0xff] %vm273, %v382
      %385 = vst.msk [vmem:[#allocation2 + $0x1b] sm:$0xff] %vm273, %v383
      %s386 = scalar_lea.vmem %s261, 8
      %v387 = vld [vmem:[%s386] sm:$0xf]
      %v388 = vld [vmem:[%s386 + $0x4] sm:$0xf]
      %s389 = scalar_lea.vmem %s266, 8
      %v390 = vld [vmem:[%s389] sm:$0xf]
      %v391 = vld [vmem:[%s389 + $0x4] sm:$0xf]
      %v394 = vunpack.c.l.b16 %v387
      %v395 = vunpack.c.l.b16 %v388
      %v396 = vpack.c.b16 %v395, %v394
      %v399 = vunpack.c.l.b16 %v390
      %v400 = vunpack.c.l.b16 %v391
      %v401 = vpack.c.b16 %v400, %v399
      %402 = vrot.lane.b32.xlu0 %v401, 4
      %v403 = vpop.permute.xlu0 %402
      %v406 = vsel %vm377, %v396, %v403
      %v408 = vunpack.c.l.bf16 %v406
      %v409 = vunpack.c.h.bf16 %v406
      %410 = vst.msk [vmem:[#allocation2 + $0x25] sm:$0xff] %vm273, %v408
      %411 = vst.msk [vmem:[#allocation2 + $0x2d] sm:$0xff] %vm273, %v409
      %s412 = scalar_lea.vmem %s261, 16
      %v413 = vld [vmem:[%s412] sm:$0xf]
      %v414 = vld [vmem:[%s412 + $0x4] sm:$0xf]
      %s415 = scalar_lea.vmem %s266, 16
      %v416 = vld [vmem:[%s415] sm:$0xf]
      %v417 = vld [vmem:[%s415 + $0x4] sm:$0xf]
      %v420 = vunpack.c.l.b16 %v413
      %v421 = vunpack.c.l.b16 %v414
      %v422 = vpack.c.b16 %v421, %v420
      %v425 = vunpack.c.l.b16 %v416
      %v426 = vunpack.c.l.b16 %v417
      %v427 = vpack.c.b16 %v426, %v425
      %428 = vrot.lane.b32.xlu0 %v427, 4
      %v429 = vpop.permute.xlu0 %428
      %v432 = vsel %vm377, %v422, %v429
      %v434 = vunpack.c.l.bf16 %v432
      %v435 = vunpack.c.h.bf16 %v432
      %436 = vst.msk [vmem:[#allocation2 + $0x37] sm:$0xff] %vm273, %v434
      %437 = vst.msk [vmem:[#allocation2 + $0x3f] sm:$0xff] %vm273, %v435
      %s438 = scalar_lea.vmem %s261, 24
      %v439 = vld [vmem:[%s438] sm:$0xf]
      %v440 = vld [vmem:[%s438 + $0x4] sm:$0xf]
      %s441 = scalar_lea.vmem %s266, 24
      %v442 = vld [vmem:[%s441] sm:$0xf]
      %v443 = vld [vmem:[%s441 + $0x4] sm:$0xf]
      %v446 = vunpack.c.l.b16 %v439
      %v447 = vunpack.c.l.b16 %v440
      %v448 = vpack.c.b16 %v447, %v446
      %v451 = vunpack.c.l.b16 %v442
      %v452 = vunpack.c.l.b16 %v443
      %v453 = vpack.c.b16 %v452, %v451
      %454 = vrot.lane.b32.xlu0 %v453, 4
      %v455 = vpop.permute.xlu0 %454
      %v458 = vsel %vm377, %v448, %v455
      %v460 = vunpack.c.l.bf16 %v458
      %v461 = vunpack.c.h.bf16 %v458
      %462 = vst.msk [vmem:[#allocation2 + $0x49] sm:$0xff] %vm273, %v460
      %463 = vst.msk [vmem:[#allocation2 + $0x51] sm:$0xff] %vm273, %v461
      %s464 = scalar_lea.vmem %s261, 32
      %v465 = vld [vmem:[%s464] sm:$0xf]
      %v466 = vld [vmem:[%s464 + $0x4] sm:$0xf]
      %s467 = scalar_lea.vmem %s266, 32
      %v468 = vld [vmem:[%s467] sm:$0xf]
      %v469 = vld [vmem:[%s467 + $0x4] sm:$0xf]
      %v472 = vunpack.c.l.b16 %v465
      %v473 = vunpack.c.l.b16 %v466
      %v474 = vpack.c.b16 %v473, %v472
      %v477 = vunpack.c.l.b16 %v468
      %v478 = vunpack.c.l.b16 %v469
      %v479 = vpack.c.b16 %v478, %v477
      %480 = vrot.lane.b32.xlu0 %v479, 4
      %v481 = vpop.permute.xlu0 %480
      %v484 = vsel %vm377, %v474, %v481
      %v486 = vunpack.c.l.bf16 %v484
      %v487 = vunpack.c.h.bf16 %v484
      %488 = vst.msk [vmem:[#allocation2 + $0x5b] sm:$0xff] %vm273, %v486
      %489 = vst.msk [vmem:[#allocation2 + $0x63] sm:$0xff] %vm273, %v487
      %s490 = scalar_lea.vmem %s261, 40
      %v491 = vld [vmem:[%s490] sm:$0xf]
      %v492 = vld [vmem:[%s490 + $0x4] sm:$0xf]
      %s493 = scalar_lea.vmem %s266, 40
      %v494 = vld [vmem:[%s493] sm:$0xf]
      %v495 = vld [vmem:[%s493 + $0x4] sm:$0xf]
      %v498 = vunpack.c.l.b16 %v491
      %v499 = vunpack.c.l.b16 %v492
      %v500 = vpack.c.b16 %v499, %v498
      %v503 = vunpack.c.l.b16 %v494
      %v504 = vunpack.c.l.b16 %v495
      %v505 = vpack.c.b16 %v504, %v503
      %506 = vrot.lane.b32.xlu0 %v505, 4
      %v507 = vpop.permute.xlu0 %506
      %v510 = vsel %vm377, %v500, %v507
      %v512 = vunpack.c.l.bf16 %v510
      %v513 = vunpack.c.h.bf16 %v510
      %514 = vst.msk [vmem:[#allocation2 + $0x6d] sm:$0xff] %vm273, %v512
      %515 = vst.msk [vmem:[#allocation2 + $0x75] sm:$0xff] %vm273, %v513
      %s516 = scalar_lea.vmem %s261, 48
      %v517 = vld [vmem:[%s516] sm:$0xf]
      %v518 = vld [vmem:[%s516 + $0x4] sm:$0xf]
      %s519 = scalar_lea.vmem %s266, 48
      %v520 = vld [vmem:[%s519] sm:$0xf]
      %v521 = vld [vmem:[%s519 + $0x4] sm:$0xf]
      %v524 = vunpack.c.l.b16 %v517
      %v525 = vunpack.c.l.b16 %v518
      %v526 = vpack.c.b16 %v525, %v524
      %v529 = vunpack.c.l.b16 %v520
      %v530 = vunpack.c.l.b16 %v521
      %v531 = vpack.c.b16 %v530, %v529
      %532 = vrot.lane.b32.xlu0 %v531, 4
      %v533 = vpop.permute.xlu0 %532
      %v536 = vsel %vm377, %v526, %v533
      %v538 = vunpack.c.l.bf16 %v536
      %v539 = vunpack.c.h.bf16 %v536
      %540 = vst.msk [vmem:[#allocation2 + $0x7f] sm:$0xff] %vm273, %v538
      %541 = vst.msk [vmem:[#allocation2 + $0x87] sm:$0xff] %vm273, %v539
      %s542 = scalar_lea.vmem %s261, 56
      %v543 = vld [vmem:[%s542] sm:$0xf]
      %v544 = vld [vmem:[%s542 + $0x4] sm:$0xf]
      %s545 = scalar_lea.vmem %s266, 56
      %v546 = vld [vmem:[%s545] sm:$0xf]
      %v547 = vld [vmem:[%s545 + $0x4] sm:$0xf]
      %v550 = vunpack.c.l.b16 %v543
      %v551 = vunpack.c.l.b16 %v544
      %v552 = vpack.c.b16 %v551, %v550
      %v555 = vunpack.c.l.b16 %v546
      %v556 = vunpack.c.l.b16 %v547
      %v557 = vpack.c.b16 %v556, %v555
      %558 = vrot.lane.b32.xlu0 %v557, 4
      %v559 = vpop.permute.xlu0 %558
      %v562 = vsel %vm377, %v552, %v559
      %v564 = vunpack.c.l.bf16 %v562
      %v565 = vunpack.c.h.bf16 %v562
      %566 = vst.msk [vmem:[#allocation2 + $0x91] sm:$0xff] %vm273, %v564
      %567 = vst.msk [vmem:[#allocation2 + $0x99] sm:$0xff] %vm273, %v565
      %s568 = scalar_lea.vmem %s261, 64
      %v569 = vld [vmem:[%s568] sm:$0xf]
      %v570 = vld [vmem:[%s568 + $0x4] sm:$0xf]
      %s571 = scalar_lea.vmem %s266, 64
      %v572 = vld [vmem:[%s571] sm:$0xf]
      %v573 = vld [vmem:[%s571 + $0x4] sm:$0xf]
      %v576 = vunpack.c.l.b16 %v569
      %v577 = vunpack.c.l.b16 %v570
      %v578 = vpack.c.b16 %v577, %v576
      %v581 = vunpack.c.l.b16 %v572
      %v582 = vunpack.c.l.b16 %v573
      %v583 = vpack.c.b16 %v582, %v581
      %584 = vrot.lane.b32.xlu0 %v583, 4
      %v585 = vpop.permute.xlu0 %584
      %v588 = vsel %vm377, %v578, %v585
      %v590 = vunpack.c.l.bf16 %v588
      %v591 = vunpack.c.h.bf16 %v588
      %592 = vst.msk [vmem:[#allocation2 + $0xa3] sm:$0xff] %vm273, %v590
      %593 = vst.msk [vmem:[#allocation2 + $0xab] sm:$0xff] %vm273, %v591
      %s594 = scalar_lea.vmem %s261, 72
      %v595 = vld [vmem:[%s594] sm:$0xf]
      %v596 = vld [vmem:[%s594 + $0x4] sm:$0xf]
      %s597 = scalar_lea.vmem %s266, 72
      %v598 = vld [vmem:[%s597] sm:$0xf]
      %v599 = vld [vmem:[%s597 + $0x4] sm:$0xf]
      %v602 = vunpack.c.l.b16 %v595
      %v603 = vunpack.c.l.b16 %v596
      %v604 = vpack.c.b16 %v603, %v602
      %v607 = vunpack.c.l.b16 %v598
      %v608 = vunpack.c.l.b16 %v599
      %v609 = vpack.c.b16 %v608, %v607
      %610 = vrot.lane.b32.xlu0 %v609, 4
      %v611 = vpop.permute.xlu0 %610
      %v614 = vsel %vm377, %v604, %v611
      %v616 = vunpack.c.l.bf16 %v614
      %v617 = vunpack.c.h.bf16 %v614
      %618 = vst.msk [vmem:[#allocation2 + $0xb5] sm:$0xff] %vm273, %v616
      %619 = vst.msk [vmem:[#allocation2 + $0xbd] sm:$0xff] %vm273, %v617
      %s620 = scalar_lea.vmem %s261, 80
      %v621 = vld [vmem:[%s620] sm:$0xf]
      %v622 = vld [vmem:[%s620 + $0x4] sm:$0xf]
      %s623 = scalar_lea.vmem %s266, 80
      %v624 = vld [vmem:[%s623] sm:$0xf]
      %v625 = vld [vmem:[%s623 + $0x4] sm:$0xf]
      %v628 = vunpack.c.l.b16 %v621
      %v629 = vunpack.c.l.b16 %v622
      %v630 = vpack.c.b16 %v629, %v628
      %v633 = vunpack.c.l.b16 %v624
      %v634 = vunpack.c.l.b16 %v625
      %v635 = vpack.c.b16 %v634, %v633
      %636 = vrot.lane.b32.xlu0 %v635, 4
      %v637 = vpop.permute.xlu0 %636
      %v640 = vsel %vm377, %v630, %v637
      %v642 = vunpack.c.l.bf16 %v640
      %v643 = vunpack.c.h.bf16 %v640
      %644 = vst.msk [vmem:[#allocation2 + $0xc7] sm:$0xff] %vm273, %v642
      %645 = vst.msk [vmem:[#allocation2 + $0xcf] sm:$0xff] %vm273, %v643
      %s646 = scalar_lea.vmem %s261, 88
      %v647 = vld [vmem:[%s646] sm:$0xf]
      %v648 = vld [vmem:[%s646 + $0x4] sm:$0xf]
      %s649 = scalar_lea.vmem %s266, 88
      %v650 = vld [vmem:[%s649] sm:$0xf]
      %v651 = vld [vmem:[%s649 + $0x4] sm:$0xf]
      %v654 = vunpack.c.l.b16 %v647
      %v655 = vunpack.c.l.b16 %v648
      %v656 = vpack.c.b16 %v655, %v654
      %v659 = vunpack.c.l.b16 %v650
      %v660 = vunpack.c.l.b16 %v651
      %v661 = vpack.c.b16 %v660, %v659
      %662 = vrot.lane.b32.xlu0 %v661, 4
      %v663 = vpop.permute.xlu0 %662
      %v666 = vsel %vm377, %v656, %v663
      %v668 = vunpack.c.l.bf16 %v666
      %v669 = vunpack.c.h.bf16 %v666
      %670 = vst.msk [vmem:[#allocation2 + $0xd9] sm:$0xff] %vm273, %v668
      %671 = vst.msk [vmem:[#allocation2 + $0xe1] sm:$0xff] %vm273, %v669
      %s672 = scalar_lea.vmem %s261, 96
      %v673 = vld [vmem:[%s672] sm:$0xf]
      %v674 = vld [vmem:[%s672 + $0x4] sm:$0xf]
      %s675 = scalar_lea.vmem %s266, 96
      %v676 = vld [vmem:[%s675] sm:$0xf]
      %v677 = vld [vmem:[%s675 + $0x4] sm:$0xf]
      %v680 = vunpack.c.l.b16 %v673
      %v681 = vunpack.c.l.b16 %v674
      %v682 = vpack.c.b16 %v681, %v680
      %v685 = vunpack.c.l.b16 %v676
      %v686 = vunpack.c.l.b16 %v677
      %v687 = vpack.c.b16 %v686, %v685
      %688 = vrot.lane.b32.xlu0 %v687, 4
      %v689 = vpop.permute.xlu0 %688
      %v692 = vsel %vm377, %v682, %v689
      %v694 = vunpack.c.l.bf16 %v692
      %v695 = vunpack.c.h.bf16 %v692
      %696 = vst.msk [vmem:[#allocation2 + $0xeb] sm:$0xff] %vm273, %v694
      %697 = vst.msk [vmem:[#allocation2 + $0xf3] sm:$0xff] %vm273, %v695
      %s698 = scalar_lea.vmem %s261, 104
      %v699 = vld [vmem:[%s698] sm:$0xf]
      %v700 = vld [vmem:[%s698 + $0x4] sm:$0xf]
      %s701 = scalar_lea.vmem %s266, 104
      %v702 = vld [vmem:[%s701] sm:$0xf]
      %v703 = vld [vmem:[%s701 + $0x4] sm:$0xf]
      %v706 = vunpack.c.l.b16 %v699
      %v707 = vunpack.c.l.b16 %v700
      %v708 = vpack.c.b16 %v707, %v706
      %v711 = vunpack.c.l.b16 %v702
      %v712 = vunpack.c.l.b16 %v703
      %v713 = vpack.c.b16 %v712, %v711
      %714 = vrot.lane.b32.xlu0 %v713, 4
      %v715 = vpop.permute.xlu0 %714
      %v718 = vsel %vm377, %v708, %v715
      %v720 = vunpack.c.l.bf16 %v718
      %v721 = vunpack.c.h.bf16 %v718
      %722 = vst.msk [vmem:[#allocation2 + $0xfd] sm:$0xff] %vm273, %v720
      %723 = vst.msk [vmem:[#allocation2 + $0x105] sm:$0xff] %vm273, %v721
      %s724 = scalar_lea.vmem %s261, 112
      %v725 = vld [vmem:[%s724] sm:$0xf]
      %v726 = vld [vmem:[%s724 + $0x4] sm:$0xf]
      %s727 = scalar_lea.vmem %s266, 112
      %v728 = vld [vmem:[%s727] sm:$0xf]
      %v729 = vld [vmem:[%s727 + $0x4] sm:$0xf]
      %v732 = vunpack.c.l.b16 %v725
      %v733 = vunpack.c.l.b16 %v726
      %v734 = vpack.c.b16 %v733, %v732
      %v737 = vunpack.c.l.b16 %v728
      %v738 = vunpack.c.l.b16 %v729
      %v739 = vpack.c.b16 %v738, %v737
      %740 = vrot.lane.b32.xlu0 %v739, 4
      %v741 = vpop.permute.xlu0 %740
      %v744 = vsel %vm377, %v734, %v741
      %v746 = vunpack.c.l.bf16 %v744
      %v747 = vunpack.c.h.bf16 %v744
      %748 = vst.msk [vmem:[#allocation2 + $0x10f] sm:$0xff] %vm273, %v746
      %749 = vst.msk [vmem:[#allocation2 + $0x117] sm:$0xff] %vm273, %v747
      %s750 = scalar_lea.vmem %s261, 120
      %v751 = vld [vmem:[%s750] sm:$0xf]
      %v752 = vld [vmem:[%s750 + $0x4] sm:$0xf]
      %s753 = scalar_lea.vmem %s266, 120
      %v754 = vld [vmem:[%s753] sm:$0xf]
      %v755 = vld [vmem:[%s753 + $0x4] sm:$0xf]
      %v758 = vunpack.c.l.b16 %v751
      %v759 = vunpack.c.l.b16 %v752
      %v760 = vpack.c.b16 %v759, %v758
      %v763 = vunpack.c.l.b16 %v754
      %v764 = vunpack.c.l.b16 %v755
      %v765 = vpack.c.b16 %v764, %v763
      %766 = vrot.lane.b32.xlu0 %v765, 4
      %v767 = vpop.permute.xlu0 %766
      %v770 = vsel %vm377, %v760, %v767
      %v772 = vunpack.c.l.bf16 %v770
      %v773 = vunpack.c.h.bf16 %v770
      %774 = vst.msk [vmem:[#allocation2 + $0x121] sm:$0xff] %vm273, %v772
      %775 = vst.msk [vmem:[#allocation2 + $0x129] sm:$0xff] %vm273, %v773
      %v776 = vld [vmem:[#allocation2] sm:$0xff]
      %v777 = vld [vmem:[#allocation2 + $0x8] sm:$0xff]
      %v778 = vld [vmem:[#allocation2 + $0x10] sm:$0xff]
      %v779 = vld [vmem:[#allocation2 + $0x18] sm:$0xff]
      %v780 = vld [vmem:[#allocation2 + $0x20] sm:$0xff]
      %v781 = vld [vmem:[#allocation2 + $0x28] sm:$0xff]
      %v782 = vld [vmem:[#allocation2 + $0x30] sm:$0xff]
      %v783 = vld [vmem:[#allocation2 + $0x38] sm:$0xff]
      %v784 = vld [vmem:[#allocation2 + $0x40] sm:$0xff]
      %v785 = vld [vmem:[#allocation2 + $0x48] sm:$0xff]
      %v786 = vld [vmem:[#allocation2 + $0x50] sm:$0xff]
      %v787 = vld [vmem:[#allocation2 + $0x58] sm:$0xff]
      %v788 = vld [vmem:[#allocation2 + $0x60] sm:$0xff]
      %v789 = vld [vmem:[#allocation2 + $0x68] sm:$0xff]
      %v790 = vld [vmem:[#allocation2 + $0x70] sm:$0xff]
      %v791 = vld [vmem:[#allocation2 + $0x78] sm:$0xff]
      %v792 = vld [vmem:[#allocation2 + $0x80] sm:$0xff]
      %v793 = vld [vmem:[#allocation2 + $0x88] sm:$0xff]
      %v794 = vld [vmem:[#allocation2 + $0x90] sm:$0xff]
      %v795 = vld [vmem:[#allocation2 + $0x98] sm:$0xff]
      %v796 = vld [vmem:[#allocation2 + $0xa0] sm:$0xff]
      %v797 = vld [vmem:[#allocation2 + $0xa8] sm:$0xff]
      %v798 = vld [vmem:[#allocation2 + $0xb0] sm:$0xff]
      %v799 = vld [vmem:[#allocation2 + $0xb8] sm:$0xff]
      %v800 = vld [vmem:[#allocation2 + $0xc0] sm:$0xff]
      %v801 = vld [vmem:[#allocation2 + $0xc8] sm:$0xff]
      %v802 = vld [vmem:[#allocation2 + $0xd0] sm:$0xff]
      %v803 = vld [vmem:[#allocation2 + $0xd8] sm:$0xff]
      %v804 = vld [vmem:[#allocation2 + $0xe0] sm:$0xff]
      %v805 = vld [vmem:[#allocation2 + $0xe8] sm:$0xff]
      %v806 = vld [vmem:[#allocation2 + $0xf0] sm:$0xff]
      %v807 = vld [vmem:[#allocation2 + $0xf8] sm:$0xff]
      %v808 = vld [vmem:[#allocation2 + $0x100] sm:$0xff]
      %v809 = vld [vmem:[#allocation2 + $0x108] sm:$0xff]
      %v810 = vld [vmem:[#allocation2 + $0x110] sm:$0xff]
      %v811 = vld [vmem:[#allocation2 + $0x118] sm:$0xff]
      %v812 = vld [vmem:[#allocation2 + $0x1] sm:$0xff]
      %v813 = vld [vmem:[#allocation2 + $0x9] sm:$0xff]
      %v814 = vld [vmem:[#allocation2 + $0x11] sm:$0xff]
      %v815 = vld [vmem:[#allocation2 + $0x19] sm:$0xff]
      %v816 = vld [vmem:[#allocation2 + $0x21] sm:$0xff]
      %v817 = vld [vmem:[#allocation2 + $0x29] sm:$0xff]
      %v818 = vld [vmem:[#allocation2 + $0x31] sm:$0xff]
      %v819 = vld [vmem:[#allocation2 + $0x39] sm:$0xff]
      %v820 = vld [vmem:[#allocation2 + $0x41] sm:$0xff]
      %v821 = vld [vmem:[#allocation2 + $0x49] sm:$0xff]
      %v822 = vld [vmem:[#allocation2 + $0x51] sm:$0xff]
      %v823 = vld [vmem:[#allocation2 + $0x59] sm:$0xff]
      %v824 = vld [vmem:[#allocation2 + $0x61] sm:$0xff]
      %v825 = vld [vmem:[#allocation2 + $0x69] sm:$0xff]
      %v826 = vld [vmem:[#allocation2 + $0x71] sm:$0xff]
      %v827 = vld [vmem:[#allocation2 + $0x79] sm:$0xff]
      %v828 = vld [vmem:[#allocation2 + $0x81] sm:$0xff]
      %v829 = vld [vmem:[#allocation2 + $0x89] sm:$0xff]
      %v830 = vld [vmem:[#allocation2 + $0x91] sm:$0xff]
      %v831 = vld [vmem:[#allocation2 + $0x99] sm:$0xff]
      %v832 = vld [vmem:[#allocation2 + $0xa1] sm:$0xff]
      %v833 = vld [vmem:[#allocation2 + $0xa9] sm:$0xff]
      %v834 = vld [vmem:[#allocation2 + $0xb1] sm:$0xff]
      %v835 = vld [vmem:[#allocation2 + $0xb9] sm:$0xff]
      %v836 = vld [vmem:[#allocation2 + $0xc1] sm:$0xff]
      %v837 = vld [vmem:[#allocation2 + $0xc9] sm:$0xff]
      %v838 = vld [vmem:[#allocation2 + $0xd1] sm:$0xff]
      %v839 = vld [vmem:[#allocation2 + $0xd9] sm:$0xff]
      %v840 = vld [vmem:[#allocation2 + $0xe1] sm:$0xff]
      %v841 = vld [vmem:[#allocation2 + $0xe9] sm:$0xff]
      %v842 = vld [vmem:[#allocation2 + $0xf1] sm:$0xff]
      %v843 = vld [vmem:[#allocation2 + $0xf9] sm:$0xff]
      %v844 = vld [vmem:[#allocation2 + $0x101] sm:$0xff]
      %v845 = vld [vmem:[#allocation2 + $0x109] sm:$0xff]
      %v846 = vld [vmem:[#allocation2 + $0x111] sm:$0xff]
      %v847 = vld [vmem:[#allocation2 + $0x119] sm:$0xff]
      %v848 = vld [vmem:[#allocation2 + $0x2] sm:$0xff]
      %v849 = vld [vmem:[#allocation2 + $0xa] sm:$0xff]
      %v850 = vld [vmem:[#allocation2 + $0x12] sm:$0xff]
      %v851 = vld [vmem:[#allocation2 + $0x1a] sm:$0xff]
      %v852 = vld [vmem:[#allocation2 + $0x22] sm:$0xff]
      %v853 = vld [vmem:[#allocation2 + $0x2a] sm:$0xff]
      %v854 = vld [vmem:[#allocation2 + $0x32] sm:$0xff]
      %v855 = vld [vmem:[#allocation2 + $0x3a] sm:$0xff]
      %v856 = vld [vmem:[#allocation2 + $0x42] sm:$0xff]
      %v857 = vld [vmem:[#allocation2 + $0x4a] sm:$0xff]
      %v858 = vld [vmem:[#allocation2 + $0x52] sm:$0xff]
      %v859 = vld [vmem:[#allocation2 + $0x5a] sm:$0xff]
      %v860 = vld [vmem:[#allocation2 + $0x62] sm:$0xff]
      %v861 = vld [vmem:[#allocation2 + $0x6a] sm:$0xff]
      %v862 = vld [vmem:[#allocation2 + $0x72] sm:$0xff]
      %v863 = vld [vmem:[#allocation2 + $0x7a] sm:$0xff]
      %v864 = vld [vmem:[#allocation2 + $0x82] sm:$0xff]
      %v865 = vld [vmem:[#allocation2 + $0x8a] sm:$0xff]
      %v866 = vld [vmem:[#allocation2 + $0x92] sm:$0xff]
      %v867 = vld [vmem:[#allocation2 + $0x9a] sm:$0xff]
      %v868 = vld [vmem:[#allocation2 + $0xa2] sm:$0xff]
      %v869 = vld [vmem:[#allocation2 + $0xaa] sm:$0xff]
      %v870 = vld [vmem:[#allocation2 + $0xb2] sm:$0xff]
      %v871 = vld [vmem:[#allocation2 + $0xba] sm:$0xff]
      %v872 = vld [vmem:[#allocation2 + $0xc2] sm:$0xff]
      %v873 = vld [vmem:[#allocation2 + $0xca] sm:$0xff]
      %v874 = vld [vmem:[#allocation2 + $0xd2] sm:$0xff]
      %v875 = vld [vmem:[#allocation2 + $0xda] sm:$0xff]
      %v876 = vld [vmem:[#allocation2 + $0xe2] sm:$0xff]
      %v877 = vld [vmem:[#allocation2 + $0xea] sm:$0xff]
      %v878 = vld [vmem:[#allocation2 + $0xf2] sm:$0xff]
      %v879 = vld [vmem:[#allocation2 + $0xfa] sm:$0xff]
      %v880 = vld [vmem:[#allocation2 + $0x102] sm:$0xff]
      %v881 = vld [vmem:[#allocation2 + $0x10a] sm:$0xff]
      %v882 = vld [vmem:[#allocation2 + $0x112] sm:$0xff]
      %v883 = vld [vmem:[#allocation2 + $0x11a] sm:$0xff]
      %v884 = vld [vmem:[#allocation2 + $0x122] sm:$0xff]
      %v885 = vld [vmem:[#allocation2 + $0x12a] sm:$0xff]
      %v886 = vld [vmem:[#allocation2 + $0x13] sm:$0xff]
      %v887 = vld [vmem:[#allocation2 + $0x1b] sm:$0xff]
      %v888 = vld [vmem:[#allocation2 + $0x23] sm:$0xff]
      %v889 = vld [vmem:[#allocation2 + $0x2b] sm:$0xff]
      %v890 = vld [vmem:[#allocation2 + $0x33] sm:$0xff]
      %v891 = vld [vmem:[#allocation2 + $0x3b] sm:$0xff]
      %v892 = vld [vmem:[#allocation2 + $0x43] sm:$0xff]
      %v893 = vld [vmem:[#allocation2 + $0x4b] sm:$0xff]
      %v894 = vld [vmem:[#allocation2 + $0x53] sm:$0xff]
      %v895 = vld [vmem:[#allocation2 + $0x5b] sm:$0xff]
      %v896 = vld [vmem:[#allocation2 + $0x63] sm:$0xff]
      %v897 = vld [vmem:[#allocation2 + $0x6b] sm:$0xff]
      %v898 = vld [vmem:[#allocation2 + $0x73] sm:$0xff]
      %v899 = vld [vmem:[#allocation2 + $0x7b] sm:$0xff]
      %v900 = vld [vmem:[#allocation2 + $0x83] sm:$0xff]
      %v901 = vld [vmem:[#allocation2 + $0x8b] sm:$0xff]
      %v902 = vld [vmem:[#allocation2 + $0x93] sm:$0xff]
      %v903 = vld [vmem:[#allocation2 + $0x9b] sm:$0xff]
      %v904 = vld [vmem:[#allocation2 + $0xa3] sm:$0xff]
      %v905 = vld [vmem:[#allocation2 + $0xab] sm:$0xff]
      %v906 = vld [vmem:[#allocation2 + $0xb3] sm:$0xff]
      %v907 = vld [vmem:[#allocation2 + $0xbb] sm:$0xff]
      %v908 = vld [vmem:[#allocation2 + $0xc3] sm:$0xff]
      %v909 = vld [vmem:[#allocation2 + $0xcb] sm:$0xff]
      %v910 = vld [vmem:[#allocation2 + $0xd3] sm:$0xff]
      %v911 = vld [vmem:[#allocation2 + $0xdb] sm:$0xff]
      %v912 = vld [vmem:[#allocation2 + $0xe3] sm:$0xff]
      %v913 = vld [vmem:[#allocation2 + $0xeb] sm:$0xff]
      %v914 = vld [vmem:[#allocation2 + $0xf3] sm:$0xff]
      %v915 = vld [vmem:[#allocation2 + $0xfb] sm:$0xff]
      %v916 = vld [vmem:[#allocation2 + $0x103] sm:$0xff]
      %v917 = vld [vmem:[#allocation2 + $0x10b] sm:$0xff]
      %v918 = vld [vmem:[#allocation2 + $0x113] sm:$0xff]
      %v919 = vld [vmem:[#allocation2 + $0x11b] sm:$0xff]
      %v920 = vld [vmem:[#allocation2 + $0x123] sm:$0xff]
      %v921 = vld [vmem:[#allocation2 + $0x12b] sm:$0xff]
      %v922 = vld [vmem:[#allocation2 + $0x14] sm:$0xff]
      %v923 = vld [vmem:[#allocation2 + $0x1c] sm:$0xff]
      %v924 = vld [vmem:[#allocation2 + $0x24] sm:$0xff]
      %v925 = vld [vmem:[#allocation2 + $0x2c] sm:$0xff]
      %v926 = vld [vmem:[#allocation2 + $0x34] sm:$0xff]
      %v927 = vld [vmem:[#allocation2 + $0x3c] sm:$0xff]
      %v928 = vld [vmem:[#allocation2 + $0x44] sm:$0xff]
      %v929 = vld [vmem:[#allocation2 + $0x4c] sm:$0xff]
      %v930 = vld [vmem:[#allocation2 + $0x54] sm:$0xff]
      %v931 = vld [vmem:[#allocation2 + $0x5c] sm:$0xff]
      %v932 = vld [vmem:[#allocation2 + $0x64] sm:$0xff]
      %v933 = vld [vmem:[#allocation2 + $0x6c] sm:$0xff]
      %v934 = vld [vmem:[#allocation2 + $0x74] sm:$0xff]
      %v935 = vld [vmem:[#allocation2 + $0x7c] sm:$0xff]
      %v936 = vld [vmem:[#allocation2 + $0x84] sm:$0xff]
      %v937 = vld [vmem:[#allocation2 + $0x8c] sm:$0xff]
      %v938 = vld [vmem:[#allocation2 + $0x94] sm:$0xff]
      %v939 = vld [vmem:[#allocation2 + $0x9c] sm:$0xff]
      %v940 = vld [vmem:[#allocation2 + $0xa4] sm:$0xff]
      %v941 = vld [vmem:[#allocation2 + $0xac] sm:$0xff]
      %v942 = vld [vmem:[#allocation2 + $0xb4] sm:$0xff]
      %v943 = vld [vmem:[#allocation2 + $0xbc] sm:$0xff]
      %v944 = vld [vmem:[#allocation2 + $0xc4] sm:$0xff]
      %v945 = vld [vmem:[#allocation2 + $0xcc] sm:$0xff]
      %v946 = vld [vmem:[#allocation2 + $0xd4] sm:$0xff]
      %v947 = vld [vmem:[#allocation2 + $0xdc] sm:$0xff]
      %v948 = vld [vmem:[#allocation2 + $0xe4] sm:$0xff]
      %v949 = vld [vmem:[#allocation2 + $0xec] sm:$0xff]
      %v950 = vld [vmem:[#allocation2 + $0xf4] sm:$0xff]
      %v951 = vld [vmem:[#allocation2 + $0xfc] sm:$0xff]
      %v952 = vld [vmem:[#allocation2 + $0x104] sm:$0xff]
      %v953 = vld [vmem:[#allocation2 + $0x10c] sm:$0xff]
      %v954 = vld [vmem:[#allocation2 + $0x114] sm:$0xff]
      %v955 = vld [vmem:[#allocation2 + $0x11c] sm:$0xff]
      %v956 = vld [vmem:[#allocation2 + $0x124] sm:$0xff]
      %v957 = vld [vmem:[#allocation2 + $0x12c] sm:$0xff]
      %v958 = vld [vmem:[#allocation2 + $0x134] sm:$0xff]
      %v959 = vld [vmem:[#allocation2 + $0x13c] sm:$0xff]
      %v960 = vld [vmem:[#allocation2 + $0x25] sm:$0xff]
      %v961 = vld [vmem:[#allocation2 + $0x2d] sm:$0xff]
      %v962 = vld [vmem:[#allocation2 + $0x35] sm:$0xff]
      %v963 = vld [vmem:[#allocation2 + $0x3d] sm:$0xff]
      %v964 = vld [vmem:[#allocation2 + $0x45] sm:$0xff]
      %v965 = vld [vmem:[#allocation2 + $0x4d] sm:$0xff]
      %v966 = vld [vmem:[#allocation2 + $0x55] sm:$0xff]
      %v967 = vld [vmem:[#allocation2 + $0x5d] sm:$0xff]
      %v968 = vld [vmem:[#allocation2 + $0x65] sm:$0xff]
      %v969 = vld [vmem:[#allocation2 + $0x6d] sm:$0xff]
      %v970 = vld [vmem:[#allocation2 + $0x75] sm:$0xff]
      %v971 = vld [vmem:[#allocation2 + $0x7d] sm:$0xff]
      %v972 = vld [vmem:[#allocation2 + $0x85] sm:$0xff]
      %v973 = vld [vmem:[#allocation2 + $0x8d] sm:$0xff]
      %v974 = vld [vmem:[#allocation2 + $0x95] sm:$0xff]
      %v975 = vld [vmem:[#allocation2 + $0x9d] sm:$0xff]
      %v976 = vld [vmem:[#allocation2 + $0xa5] sm:$0xff]
      %v977 = vld [vmem:[#allocation2 + $0xad] sm:$0xff]
      %v978 = vld [vmem:[#allocation2 + $0xb5] sm:$0xff]
      %v979 = vld [vmem:[#allocation2 + $0xbd] sm:$0xff]
      %v980 = vld [vmem:[#allocation2 + $0xc5] sm:$0xff]
      %v981 = vld [vmem:[#allocation2 + $0xcd] sm:$0xff]
      %v982 = vld [vmem:[#allocation2 + $0xd5] sm:$0xff]
      %v983 = vld [vmem:[#allocation2 + $0xdd] sm:$0xff]
      %v984 = vld [vmem:[#allocation2 + $0xe5] sm:$0xff]
      %v985 = vld [vmem:[#allocation2 + $0xed] sm:$0xff]
      %v986 = vld [vmem:[#allocation2 + $0xf5] sm:$0xff]
      %v987 = vld [vmem:[#allocation2 + $0xfd] sm:$0xff]
      %v988 = vld [vmem:[#allocation2 + $0x105] sm:$0xff]
      %v989 = vld [vmem:[#allocation2 + $0x10d] sm:$0xff]
      %v990 = vld [vmem:[#allocation2 + $0x115] sm:$0xff]
      %v991 = vld [vmem:[#allocation2 + $0x11d] sm:$0xff]
      %v992 = vld [vmem:[#allocation2 + $0x125] sm:$0xff]
      %v993 = vld [vmem:[#allocation2 + $0x12d] sm:$0xff]
      %v994 = vld [vmem:[#allocation2 + $0x135] sm:$0xff]
      %v995 = vld [vmem:[#allocation2 + $0x13d] sm:$0xff]
      %v996 = vld [vmem:[#allocation2 + $0x26] sm:$0xff]
      %v997 = vld [vmem:[#allocation2 + $0x2e] sm:$0xff]
      %v998 = vld [vmem:[#allocation2 + $0x36] sm:$0xff]
      %v999 = vld [vmem:[#allocation2 + $0x3e] sm:$0xff]
      %v1000 = vld [vmem:[#allocation2 + $0x46] sm:$0xff]
      %v1001 = vld [vmem:[#allocation2 + $0x4e] sm:$0xff]
      %v1002 = vld [vmem:[#allocation2 + $0x56] sm:$0xff]
      %v1003 = vld [vmem:[#allocation2 + $0x5e] sm:$0xff]
      %v1004 = vld [vmem:[#allocation2 + $0x66] sm:$0xff]
      %v1005 = vld [vmem:[#allocation2 + $0x6e] sm:$0xff]
      %v1006 = vld [vmem:[#allocation2 + $0x76] sm:$0xff]
      %v1007 = vld [vmem:[#allocation2 + $0x7e] sm:$0xff]
      %v1008 = vld [vmem:[#allocation2 + $0x86] sm:$0xff]
      %v1009 = vld [vmem:[#allocation2 + $0x8e] sm:$0xff]
      %v1010 = vld [vmem:[#allocation2 + $0x96] sm:$0xff]
      %v1011 = vld [vmem:[#allocation2 + $0x9e] sm:$0xff]
      %v1012 = vld [vmem:[#allocation2 + $0xa6] sm:$0xff]
      %v1013 = vld [vmem:[#allocation2 + $0xae] sm:$0xff]
      %v1014 = vld [vmem:[#allocation2 + $0xb6] sm:$0xff]
      %v1015 = vld [vmem:[#allocation2 + $0xbe] sm:$0xff]
      %v1016 = vld [vmem:[#allocation2 + $0xc6] sm:$0xff]
      %v1017 = vld [vmem:[#allocation2 + $0xce] sm:$0xff]
      %v1018 = vld [vmem:[#allocation2 + $0xd6] sm:$0xff]
      %v1019 = vld [vmem:[#allocation2 + $0xde] sm:$0xff]
      %v1020 = vld [vmem:[#allocation2 + $0xe6] sm:$0xff]
      %v1021 = vld [vmem:[#allocation2 + $0xee] sm:$0xff]
      %v1022 = vld [vmem:[#allocation2 + $0xf6] sm:$0xff]
      %v1023 = vld [vmem:[#allocation2 + $0xfe] sm:$0xff]
      %v1024 = vld [vmem:[#allocation2 + $0x106] sm:$0xff]
      %v1025 = vld [vmem:[#allocation2 + $0x10e] sm:$0xff]
      %v1026 = vld [vmem:[#allocation2 + $0x116] sm:$0xff]
      %v1027 = vld [vmem:[#allocation2 + $0x11e] sm:$0xff]
      %v1028 = vld [vmem:[#allocation2 + $0x126] sm:$0xff]
      %v1029 = vld [vmem:[#allocation2 + $0x12e] sm:$0xff]
      %v1030 = vld [vmem:[#allocation2 + $0x136] sm:$0xff]
      %v1031 = vld [vmem:[#allocation2 + $0x13e] sm:$0xff]
      %1068 = vrot.lane.b32.xlu0 %v812, 8
      %v1069 = vpop.permute.xlu0 %1068
      %1070 = vrot.lane.b32.xlu0 %v813, 8
      %v1071 = vpop.permute.xlu0 %1070
      %1072 = vrot.lane.b32.xlu0 %v814, 8
      %v1073 = vpop.permute.xlu0 %1072
      %1074 = vrot.lane.b32.xlu0 %v815, 8
      %v1075 = vpop.permute.xlu0 %1074
      %1076 = vrot.lane.b32.xlu0 %v816, 8
      %v1077 = vpop.permute.xlu0 %1076
      %1078 = vrot.lane.b32.xlu0 %v817, 8
      %v1079 = vpop.permute.xlu0 %1078
      %1080 = vrot.lane.b32.xlu0 %v818, 8
      %v1081 = vpop.permute.xlu0 %1080
      %1082 = vrot.lane.b32.xlu0 %v819, 8
      %v1083 = vpop.permute.xlu0 %1082
      %1084 = vrot.lane.b32.xlu0 %v820, 8
      %v1085 = vpop.permute.xlu0 %1084
      %1086 = vrot.lane.b32.xlu0 %v821, 8
      %v1087 = vpop.permute.xlu0 %1086
      %1088 = vrot.lane.b32.xlu0 %v822, 8
      %v1089 = vpop.permute.xlu0 %1088
      %1090 = vrot.lane.b32.xlu0 %v823, 8
      %v1091 = vpop.permute.xlu0 %1090
      %1092 = vrot.lane.b32.xlu0 %v824, 8
      %v1093 = vpop.permute.xlu0 %1092
      %1094 = vrot.lane.b32.xlu0 %v825, 8
      %v1095 = vpop.permute.xlu0 %1094
      %1096 = vrot.lane.b32.xlu0 %v826, 8
      %v1097 = vpop.permute.xlu0 %1096
      %1098 = vrot.lane.b32.xlu0 %v827, 8
      %v1099 = vpop.permute.xlu0 %1098
      %1100 = vrot.lane.b32.xlu0 %v828, 8
      %v1101 = vpop.permute.xlu0 %1100
      %1102 = vrot.lane.b32.xlu0 %v829, 8
      %v1103 = vpop.permute.xlu0 %1102
      %1104 = vrot.lane.b32.xlu0 %v830, 8
      %v1105 = vpop.permute.xlu0 %1104
      %1106 = vrot.lane.b32.xlu0 %v831, 8
      %v1107 = vpop.permute.xlu0 %1106
      %1108 = vrot.lane.b32.xlu0 %v832, 8
      %v1109 = vpop.permute.xlu0 %1108
      %1110 = vrot.lane.b32.xlu0 %v833, 8
      %v1111 = vpop.permute.xlu0 %1110
      %1112 = vrot.lane.b32.xlu0 %v834, 8
      %v1113 = vpop.permute.xlu0 %1112
      %1114 = vrot.lane.b32.xlu0 %v835, 8
      %v1115 = vpop.permute.xlu0 %1114
      %1116 = vrot.lane.b32.xlu0 %v836, 8
      %v1117 = vpop.permute.xlu0 %1116
      %1118 = vrot.lane.b32.xlu0 %v837, 8
      %v1119 = vpop.permute.xlu0 %1118
      %1120 = vrot.lane.b32.xlu0 %v838, 8
      %v1121 = vpop.permute.xlu0 %1120
      %1122 = vrot.lane.b32.xlu0 %v839, 8
      %v1123 = vpop.permute.xlu0 %1122
      %1124 = vrot.lane.b32.xlu0 %v840, 8
      %v1125 = vpop.permute.xlu0 %1124
      %1126 = vrot.lane.b32.xlu0 %v841, 8
      %v1127 = vpop.permute.xlu0 %1126
      %1128 = vrot.lane.b32.xlu0 %v842, 8
      %v1129 = vpop.permute.xlu0 %1128
      %1130 = vrot.lane.b32.xlu0 %v843, 8
      %v1131 = vpop.permute.xlu0 %1130
      %1132 = vrot.lane.b32.xlu0 %v844, 8
      %v1133 = vpop.permute.xlu0 %1132
      %1134 = vrot.lane.b32.xlu0 %v845, 8
      %v1135 = vpop.permute.xlu0 %1134
      %1136 = vrot.lane.b32.xlu0 %v846, 8
      %v1137 = vpop.permute.xlu0 %1136
      %1138 = vrot.lane.b32.xlu0 %v847, 8
      %v1139 = vpop.permute.xlu0 %1138
      %1212 = vrot.lane.b32.xlu0 %v848, 16
      %v1213 = vpop.permute.xlu0 %1212
      %1214 = vrot.lane.b32.xlu0 %v849, 16
      %v1215 = vpop.permute.xlu0 %1214
      %1216 = vrot.lane.b32.xlu0 %v850, 16
      %v1217 = vpop.permute.xlu0 %1216
      %1218 = vrot.lane.b32.xlu0 %v851, 16
      %v1219 = vpop.permute.xlu0 %1218
      %1220 = vrot.lane.b32.xlu0 %v852, 16
      %v1221 = vpop.permute.xlu0 %1220
      %1222 = vrot.lane.b32.xlu0 %v853, 16
      %v1223 = vpop.permute.xlu0 %1222
      %1224 = vrot.lane.b32.xlu0 %v854, 16
      %v1225 = vpop.permute.xlu0 %1224
      %1226 = vrot.lane.b32.xlu0 %v855, 16
      %v1227 = vpop.permute.xlu0 %1226
      %1228 = vrot.lane.b32.xlu0 %v856, 16
      %v1229 = vpop.permute.xlu0 %1228
      %1230 = vrot.lane.b32.xlu0 %v857, 16
      %v1231 = vpop.permute.xlu0 %1230
      %1232 = vrot.lane.b32.xlu0 %v858, 16
      %v1233 = vpop.permute.xlu0 %1232
      %1234 = vrot.lane.b32.xlu0 %v859, 16
      %v1235 = vpop.permute.xlu0 %1234
      %1236 = vrot.lane.b32.xlu0 %v860, 16
      %v1237 = vpop.permute.xlu0 %1236
      %1238 = vrot.lane.b32.xlu0 %v861, 16
      %v1239 = vpop.permute.xlu0 %1238
      %1240 = vrot.lane.b32.xlu0 %v862, 16
      %v1241 = vpop.permute.xlu0 %1240
      %1242 = vrot.lane.b32.xlu0 %v863, 16
      %v1243 = vpop.permute.xlu0 %1242
      %1244 = vrot.lane.b32.xlu0 %v864, 16
      %v1245 = vpop.permute.xlu0 %1244
      %1246 = vrot.lane.b32.xlu0 %v865, 16
      %v1247 = vpop.permute.xlu0 %1246
      %1248 = vrot.lane.b32.xlu0 %v866, 16
      %v1249 = vpop.permute.xlu0 %1248
      %1250 = vrot.lane.b32.xlu0 %v867, 16
      %v1251 = vpop.permute.xlu0 %1250
      %1252 = vrot.lane.b32.xlu0 %v868, 16
      %v1253 = vpop.permute.xlu0 %1252
      %1254 = vrot.lane.b32.xlu0 %v869, 16
      %v1255 = vpop.permute.xlu0 %1254
      %1256 = vrot.lane.b32.xlu0 %v870, 16
      %v1257 = vpop.permute.xlu0 %1256
      %1258 = vrot.lane.b32.xlu0 %v871, 16
      %v1259 = vpop.permute.xlu0 %1258
      %1260 = vrot.lane.b32.xlu0 %v872, 16
      %v1261 = vpop.permute.xlu0 %1260
      %1262 = vrot.lane.b32.xlu0 %v873, 16
      %v1263 = vpop.permute.xlu0 %1262
      %1264 = vrot.lane.b32.xlu0 %v874, 16
      %v1265 = vpop.permute.xlu0 %1264
      %1266 = vrot.lane.b32.xlu0 %v875, 16
      %v1267 = vpop.permute.xlu0 %1266
      %1268 = vrot.lane.b32.xlu0 %v876, 16
      %v1269 = vpop.permute.xlu0 %1268
      %1270 = vrot.lane.b32.xlu0 %v877, 16
      %v1271 = vpop.permute.xlu0 %1270
      %1272 = vrot.lane.b32.xlu0 %v878, 16
      %v1273 = vpop.permute.xlu0 %1272
      %1274 = vrot.lane.b32.xlu0 %v879, 16
      %v1275 = vpop.permute.xlu0 %1274
      %1276 = vrot.lane.b32.xlu0 %v880, 16
      %v1277 = vpop.permute.xlu0 %1276
      %1278 = vrot.lane.b32.xlu0 %v881, 16
      %v1279 = vpop.permute.xlu0 %1278
      %1280 = vrot.lane.b32.xlu0 %v882, 16
      %v1281 = vpop.permute.xlu0 %1280
      %1282 = vrot.lane.b32.xlu0 %v883, 16
      %v1283 = vpop.permute.xlu0 %1282
      %1322 = vrot.lane.b32.xlu0 %v850, 24
      %v1323 = vpop.permute.xlu0 %1322
      %1324 = vrot.lane.b32.xlu0 %v851, 24
      %v1325 = vpop.permute.xlu0 %1324
      %1326 = vrot.lane.b32.xlu0 %v852, 24
      %v1327 = vpop.permute.xlu0 %1326
      %1328 = vrot.lane.b32.xlu0 %v853, 24
      %v1329 = vpop.permute.xlu0 %1328
      %1330 = vrot.lane.b32.xlu0 %v854, 24
      %v1331 = vpop.permute.xlu0 %1330
      %1332 = vrot.lane.b32.xlu0 %v855, 24
      %v1333 = vpop.permute.xlu0 %1332
      %1334 = vrot.lane.b32.xlu0 %v856, 24
      %v1335 = vpop.permute.xlu0 %1334
      %1336 = vrot.lane.b32.xlu0 %v857, 24
      %v1337 = vpop.permute.xlu0 %1336
      %1338 = vrot.lane.b32.xlu0 %v858, 24
      %v1339 = vpop.permute.xlu0 %1338
      %1340 = vrot.lane.b32.xlu0 %v859, 24
      %v1341 = vpop.permute.xlu0 %1340
      %1342 = vrot.lane.b32.xlu0 %v860, 24
      %v1343 = vpop.permute.xlu0 %1342
      %1344 = vrot.lane.b32.xlu0 %v861, 24
      %v1345 = vpop.permute.xlu0 %1344
      %1346 = vrot.lane.b32.xlu0 %v862, 24
      %v1347 = vpop.permute.xlu0 %1346
      %1348 = vrot.lane.b32.xlu0 %v863, 24
      %v1349 = vpop.permute.xlu0 %1348
      %1350 = vrot.lane.b32.xlu0 %v864, 24
      %v1351 = vpop.permute.xlu0 %1350
      %1352 = vrot.lane.b32.xlu0 %v865, 24
      %v1353 = vpop.permute.xlu0 %1352
      %1354 = vrot.lane.b32.xlu0 %v866, 24
      %v1355 = vpop.permute.xlu0 %1354
      %1356 = vrot.lane.b32.xlu0 %v867, 24
      %v1357 = vpop.permute.xlu0 %1356
      %1358 = vrot.lane.b32.xlu0 %v868, 24
      %v1359 = vpop.permute.xlu0 %1358
      %1360 = vrot.lane.b32.xlu0 %v869, 24
      %v1361 = vpop.permute.xlu0 %1360
      %1362 = vrot.lane.b32.xlu0 %v870, 24
      %v1363 = vpop.permute.xlu0 %1362
      %1364 = vrot.lane.b32.xlu0 %v871, 24
      %v1365 = vpop.permute.xlu0 %1364
      %1366 = vrot.lane.b32.xlu0 %v872, 24
      %v1367 = vpop.permute.xlu0 %1366
      %1368 = vrot.lane.b32.xlu0 %v873, 24
      %v1369 = vpop.permute.xlu0 %1368
      %1370 = vrot.lane.b32.xlu0 %v874, 24
      %v1371 = vpop.permute.xlu0 %1370
      %1372 = vrot.lane.b32.xlu0 %v875, 24
      %v1373 = vpop.permute.xlu0 %1372
      %1374 = vrot.lane.b32.xlu0 %v876, 24
      %v1375 = vpop.permute.xlu0 %1374
      %1376 = vrot.lane.b32.xlu0 %v877, 24
      %v1377 = vpop.permute.xlu0 %1376
      %1378 = vrot.lane.b32.xlu0 %v878, 24
      %v1379 = vpop.permute.xlu0 %1378
      %1380 = vrot.lane.b32.xlu0 %v879, 24
      %v1381 = vpop.permute.xlu0 %1380
      %1382 = vrot.lane.b32.xlu0 %v880, 24
      %v1383 = vpop.permute.xlu0 %1382
      %1384 = vrot.lane.b32.xlu0 %v881, 24
      %v1385 = vpop.permute.xlu0 %1384
      %1386 = vrot.lane.b32.xlu0 %v882, 24
      %v1387 = vpop.permute.xlu0 %1386
      %1388 = vrot.lane.b32.xlu0 %v883, 24
      %v1389 = vpop.permute.xlu0 %1388
      %1390 = vrot.lane.b32.xlu0 %v884, 24
      %v1391 = vpop.permute.xlu0 %1390
      %1392 = vrot.lane.b32.xlu0 %v885, 24
      %v1393 = vpop.permute.xlu0 %1392
      %1466 = vrot.lane.b32.xlu0 %v886, 32
      %v1467 = vpop.permute.xlu0 %1466
      %1468 = vrot.lane.b32.xlu0 %v887, 32
      %v1469 = vpop.permute.xlu0 %1468
      %1470 = vrot.lane.b32.xlu0 %v888, 32
      %v1471 = vpop.permute.xlu0 %1470
      %1472 = vrot.lane.b32.xlu0 %v889, 32
      %v1473 = vpop.permute.xlu0 %1472
      %1474 = vrot.lane.b32.xlu0 %v890, 32
      %v1475 = vpop.permute.xlu0 %1474
      %1476 = vrot.lane.b32.xlu0 %v891, 32
      %v1477 = vpop.permute.xlu0 %1476
      %1478 = vrot.lane.b32.xlu0 %v892, 32
      %v1479 = vpop.permute.xlu0 %1478
      %1480 = vrot.lane.b32.xlu0 %v893, 32
      %v1481 = vpop.permute.xlu0 %1480
      %1482 = vrot.lane.b32.xlu0 %v894, 32
      %v1483 = vpop.permute.xlu0 %1482
      %1484 = vrot.lane.b32.xlu0 %v895, 32
      %v1485 = vpop.permute.xlu0 %1484
      %1486 = vrot.lane.b32.xlu0 %v896, 32
      %v1487 = vpop.permute.xlu0 %1486
      %1488 = vrot.lane.b32.xlu0 %v897, 32
      %v1489 = vpop.permute.xlu0 %1488
      %1490 = vrot.lane.b32.xlu0 %v898, 32
      %v1491 = vpop.permute.xlu0 %1490
      %1492 = vrot.lane.b32.xlu0 %v899, 32
      %v1493 = vpop.permute.xlu0 %1492
      %1494 = vrot.lane.b32.xlu0 %v900, 32
      %v1495 = vpop.permute.xlu0 %1494
      %1496 = vrot.lane.b32.xlu0 %v901, 32
      %v1497 = vpop.permute.xlu0 %1496
      %1498 = vrot.lane.b32.xlu0 %v902, 32
      %v1499 = vpop.permute.xlu0 %1498
      %1500 = vrot.lane.b32.xlu0 %v903, 32
      %v1501 = vpop.permute.xlu0 %1500
      %1502 = vrot.lane.b32.xlu0 %v904, 32
      %v1503 = vpop.permute.xlu0 %1502
      %1504 = vrot.lane.b32.xlu0 %v905, 32
      %v1505 = vpop.permute.xlu0 %1504
      %1506 = vrot.lane.b32.xlu0 %v906, 32
      %v1507 = vpop.permute.xlu0 %1506
      %1508 = vrot.lane.b32.xlu0 %v907, 32
      %v1509 = vpop.permute.xlu0 %1508
      %1510 = vrot.lane.b32.xlu0 %v908, 32
      %v1511 = vpop.permute.xlu0 %1510
      %1512 = vrot.lane.b32.xlu0 %v909, 32
      %v1513 = vpop.permute.xlu0 %1512
      %1514 = vrot.lane.b32.xlu0 %v910, 32
      %v1515 = vpop.permute.xlu0 %1514
      %1516 = vrot.lane.b32.xlu0 %v911, 32
      %v1517 = vpop.permute.xlu0 %1516
      %1518 = vrot.lane.b32.xlu0 %v912, 32
      %v1519 = vpop.permute.xlu0 %1518
      %1520 = vrot.lane.b32.xlu0 %v913, 32
      %v1521 = vpop.permute.xlu0 %1520
      %1522 = vrot.lane.b32.xlu0 %v914, 32
      %v1523 = vpop.permute.xlu0 %1522
      %1524 = vrot.lane.b32.xlu0 %v915, 32
      %v1525 = vpop.permute.xlu0 %1524
      %1526 = vrot.lane.b32.xlu0 %v916, 32
      %v1527 = vpop.permute.xlu0 %1526
      %1528 = vrot.lane.b32.xlu0 %v917, 32
      %v1529 = vpop.permute.xlu0 %1528
      %1530 = vrot.lane.b32.xlu0 %v918, 32
      %v1531 = vpop.permute.xlu0 %1530
      %1532 = vrot.lane.b32.xlu0 %v919, 32
      %v1533 = vpop.permute.xlu0 %1532
      %1534 = vrot.lane.b32.xlu0 %v920, 32
      %v1535 = vpop.permute.xlu0 %1534
      %1536 = vrot.lane.b32.xlu0 %v921, 32
      %v1537 = vpop.permute.xlu0 %1536
      %1610 = vrot.lane.b32.xlu0 %v922, 40
      %v1611 = vpop.permute.xlu0 %1610
      %1612 = vrot.lane.b32.xlu0 %v923, 40
      %v1613 = vpop.permute.xlu0 %1612
      %1614 = vrot.lane.b32.xlu0 %v924, 40
      %v1615 = vpop.permute.xlu0 %1614
      %1616 = vrot.lane.b32.xlu0 %v925, 40
      %v1617 = vpop.permute.xlu0 %1616
      %1618 = vrot.lane.b32.xlu0 %v926, 40
      %v1619 = vpop.permute.xlu0 %1618
      %1620 = vrot.lane.b32.xlu0 %v927, 40
      %v1621 = vpop.permute.xlu0 %1620
      %1622 = vrot.lane.b32.xlu0 %v928, 40
      %v1623 = vpop.permute.xlu0 %1622
      %1624 = vrot.lane.b32.xlu0 %v929, 40
      %v1625 = vpop.permute.xlu0 %1624
      %1626 = vrot.lane.b32.xlu0 %v930, 40
      %v1627 = vpop.permute.xlu0 %1626
      %1628 = vrot.lane.b32.xlu0 %v931, 40
      %v1629 = vpop.permute.xlu0 %1628
      %1630 = vrot.lane.b32.xlu0 %v932, 40
      %v1631 = vpop.permute.xlu0 %1630
      %1632 = vrot.lane.b32.xlu0 %v933, 40
      %v1633 = vpop.permute.xlu0 %1632
      %1634 = vrot.lane.b32.xlu0 %v934, 40
      %v1635 = vpop.permute.xlu0 %1634
      %1636 = vrot.lane.b32.xlu0 %v935, 40
      %v1637 = vpop.permute.xlu0 %1636
      %1638 = vrot.lane.b32.xlu0 %v936, 40
      %v1639 = vpop.permute.xlu0 %1638
      %1640 = vrot.lane.b32.xlu0 %v937, 40
      %v1641 = vpop.permute.xlu0 %1640
      %1642 = vrot.lane.b32.xlu0 %v938, 40
      %v1643 = vpop.permute.xlu0 %1642
      %1644 = vrot.lane.b32.xlu0 %v939, 40
      %v1645 = vpop.permute.xlu0 %1644
      %1646 = vrot.lane.b32.xlu0 %v940, 40
      %v1647 = vpop.permute.xlu0 %1646
      %1648 = vrot.lane.b32.xlu0 %v941, 40
      %v1649 = vpop.permute.xlu0 %1648
      %1650 = vrot.lane.b32.xlu0 %v942, 40
      %v1651 = vpop.permute.xlu0 %1650
      %1652 = vrot.lane.b32.xlu0 %v943, 40
      %v1653 = vpop.permute.xlu0 %1652
      %1654 = vrot.lane.b32.xlu0 %v944, 40
      %v1655 = vpop.permute.xlu0 %1654
      %1656 = vrot.lane.b32.xlu0 %v945, 40
      %v1657 = vpop.permute.xlu0 %1656
      %1658 = vrot.lane.b32.xlu0 %v946, 40
      %v1659 = vpop.permute.xlu0 %1658
      %1660 = vrot.lane.b32.xlu0 %v947, 40
      %v1661 = vpop.permute.xlu0 %1660
      %1662 = vrot.lane.b32.xlu0 %v948, 40
      %v1663 = vpop.permute.xlu0 %1662
      %1664 = vrot.lane.b32.xlu0 %v949, 40
      %v1665 = vpop.permute.xlu0 %1664
      %1666 = vrot.lane.b32.xlu0 %v950, 40
      %v1667 = vpop.permute.xlu0 %1666
      %1668 = vrot.lane.b32.xlu0 %v951, 40
      %v1669 = vpop.permute.xlu0 %1668
      %1670 = vrot.lane.b32.xlu0 %v952, 40
      %v1671 = vpop.permute.xlu0 %1670
      %1672 = vrot.lane.b32.xlu0 %v953, 40
      %v1673 = vpop.permute.xlu0 %1672
      %1674 = vrot.lane.b32.xlu0 %v954, 40
      %v1675 = vpop.permute.xlu0 %1674
      %1676 = vrot.lane.b32.xlu0 %v955, 40
      %v1677 = vpop.permute.xlu0 %1676
      %1678 = vrot.lane.b32.xlu0 %v956, 40
      %v1679 = vpop.permute.xlu0 %1678
      %1680 = vrot.lane.b32.xlu0 %v957, 40
      %v1681 = vpop.permute.xlu0 %1680
      %1720 = vrot.lane.b32.xlu0 %v924, 48
      %v1721 = vpop.permute.xlu0 %1720
      %1722 = vrot.lane.b32.xlu0 %v925, 48
      %v1723 = vpop.permute.xlu0 %1722
      %1724 = vrot.lane.b32.xlu0 %v926, 48
      %v1725 = vpop.permute.xlu0 %1724
      %1726 = vrot.lane.b32.xlu0 %v927, 48
      %v1727 = vpop.permute.xlu0 %1726
      %1728 = vrot.lane.b32.xlu0 %v928, 48
      %v1729 = vpop.permute.xlu0 %1728
      %1730 = vrot.lane.b32.xlu0 %v929, 48
      %v1731 = vpop.permute.xlu0 %1730
      %1732 = vrot.lane.b32.xlu0 %v930, 48
      %v1733 = vpop.permute.xlu0 %1732
      %1734 = vrot.lane.b32.xlu0 %v931, 48
      %v1735 = vpop.permute.xlu0 %1734
      %1736 = vrot.lane.b32.xlu0 %v932, 48
      %v1737 = vpop.permute.xlu0 %1736
      %1738 = vrot.lane.b32.xlu0 %v933, 48
      %v1739 = vpop.permute.xlu0 %1738
      %1740 = vrot.lane.b32.xlu0 %v934, 48
      %v1741 = vpop.permute.xlu0 %1740
      %1742 = vrot.lane.b32.xlu0 %v935, 48
      %v1743 = vpop.permute.xlu0 %1742
      %1744 = vrot.lane.b32.xlu0 %v936, 48
      %v1745 = vpop.permute.xlu0 %1744
      %1746 = vrot.lane.b32.xlu0 %v937, 48
      %v1747 = vpop.permute.xlu0 %1746
      %1748 = vrot.lane.b32.xlu0 %v938, 48
      %v1749 = vpop.permute.xlu0 %1748
      %1750 = vrot.lane.b32.xlu0 %v939, 48
      %v1751 = vpop.permute.xlu0 %1750
      %1752 = vrot.lane.b32.xlu0 %v940, 48
      %v1753 = vpop.permute.xlu0 %1752
      %1754 = vrot.lane.b32.xlu0 %v941, 48
      %v1755 = vpop.permute.xlu0 %1754
      %1756 = vrot.lane.b32.xlu0 %v942, 48
      %v1757 = vpop.permute.xlu0 %1756
      %1758 = vrot.lane.b32.xlu0 %v943, 48
      %v1759 = vpop.permute.xlu0 %1758
      %1760 = vrot.lane.b32.xlu0 %v944, 48
      %v1761 = vpop.permute.xlu0 %1760
      %1762 = vrot.lane.b32.xlu0 %v945, 48
      %v1763 = vpop.permute.xlu0 %1762
      %1764 = vrot.lane.b32.xlu0 %v946, 48
      %v1765 = vpop.permute.xlu0 %1764
      %1766 = vrot.lane.b32.xlu0 %v947, 48
      %v1767 = vpop.permute.xlu0 %1766
      %1768 = vrot.lane.b32.xlu0 %v948, 48
      %v1769 = vpop.permute.xlu0 %1768
      %1770 = vrot.lane.b32.xlu0 %v949, 48
      %v1771 = vpop.permute.xlu0 %1770
      %1772 = vrot.lane.b32.xlu0 %v950, 48
      %v1773 = vpop.permute.xlu0 %1772
      %1774 = vrot.lane.b32.xlu0 %v951, 48
      %v1775 = vpop.permute.xlu0 %1774
      %1776 = vrot.lane.b32.xlu0 %v952, 48
      %v1777 = vpop.permute.xlu0 %1776
      %1778 = vrot.lane.b32.xlu0 %v953, 48
      %v1779 = vpop.permute.xlu0 %1778
      %1780 = vrot.lane.b32.xlu0 %v954, 48
      %v1781 = vpop.permute.xlu0 %1780
      %1782 = vrot.lane.b32.xlu0 %v955, 48
      %v1783 = vpop.permute.xlu0 %1782
      %1784 = vrot.lane.b32.xlu0 %v956, 48
      %v1785 = vpop.permute.xlu0 %1784
      %1786 = vrot.lane.b32.xlu0 %v957, 48
      %v1787 = vpop.permute.xlu0 %1786
      %1788 = vrot.lane.b32.xlu0 %v958, 48
      %v1789 = vpop.permute.xlu0 %1788
      %1790 = vrot.lane.b32.xlu0 %v959, 48
      %v1791 = vpop.permute.xlu0 %1790
      %1864 = vrot.lane.b32.xlu0 %v960, 56
      %v1865 = vpop.permute.xlu0 %1864
      %1866 = vrot.lane.b32.xlu0 %v961, 56
      %v1867 = vpop.permute.xlu0 %1866
      %1868 = vrot.lane.b32.xlu0 %v962, 56
      %v1869 = vpop.permute.xlu0 %1868
      %1870 = vrot.lane.b32.xlu0 %v963, 56
      %v1871 = vpop.permute.xlu0 %1870
      %1872 = vrot.lane.b32.xlu0 %v964, 56
      %v1873 = vpop.permute.xlu0 %1872
      %1874 = vrot.lane.b32.xlu0 %v965, 56
      %v1875 = vpop.permute.xlu0 %1874
      %1876 = vrot.lane.b32.xlu0 %v966, 56
      %v1877 = vpop.permute.xlu0 %1876
      %1878 = vrot.lane.b32.xlu0 %v967, 56
      %v1879 = vpop.permute.xlu0 %1878
      %1880 = vrot.lane.b32.xlu0 %v968, 56
      %v1881 = vpop.permute.xlu0 %1880
      %1882 = vrot.lane.b32.xlu0 %v969, 56
      %v1883 = vpop.permute.xlu0 %1882
      %1884 = vrot.lane.b32.xlu0 %v970, 56
      %v1885 = vpop.permute.xlu0 %1884
      %1886 = vrot.lane.b32.xlu0 %v971, 56
      %v1887 = vpop.permute.xlu0 %1886
      %1888 = vrot.lane.b32.xlu0 %v972, 56
      %v1889 = vpop.permute.xlu0 %1888
      %1890 = vrot.lane.b32.xlu0 %v973, 56
      %v1891 = vpop.permute.xlu0 %1890
      %1892 = vrot.lane.b32.xlu0 %v974, 56
      %v1893 = vpop.permute.xlu0 %1892
      %1894 = vrot.lane.b32.xlu0 %v975, 56
      %v1895 = vpop.permute.xlu0 %1894
      %1896 = vrot.lane.b32.xlu0 %v976, 56
      %v1897 = vpop.permute.xlu0 %1896
      %1898 = vrot.lane.b32.xlu0 %v977, 56
      %v1899 = vpop.permute.xlu0 %1898
      %1900 = vrot.lane.b32.xlu0 %v978, 56
      %v1901 = vpop.permute.xlu0 %1900
      %1902 = vrot.lane.b32.xlu0 %v979, 56
      %v1903 = vpop.permute.xlu0 %1902
      %1904 = vrot.lane.b32.xlu0 %v980, 56
      %v1905 = vpop.permute.xlu0 %1904
      %1906 = vrot.lane.b32.xlu0 %v981, 56
      %v1907 = vpop.permute.xlu0 %1906
      %1908 = vrot.lane.b32.xlu0 %v982, 56
      %v1909 = vpop.permute.xlu0 %1908
      %1910 = vrot.lane.b32.xlu0 %v983, 56
      %v1911 = vpop.permute.xlu0 %1910
      %1912 = vrot.lane.b32.xlu0 %v984, 56
      %v1913 = vpop.permute.xlu0 %1912
      %1914 = vrot.lane.b32.xlu0 %v985, 56
      %v1915 = vpop.permute.xlu0 %1914
      %1916 = vrot.lane.b32.xlu0 %v986, 56
      %v1917 = vpop.permute.xlu0 %1916
      %1918 = vrot.lane.b32.xlu0 %v987, 56
      %v1919 = vpop.permute.xlu0 %1918
      %1920 = vrot.lane.b32.xlu0 %v988, 56
      %v1921 = vpop.permute.xlu0 %1920
      %1922 = vrot.lane.b32.xlu0 %v989, 56
      %v1923 = vpop.permute.xlu0 %1922
      %1924 = vrot.lane.b32.xlu0 %v990, 56
      %v1925 = vpop.permute.xlu0 %1924
      %1926 = vrot.lane.b32.xlu0 %v991, 56
      %v1927 = vpop.permute.xlu0 %1926
      %1928 = vrot.lane.b32.xlu0 %v992, 56
      %v1929 = vpop.permute.xlu0 %1928
      %1930 = vrot.lane.b32.xlu0 %v993, 56
      %v1931 = vpop.permute.xlu0 %1930
      %1932 = vrot.lane.b32.xlu0 %v994, 56
      %v1933 = vpop.permute.xlu0 %1932
      %1934 = vrot.lane.b32.xlu0 %v995, 56
      %v1935 = vpop.permute.xlu0 %1934
      %2008 = vrot.lane.b32.xlu0 %v996, 64
      %v2009 = vpop.permute.xlu0 %2008
      %2010 = vrot.lane.b32.xlu0 %v997, 64
      %v2011 = vpop.permute.xlu0 %2010
      %2012 = vrot.lane.b32.xlu0 %v998, 64
      %v2013 = vpop.permute.xlu0 %2012
      %2014 = vrot.lane.b32.xlu0 %v999, 64
      %v2015 = vpop.permute.xlu0 %2014
      %2016 = vrot.lane.b32.xlu0 %v1000, 64
      %v2017 = vpop.permute.xlu0 %2016
      %2018 = vrot.lane.b32.xlu0 %v1001, 64
      %v2019 = vpop.permute.xlu0 %2018
      %2020 = vrot.lane.b32.xlu0 %v1002, 64
      %v2021 = vpop.permute.xlu0 %2020
      %2022 = vrot.lane.b32.xlu0 %v1003, 64
      %v2023 = vpop.permute.xlu0 %2022
      %2024 = vrot.lane.b32.xlu0 %v1004, 64
      %v2025 = vpop.permute.xlu0 %2024
      %2026 = vrot.lane.b32.xlu0 %v1005, 64
      %v2027 = vpop.permute.xlu0 %2026
      %2028 = vrot.lane.b32.xlu0 %v1006, 64
      %v2029 = vpop.permute.xlu0 %2028
      %2030 = vrot.lane.b32.xlu0 %v1007, 64
      %v2031 = vpop.permute.xlu0 %2030
      %2032 = vrot.lane.b32.xlu0 %v1008, 64
      %v2033 = vpop.permute.xlu0 %2032
      %2034 = vrot.lane.b32.xlu0 %v1009, 64
      %v2035 = vpop.permute.xlu0 %2034
      %2036 = vrot.lane.b32.xlu0 %v1010, 64
      %v2037 = vpop.permute.xlu0 %2036
      %2038 = vrot.lane.b32.xlu0 %v1011, 64
      %v2039 = vpop.permute.xlu0 %2038
      %2040 = vrot.lane.b32.xlu0 %v1012, 64
      %v2041 = vpop.permute.xlu0 %2040
      %2042 = vrot.lane.b32.xlu0 %v1013, 64
      %v2043 = vpop.permute.xlu0 %2042
      %2044 = vrot.lane.b32.xlu0 %v1014, 64
      %v2045 = vpop.permute.xlu0 %2044
      %2046 = vrot.lane.b32.xlu0 %v1015, 64
      %v2047 = vpop.permute.xlu0 %2046
      %2048 = vrot.lane.b32.xlu0 %v1016, 64
      %v2049 = vpop.permute.xlu0 %2048
      %2050 = vrot.lane.b32.xlu0 %v1017, 64
      %v2051 = vpop.permute.xlu0 %2050
      %2052 = vrot.lane.b32.xlu0 %v1018, 64
      %v2053 = vpop.permute.xlu0 %2052
      %2054 = vrot.lane.b32.xlu0 %v1019, 64
      %v2055 = vpop.permute.xlu0 %2054
      %2056 = vrot.lane.b32.xlu0 %v1020, 64
      %v2057 = vpop.permute.xlu0 %2056
      %2058 = vrot.lane.b32.xlu0 %v1021, 64
      %v2059 = vpop.permute.xlu0 %2058
      %2060 = vrot.lane.b32.xlu0 %v1022, 64
      %v2061 = vpop.permute.xlu0 %2060
      %2062 = vrot.lane.b32.xlu0 %v1023, 64
      %v2063 = vpop.permute.xlu0 %2062
      %2064 = vrot.lane.b32.xlu0 %v1024, 64
      %v2065 = vpop.permute.xlu0 %2064
      %2066 = vrot.lane.b32.xlu0 %v1025, 64
      %v2067 = vpop.permute.xlu0 %2066
      %2068 = vrot.lane.b32.xlu0 %v1026, 64
      %v2069 = vpop.permute.xlu0 %2068
      %2070 = vrot.lane.b32.xlu0 %v1027, 64
      %v2071 = vpop.permute.xlu0 %2070
      %2072 = vrot.lane.b32.xlu0 %v1028, 64
      %v2073 = vpop.permute.xlu0 %2072
      %2074 = vrot.lane.b32.xlu0 %v1029, 64
      %v2075 = vpop.permute.xlu0 %2074
      %2076 = vrot.lane.b32.xlu0 %v1030, 64
      %v2077 = vpop.permute.xlu0 %2076
      %2078 = vrot.lane.b32.xlu0 %v1031, 64
      %v2079 = vpop.permute.xlu0 %2078
      %v2116 = vsel %vm273, %v776, %v1069
      %v2117 = vsel %vm273, %v777, %v1071
      %v2118 = vsel %vm273, %v778, %v1073
      %v2119 = vsel %vm273, %v779, %v1075
      %v2120 = vsel %vm273, %v780, %v1077
      %v2121 = vsel %vm273, %v781, %v1079
      %v2122 = vsel %vm273, %v782, %v1081
      %v2123 = vsel %vm273, %v783, %v1083
      %v2124 = vsel %vm273, %v784, %v1085
      %v2125 = vsel %vm273, %v785, %v1087
      %v2126 = vsel %vm273, %v786, %v1089
      %v2127 = vsel %vm273, %v787, %v1091
      %v2128 = vsel %vm273, %v788, %v1093
      %v2129 = vsel %vm273, %v789, %v1095
      %v2130 = vsel %vm273, %v790, %v1097
      %v2131 = vsel %vm273, %v791, %v1099
      %v2132 = vsel %vm273, %v792, %v1101
      %v2133 = vsel %vm273, %v793, %v1103
      %v2134 = vsel %vm273, %v794, %v1105
      %v2135 = vsel %vm273, %v795, %v1107
      %v2136 = vsel %vm273, %v796, %v1109
      %v2137 = vsel %vm273, %v797, %v1111
      %v2138 = vsel %vm273, %v798, %v1113
      %v2139 = vsel %vm273, %v799, %v1115
      %v2140 = vsel %vm273, %v800, %v1117
      %v2141 = vsel %vm273, %v801, %v1119
      %v2142 = vsel %vm273, %v802, %v1121
      %v2143 = vsel %vm273, %v803, %v1123
      %v2144 = vsel %vm273, %v804, %v1125
      %v2145 = vsel %vm273, %v805, %v1127
      %v2146 = vsel %vm273, %v806, %v1129
      %v2147 = vsel %vm273, %v807, %v1131
      %v2148 = vsel %vm273, %v808, %v1133
      %v2149 = vsel %vm273, %v809, %v1135
      %v2150 = vsel %vm273, %v810, %v1137
      %v2151 = vsel %vm273, %v811, %v1139
      %vm2152 = vcmask 130048
      %v2153 = vsel %vm2152, %v2116, %v1213
      %v2154 = vsel %vm2152, %v2117, %v1215
      %v2155 = vsel %vm2152, %v2118, %v1217
      %v2156 = vsel %vm2152, %v2119, %v1219
      %v2157 = vsel %vm2152, %v2120, %v1221
      %v2158 = vsel %vm2152, %v2121, %v1223
      %v2159 = vsel %vm2152, %v2122, %v1225
      %v2160 = vsel %vm2152, %v2123, %v1227
      %v2161 = vsel %vm2152, %v2124, %v1229
      %v2162 = vsel %vm2152, %v2125, %v1231
      %v2163 = vsel %vm2152, %v2126, %v1233
      %v2164 = vsel %vm2152, %v2127, %v1235
      %v2165 = vsel %vm2152, %v2128, %v1237
      %v2166 = vsel %vm2152, %v2129, %v1239
      %v2167 = vsel %vm2152, %v2130, %v1241
      %v2168 = vsel %vm2152, %v2131, %v1243
      %v2169 = vsel %vm2152, %v2132, %v1245
      %v2170 = vsel %vm2152, %v2133, %v1247
      %v2171 = vsel %vm2152, %v2134, %v1249
      %v2172 = vsel %vm2152, %v2135, %v1251
      %v2173 = vsel %vm2152, %v2136, %v1253
      %v2174 = vsel %vm2152, %v2137, %v1255
      %v2175 = vsel %vm2152, %v2138, %v1257
      %v2176 = vsel %vm2152, %v2139, %v1259
      %v2177 = vsel %vm2152, %v2140, %v1261
      %v2178 = vsel %vm2152, %v2141, %v1263
      %v2179 = vsel %vm2152, %v2142, %v1265
      %v2180 = vsel %vm2152, %v2143, %v1267
      %v2181 = vsel %vm2152, %v2144, %v1269
      %v2182 = vsel %vm2152, %v2145, %v1271
      %v2183 = vsel %vm2152, %v2146, %v1273
      %v2184 = vsel %vm2152, %v2147, %v1275
      %v2185 = vsel %vm2152, %v2148, %v1277
      %v2186 = vsel %vm2152, %v2149, %v1279
      %v2187 = vsel %vm2152, %v2150, %v1281
      %v2188 = vsel %vm2152, %v2151, %v1283
      %vm2189 = vcmask 195584
      %v2190 = vsel %vm2189, %v2153, %v1323
      %v2191 = vsel %vm2189, %v2154, %v1325
      %v2192 = vsel %vm2189, %v2155, %v1327
      %v2193 = vsel %vm2189, %v2156, %v1329
      %v2194 = vsel %vm2189, %v2157, %v1331
      %v2195 = vsel %vm2189, %v2158, %v1333
      %v2196 = vsel %vm2189, %v2159, %v1335
      %v2197 = vsel %vm2189, %v2160, %v1337
      %v2198 = vsel %vm2189, %v2161, %v1339
      %v2199 = vsel %vm2189, %v2162, %v1341
      %v2200 = vsel %vm2189, %v2163, %v1343
      %v2201 = vsel %vm2189, %v2164, %v1345
      %v2202 = vsel %vm2189, %v2165, %v1347
      %v2203 = vsel %vm2189, %v2166, %v1349
      %v2204 = vsel %vm2189, %v2167, %v1351
      %v2205 = vsel %vm2189, %v2168, %v1353
      %v2206 = vsel %vm2189, %v2169, %v1355
      %v2207 = vsel %vm2189, %v2170, %v1357
      %v2208 = vsel %vm2189, %v2171, %v1359
      %v2209 = vsel %vm2189, %v2172, %v1361
      %v2210 = vsel %vm2189, %v2173, %v1363
      %v2211 = vsel %vm2189, %v2174, %v1365
      %v2212 = vsel %vm2189, %v2175, %v1367
      %v2213 = vsel %vm2189, %v2176, %v1369
      %v2214 = vsel %vm2189, %v2177, %v1371
      %v2215 = vsel %vm2189, %v2178, %v1373
      %v2216 = vsel %vm2189, %v2179, %v1375
      %v2217 = vsel %vm2189, %v2180, %v1377
      %v2218 = vsel %vm2189, %v2181, %v1379
      %v2219 = vsel %vm2189, %v2182, %v1381
      %v2220 = vsel %vm2189, %v2183, %v1383
      %v2221 = vsel %vm2189, %v2184, %v1385
      %v2222 = vsel %vm2189, %v2185, %v1387
      %v2223 = vsel %vm2189, %v2186, %v1389
      %v2224 = vsel %vm2189, %v2187, %v1391
      %v2225 = vsel %vm2189, %v2188, %v1393
      %vm2226 = vcmask 261120
      %v2227 = vsel %vm2226, %v2190, %v1467
      %v2228 = vsel %vm2226, %v2191, %v1469
      %v2229 = vsel %vm2226, %v2192, %v1471
      %v2230 = vsel %vm2226, %v2193, %v1473
      %v2231 = vsel %vm2226, %v2194, %v1475
      %v2232 = vsel %vm2226, %v2195, %v1477
      %v2233 = vsel %vm2226, %v2196, %v1479
      %v2234 = vsel %vm2226, %v2197, %v1481
      %v2235 = vsel %vm2226, %v2198, %v1483
      %v2236 = vsel %vm2226, %v2199, %v1485
      %v2237 = vsel %vm2226, %v2200, %v1487
      %v2238 = vsel %vm2226, %v2201, %v1489
      %v2239 = vsel %vm2226, %v2202, %v1491
      %v2240 = vsel %vm2226, %v2203, %v1493
      %v2241 = vsel %vm2226, %v2204, %v1495
      %v2242 = vsel %vm2226, %v2205, %v1497
      %v2243 = vsel %vm2226, %v2206, %v1499
      %v2244 = vsel %vm2226, %v2207, %v1501
      %v2245 = vsel %vm2226, %v2208, %v1503
      %v2246 = vsel %vm2226, %v2209, %v1505
      %v2247 = vsel %vm2226, %v2210, %v1507
      %v2248 = vsel %vm2226, %v2211, %v1509
      %v2249 = vsel %vm2226, %v2212, %v1511
      %v2250 = vsel %vm2226, %v2213, %v1513
      %v2251 = vsel %vm2226, %v2214, %v1515
      %v2252 = vsel %vm2226, %v2215, %v1517
      %v2253 = vsel %vm2226, %v2216, %v1519
      %v2254 = vsel %vm2226, %v2217, %v1521
      %v2255 = vsel %vm2226, %v2218, %v1523
      %v2256 = vsel %vm2226, %v2219, %v1525
      %v2257 = vsel %vm2226, %v2220, %v1527
      %v2258 = vsel %vm2226, %v2221, %v1529
      %v2259 = vsel %vm2226, %v2222, %v1531
      %v2260 = vsel %vm2226, %v2223, %v1533
      %v2261 = vsel %vm2226, %v2224, %v1535
      %v2262 = vsel %vm2226, %v2225, %v1537
      %vm2263 = vcmask 326656
      %v2264 = vsel %vm2263, %v2227, %v1611
      %v2265 = vsel %vm2263, %v2228, %v1613
      %v2266 = vsel %vm2263, %v2229, %v1615
      %v2267 = vsel %vm2263, %v2230, %v1617
      %v2268 = vsel %vm2263, %v2231, %v1619
      %v2269 = vsel %vm2263, %v2232, %v1621
      %v2270 = vsel %vm2263, %v2233, %v1623
      %v2271 = vsel %vm2263, %v2234, %v1625
      %v2272 = vsel %vm2263, %v2235, %v1627
      %v2273 = vsel %vm2263, %v2236, %v1629
      %v2274 = vsel %vm2263, %v2237, %v1631
      %v2275 = vsel %vm2263, %v2238, %v1633
      %v2276 = vsel %vm2263, %v2239, %v1635
      %v2277 = vsel %vm2263, %v2240, %v1637
      %v2278 = vsel %vm2263, %v2241, %v1639
      %v2279 = vsel %vm2263, %v2242, %v1641
      %v2280 = vsel %vm2263, %v2243, %v1643
      %v2281 = vsel %vm2263, %v2244, %v1645
      %v2282 = vsel %vm2263, %v2245, %v1647
      %v2283 = vsel %vm2263, %v2246, %v1649
      %v2284 = vsel %vm2263, %v2247, %v1651
      %v2285 = vsel %vm2263, %v2248, %v1653
      %v2286 = vsel %vm2263, %v2249, %v1655
      %v2287 = vsel %vm2263, %v2250, %v1657
      %v2288 = vsel %vm2263, %v2251, %v1659
      %v2289 = vsel %vm2263, %v2252, %v1661
      %v2290 = vsel %vm2263, %v2253, %v1663
      %v2291 = vsel %vm2263, %v2254, %v1665
      %v2292 = vsel %vm2263, %v2255, %v1667
      %v2293 = vsel %vm2263, %v2256, %v1669
      %v2294 = vsel %vm2263, %v2257, %v1671
      %v2295 = vsel %vm2263, %v2258, %v1673
      %v2296 = vsel %vm2263, %v2259, %v1675
      %v2297 = vsel %vm2263, %v2260, %v1677
      %v2298 = vsel %vm2263, %v2261, %v1679
      %v2299 = vsel %vm2263, %v2262, %v1681
      %vm2300 = vcmask 392192
      %v2301 = vsel %vm2300, %v2264, %v1721
      %v2302 = vsel %vm2300, %v2265, %v1723
      %v2303 = vsel %vm2300, %v2266, %v1725
      %v2304 = vsel %vm2300, %v2267, %v1727
      %v2305 = vsel %vm2300, %v2268, %v1729
      %v2306 = vsel %vm2300, %v2269, %v1731
      %v2307 = vsel %vm2300, %v2270, %v1733
      %v2308 = vsel %vm2300, %v2271, %v1735
      %v2309 = vsel %vm2300, %v2272, %v1737
      %v2310 = vsel %vm2300, %v2273, %v1739
      %v2311 = vsel %vm2300, %v2274, %v1741
      %v2312 = vsel %vm2300, %v2275, %v1743
      %v2313 = vsel %vm2300, %v2276, %v1745
      %v2314 = vsel %vm2300, %v2277, %v1747
      %v2315 = vsel %vm2300, %v2278, %v1749
      %v2316 = vsel %vm2300, %v2279, %v1751
      %v2317 = vsel %vm2300, %v2280, %v1753
      %v2318 = vsel %vm2300, %v2281, %v1755
      %v2319 = vsel %vm2300, %v2282, %v1757
      %v2320 = vsel %vm2300, %v2283, %v1759
      %v2321 = vsel %vm2300, %v2284, %v1761
      %v2322 = vsel %vm2300, %v2285, %v1763
      %v2323 = vsel %vm2300, %v2286, %v1765
      %v2324 = vsel %vm2300, %v2287, %v1767
      %v2325 = vsel %vm2300, %v2288, %v1769
      %v2326 = vsel %vm2300, %v2289, %v1771
      %v2327 = vsel %vm2300, %v2290, %v1773
      %v2328 = vsel %vm2300, %v2291, %v1775
      %v2329 = vsel %vm2300, %v2292, %v1777
      %v2330 = vsel %vm2300, %v2293, %v1779
      %v2331 = vsel %vm2300, %v2294, %v1781
      %v2332 = vsel %vm2300, %v2295, %v1783
      %v2333 = vsel %vm2300, %v2296, %v1785
      %v2334 = vsel %vm2300, %v2297, %v1787
      %v2335 = vsel %vm2300, %v2298, %v1789
      %v2336 = vsel %vm2300, %v2299, %v1791
      %vm2337 = vcmask 457728
      %v2338 = vsel %vm2337, %v2301, %v1865
      %v2339 = vsel %vm2337, %v2302, %v1867
      %v2340 = vsel %vm2337, %v2303, %v1869
      %v2341 = vsel %vm2337, %v2304, %v1871
      %v2342 = vsel %vm2337, %v2305, %v1873
      %v2343 = vsel %vm2337, %v2306, %v1875
      %v2344 = vsel %vm2337, %v2307, %v1877
      %v2345 = vsel %vm2337, %v2308, %v1879
      %v2346 = vsel %vm2337, %v2309, %v1881
      %v2347 = vsel %vm2337, %v2310, %v1883
      %v2348 = vsel %vm2337, %v2311, %v1885
      %v2349 = vsel %vm2337, %v2312, %v1887
      %v2350 = vsel %vm2337, %v2313, %v1889
      %v2351 = vsel %vm2337, %v2314, %v1891
      %v2352 = vsel %vm2337, %v2315, %v1893
      %v2353 = vsel %vm2337, %v2316, %v1895
      %v2354 = vsel %vm2337, %v2317, %v1897
      %v2355 = vsel %vm2337, %v2318, %v1899
      %v2356 = vsel %vm2337, %v2319, %v1901
      %v2357 = vsel %vm2337, %v2320, %v1903
      %v2358 = vsel %vm2337, %v2321, %v1905
      %v2359 = vsel %vm2337, %v2322, %v1907
      %v2360 = vsel %vm2337, %v2323, %v1909
      %v2361 = vsel %vm2337, %v2324, %v1911
      %v2362 = vsel %vm2337, %v2325, %v1913
      %v2363 = vsel %vm2337, %v2326, %v1915
      %v2364 = vsel %vm2337, %v2327, %v1917
      %v2365 = vsel %vm2337, %v2328, %v1919
      %v2366 = vsel %vm2337, %v2329, %v1921
      %v2367 = vsel %vm2337, %v2330, %v1923
      %v2368 = vsel %vm2337, %v2331, %v1925
      %v2369 = vsel %vm2337, %v2332, %v1927
      %v2370 = vsel %vm2337, %v2333, %v1929
      %v2371 = vsel %vm2337, %v2334, %v1931
      %v2372 = vsel %vm2337, %v2335, %v1933
      %v2373 = vsel %vm2337, %v2336, %v1935
      %vm2374 = vcmask 523264
      %v2375 = vsel %vm2374, %v2338, %v2009
      %v2376 = vsel %vm2374, %v2339, %v2011
      %v2377 = vsel %vm2374, %v2340, %v2013
      %v2378 = vsel %vm2374, %v2341, %v2015
      %v2379 = vsel %vm2374, %v2342, %v2017
      %v2380 = vsel %vm2374, %v2343, %v2019
      %v2381 = vsel %vm2374, %v2344, %v2021
      %v2382 = vsel %vm2374, %v2345, %v2023
      %v2383 = vsel %vm2374, %v2346, %v2025
      %v2384 = vsel %vm2374, %v2347, %v2027
      %v2385 = vsel %vm2374, %v2348, %v2029
      %v2386 = vsel %vm2374, %v2349, %v2031
      %v2387 = vsel %vm2374, %v2350, %v2033
      %v2388 = vsel %vm2374, %v2351, %v2035
      %v2389 = vsel %vm2374, %v2352, %v2037
      %v2390 = vsel %vm2374, %v2353, %v2039
      %v2391 = vsel %vm2374, %v2354, %v2041
      %v2392 = vsel %vm2374, %v2355, %v2043
      %v2393 = vsel %vm2374, %v2356, %v2045
      %v2394 = vsel %vm2374, %v2357, %v2047
      %v2395 = vsel %vm2374, %v2358, %v2049
      %v2396 = vsel %vm2374, %v2359, %v2051
      %v2397 = vsel %vm2374, %v2360, %v2053
      %v2398 = vsel %vm2374, %v2361, %v2055
      %v2399 = vsel %vm2374, %v2362, %v2057
      %v2400 = vsel %vm2374, %v2363, %v2059
      %v2401 = vsel %vm2374, %v2364, %v2061
      %v2402 = vsel %vm2374, %v2365, %v2063
      %v2403 = vsel %vm2374, %v2366, %v2065
      %v2404 = vsel %vm2374, %v2367, %v2067
      %v2405 = vsel %vm2374, %v2368, %v2069
      %v2406 = vsel %vm2374, %v2369, %v2071
      %v2407 = vsel %vm2374, %v2370, %v2073
      %v2408 = vsel %vm2374, %v2371, %v2075
      %v2409 = vsel %vm2374, %v2372, %v2077
      %v2410 = vsel %vm2374, %v2373, %v2079
      %v2411 = vpack.c.bf16 %v2376, %v2375
      %v2412 = vpack.c.bf16 %v2378, %v2377
      %v2413 = vpack.c.bf16 %v2380, %v2379
      %v2414 = vpack.c.bf16 %v2382, %v2381
      %v2415 = vpack.c.bf16 %v2384, %v2383
      %v2416 = vpack.c.bf16 %v2386, %v2385
      %v2417 = vpack.c.bf16 %v2388, %v2387
      %v2418 = vpack.c.bf16 %v2390, %v2389
      %v2419 = vpack.c.bf16 %v2392, %v2391
      %v2420 = vpack.c.bf16 %v2394, %v2393
      %v2421 = vpack.c.bf16 %v2396, %v2395
      %v2422 = vpack.c.bf16 %v2398, %v2397
      %v2423 = vpack.c.bf16 %v2400, %v2399
      %v2424 = vpack.c.bf16 %v2402, %v2401
      %v2425 = vpack.c.bf16 %v2404, %v2403
      %v2426 = vpack.c.bf16 %v2406, %v2405
      %v2427 = vpack.c.bf16 %v2408, %v2407
      %v2428 = vpack.c.bf16 %v2410, %v2409
      %v2429 = vld [vmem:[%s2] sm:$0xf]
      %v2430 = vld [vmem:[%s2 + $0x4] sm:$0xf]
      %v2431 = vld [vmem:[%s2 + $0x8] sm:$0xf]
      %v2432 = vld [vmem:[%s2 + $0xc] sm:$0xf]
      %v2433 = vld [vmem:[%s2 + $0x10] sm:$0xf]
      %v2434 = vld [vmem:[%s2 + $0x14] sm:$0xf]
      %v2435 = vld [vmem:[%s2 + $0x18] sm:$0xf]
      %v2436 = vld [vmem:[%s2 + $0x1c] sm:$0xf]
      %v2437 = vld [vmem:[%s2 + $0x20] sm:$0xf]
      %v2438 = vld [vmem:[%s3] sm:$0x1]
      %v2440 = vlaneseq
      %v2441 = vshrl.u32 %v2440, 7
      %v2442 = vsub.s32 0, %v2441
      %v2443 = vrot.slane %v2438, %v2442
      %v2454 = vunpack.c.l.b16 %v2429
      %v2455 = vunpack.c.l.b16 %v2430
      %v2456 = vunpack.c.l.b16 %v2431
      %v2457 = vunpack.c.l.b16 %v2432
      %v2458 = vunpack.c.l.b16 %v2433
      %v2459 = vunpack.c.l.b16 %v2434
      %v2460 = vunpack.c.l.b16 %v2435
      %v2461 = vunpack.c.l.b16 %v2436
      %v2462 = vunpack.c.l.b16 %v2437
      %v2463 = vpack.c.b16 %v2455, %v2454
      %v2464 = vpack.c.b16 %v2457, %v2456
      %v2465 = vpack.c.b16 %v2459, %v2458
      %v2466 = vpack.c.b16 %v2461, %v2460
      %v2467 = vpack.c.b16 %v2462, %v2462
      %vm2472 = vcmask 588800
      %v2474 = vsel %vm2472, %v2411, 0
      %v2477 = vsel %vm2472, %v2412, 0
      %v2480 = vsel %vm2472, %v2413, 0
      %v2483 = vsel %vm2472, %v2414, 0
      %v2486 = vsel %vm2472, %v2415, 0
      %v2489 = vsel %vm2472, %v2416, 0
      %v2492 = vsel %vm2472, %v2417, 0
      %v2495 = vsel %vm2472, %v2418, 0
      %v2498 = vsel %vm2472, %v2419, 0
      %v2501 = vsel %vm2472, %v2420, 0
      %v2504 = vsel %vm2472, %v2421, 0
      %v2507 = vsel %vm2472, %v2422, 0
      %v2510 = vsel %vm2472, %v2423, 0
      %v2513 = vsel %vm2472, %v2424, 0
      %v2516 = vsel %vm2472, %v2425, 0
      %v2519 = vsel %vm2472, %v2426, 0
      %v2522 = vsel %vm2472, %v2427, 0
      %v2525 = vsel %vm2472, %v2428, 0
      %vm2527 = vcmask 1043456
      %v2529 = vsel %vm2527, %v2467, 0
      %2531 = vmatprep.subr.bf16.mxu0 0
      %2532 = vmatpush1.bf16.msra.mxu0 0
      %2533 = vmatprep.subr.bf16.mxu0 0
      %2534 = vmatpush1.bf16.msra.mxu0 0
      %2535 = vmatprep.subr.bf16.mxu0 0
      %2536 = vmatpush1.bf16.msra.mxu0 0
      %2537 = vmatprep.subr.bf16.mxu0 0
      %2538 = vmatpush1.bf16.msra.mxu0 %v2529
      %2539 = vmatprep.subr.bf16.mxu0 0
      %2540 = vmatpush1.bf16.msra.mxu0 %v2466
      %2541 = vmatprep.subr.bf16.mxu0 0
      %2542 = vmatpush1.bf16.msra.mxu0 %v2465
      %2543 = vmatprep.subr.bf16.mxu0 0
      %2544 = vmatpush1.bf16.msra.mxu0 %v2464
      %2545 = vmatprep.subr.bf16.mxu0 0
      %2546 = vmatpush1.bf16.msra.mxu0 %v2463
      %2547 = vmatprep.subr.bf16.mxu0 0
      %2548 = vmatpush2.bf16.msra.mxu0 0
      %2549 = vmatprep.subr.bf16.mxu0 0
      %2550 = vmatpush2.bf16.msra.mxu0 0
      %2551 = vmatprep.subr.bf16.mxu0 0
      %2552 = vmatpush2.bf16.msra.mxu0 0
      %2553 = vmatprep.subr.bf16.mxu0 0
      %2554 = vmatpush2.bf16.msra.mxu0 0
      %2555 = vmatprep.subr.bf16.mxu0 0
      %2556 = vmatpush2.bf16.msra.mxu0 0
      %2557 = vmatprep.subr.bf16.mxu0 0
      %2558 = vmatpush2.bf16.msra.mxu0 0
      %2559 = vmatprep.subr.bf16.mxu0 0
      %2560 = vmatpush2.bf16.msra.mxu0 0
      %2561 = vmatprep.subr.bf16.mxu0 0
      %2562 = vmatpush2.bf16.msra.mxu0 0
      %2563 = vmatprep.mubr.bf16.mxu0 0
      %2564 = vmatmul.mubr.bf16.gmra.mxu0 %v2474
      %v2565 = vpop.f32.mrf.mxu0
      %v2566 = vadd.f32 %v2443, %v2565
      %v2567 = vpop.f32.mrf.mxu0
      %v2568 = vpop.f32.mrf.mxu0
      %v2569 = vadd.f32 %v2443, %v2568
      %v2570 = vpop.f32.mrf.mxu0
      %2571 = vmatprep.mubr.bf16.mxu0 0
      %2572 = vmatmul.mubr.bf16.gmra.mxu0 %v2477
      %v2573 = vpop.f32.mrf.mxu0
      %v2574 = vadd.f32 %v2443, %v2573
      %v2575 = vpop.f32.mrf.mxu0
      %v2576 = vpop.f32.mrf.mxu0
      %v2577 = vadd.f32 %v2443, %v2576
      %v2578 = vpop.f32.mrf.mxu0
      %2579 = vmatprep.mubr.bf16.mxu0 0
      %2580 = vmatmul.mubr.bf16.gmra.mxu0 %v2480
      %v2581 = vpop.f32.mrf.mxu0
      %v2582 = vadd.f32 %v2443, %v2581
      %v2583 = vpop.f32.mrf.mxu0
      %v2584 = vpop.f32.mrf.mxu0
      %v2585 = vadd.f32 %v2443, %v2584
      %v2586 = vpop.f32.mrf.mxu0
      %2587 = vmatprep.mubr.bf16.mxu0 0
      %2588 = vmatmul.mubr.bf16.gmra.mxu0 %v2483
      %v2589 = vpop.f32.mrf.mxu0
      %v2590 = vadd.f32 %v2443, %v2589
      %v2591 = vpop.f32.mrf.mxu0
      %v2592 = vpop.f32.mrf.mxu0
      %v2593 = vadd.f32 %v2443, %v2592
      %v2594 = vpop.f32.mrf.mxu0
      %2595 = vmatprep.mubr.bf16.mxu0 0
      %2596 = vmatmul.mubr.bf16.gmra.mxu0 %v2486
      %v2597 = vpop.f32.mrf.mxu0
      %v2598 = vadd.f32 %v2443, %v2597
      %v2599 = vpop.f32.mrf.mxu0
      %v2600 = vpop.f32.mrf.mxu0
      %v2601 = vadd.f32 %v2443, %v2600
      %v2602 = vpop.f32.mrf.mxu0
      %2603 = vmatprep.mubr.bf16.mxu0 0
      %2604 = vmatmul.mubr.bf16.gmra.mxu0 %v2489
      %v2605 = vpop.f32.mrf.mxu0
      %v2606 = vadd.f32 %v2443, %v2605
      %v2607 = vpop.f32.mrf.mxu0
      %v2608 = vpop.f32.mrf.mxu0
      %v2609 = vadd.f32 %v2443, %v2608
      %v2610 = vpop.f32.mrf.mxu0
      %2611 = vmatprep.mubr.bf16.mxu0 0
      %2612 = vmatmul.mubr.bf16.gmra.mxu0 %v2492
      %v2613 = vpop.f32.mrf.mxu0
      %v2614 = vadd.f32 %v2443, %v2613
      %v2615 = vpop.f32.mrf.mxu0
      %v2616 = vpop.f32.mrf.mxu0
      %v2617 = vadd.f32 %v2443, %v2616
      %v2618 = vpop.f32.mrf.mxu0
      %2619 = vmatprep.mubr.bf16.mxu0 0
      %2620 = vmatmul.mubr.bf16.gmra.mxu0 %v2495
      %v2621 = vpop.f32.mrf.mxu0
      %v2622 = vadd.f32 %v2443, %v2621
      %v2623 = vpop.f32.mrf.mxu0
      %v2624 = vpop.f32.mrf.mxu0
      %v2625 = vadd.f32 %v2443, %v2624
      %v2626 = vpop.f32.mrf.mxu0
      %2627 = vmatprep.mubr.bf16.mxu0 0
      %2628 = vmatmul.mubr.bf16.gmra.mxu0 %v2498
      %v2629 = vpop.f32.mrf.mxu0
      %v2630 = vadd.f32 %v2443, %v2629
      %v2631 = vpop.f32.mrf.mxu0
      %v2632 = vpop.f32.mrf.mxu0
      %v2633 = vadd.f32 %v2443, %v2632
      %v2634 = vpop.f32.mrf.mxu0
      %2635 = vmatprep.mubr.bf16.mxu0 0
      %2636 = vmatmul.mubr.bf16.gmra.mxu0 %v2501
      %v2637 = vpop.f32.mrf.mxu0
      %v2638 = vadd.f32 %v2443, %v2637
      %v2639 = vpop.f32.mrf.mxu0
      %v2640 = vpop.f32.mrf.mxu0
      %v2641 = vadd.f32 %v2443, %v2640
      %v2642 = vpop.f32.mrf.mxu0
      %2643 = vmatprep.mubr.bf16.mxu0 0
      %2644 = vmatmul.mubr.bf16.gmra.mxu0 %v2504
      %v2645 = vpop.f32.mrf.mxu0
      %v2646 = vadd.f32 %v2443, %v2645
      %v2647 = vpop.f32.mrf.mxu0
      %v2648 = vpop.f32.mrf.mxu0
      %v2649 = vadd.f32 %v2443, %v2648
      %v2650 = vpop.f32.mrf.mxu0
      %2651 = vmatprep.mubr.bf16.mxu0 0
      %2652 = vmatmul.mubr.bf16.gmra.mxu0 %v2507
      %v2653 = vpop.f32.mrf.mxu0
      %v2654 = vadd.f32 %v2443, %v2653
      %v2655 = vpop.f32.mrf.mxu0
      %v2656 = vpop.f32.mrf.mxu0
      %v2657 = vadd.f32 %v2443, %v2656
      %v2658 = vpop.f32.mrf.mxu0
      %2659 = vmatprep.mubr.bf16.mxu0 0
      %2660 = vmatmul.mubr.bf16.gmra.mxu0 %v2510
      %v2661 = vpop.f32.mrf.mxu0
      %v2662 = vadd.f32 %v2443, %v2661
      %v2663 = vpop.f32.mrf.mxu0
      %v2664 = vpop.f32.mrf.mxu0
      %v2665 = vadd.f32 %v2443, %v2664
      %v2666 = vpop.f32.mrf.mxu0
      %2667 = vmatprep.mubr.bf16.mxu0 0
      %2668 = vmatmul.mubr.bf16.gmra.mxu0 %v2513
      %v2669 = vpop.f32.mrf.mxu0
      %v2670 = vadd.f32 %v2443, %v2669
      %v2671 = vpop.f32.mrf.mxu0
      %v2672 = vpop.f32.mrf.mxu0
      %v2673 = vadd.f32 %v2443, %v2672
      %v2674 = vpop.f32.mrf.mxu0
      %2675 = vmatprep.mubr.bf16.mxu0 0
      %2676 = vmatmul.mubr.bf16.gmra.mxu0 %v2516
      %v2677 = vpop.f32.mrf.mxu0
      %v2678 = vadd.f32 %v2443, %v2677
      %v2679 = vpop.f32.mrf.mxu0
      %v2680 = vpop.f32.mrf.mxu0
      %v2681 = vadd.f32 %v2443, %v2680
      %v2682 = vpop.f32.mrf.mxu0
      %2683 = vmatprep.mubr.bf16.mxu0 0
      %2684 = vmatmul.mubr.bf16.gmra.mxu0 %v2519
      %v2685 = vpop.f32.mrf.mxu0
      %v2686 = vadd.f32 %v2443, %v2685
      %v2687 = vpop.f32.mrf.mxu0
      %v2688 = vpop.f32.mrf.mxu0
      %v2689 = vadd.f32 %v2443, %v2688
      %v2690 = vpop.f32.mrf.mxu0
      %2691 = vmatprep.mubr.bf16.mxu0 0
      %2692 = vmatmul.mubr.bf16.gmra.mxu0 %v2522
      %v2693 = vpop.f32.mrf.mxu0
      %v2694 = vadd.f32 %v2443, %v2693
      %v2695 = vpop.f32.mrf.mxu0
      %v2696 = vpop.f32.mrf.mxu0
      %v2697 = vadd.f32 %v2443, %v2696
      %v2698 = vpop.f32.mrf.mxu0
      %2699 = vmatprep.mubr.bf16.mxu0 0
      %2700 = vmatmul.mubr.bf16.gmra.mxu0 %v2525
      %v2701 = vpop.f32.mrf.mxu0
      %v2702 = vadd.f32 %v2443, %v2701
      %v2703 = vpop.f32.mrf.mxu0
      %v2704 = vpop.f32.mrf.mxu0
      %v2705 = vadd.f32 %v2443, %v2704
      %v2706 = vpop.f32.mrf.mxu0
      %2707 = vdwg.mxu0
      %v2708 = vmax.f32 %v2566, 0.0
      %v2709 = vmax.f32 %v2569, 0.0
      %v2710 = vmax.f32 %v2574, 0.0
      %v2711 = vmax.f32 %v2577, 0.0
      %v2712 = vmax.f32 %v2582, 0.0
      %v2713 = vmax.f32 %v2585, 0.0
      %v2714 = vmax.f32 %v2590, 0.0
      %v2715 = vmax.f32 %v2593, 0.0
      %v2716 = vmax.f32 %v2598, 0.0
      %v2717 = vmax.f32 %v2601, 0.0
      %v2718 = vmax.f32 %v2606, 0.0
      %v2719 = vmax.f32 %v2609, 0.0
      %v2720 = vmax.f32 %v2614, 0.0
      %v2721 = vmax.f32 %v2617, 0.0
      %v2722 = vmax.f32 %v2622, 0.0
      %v2723 = vmax.f32 %v2625, 0.0
      %v2724 = vmax.f32 %v2630, 0.0
      %v2725 = vmax.f32 %v2633, 0.0
      %v2726 = vmax.f32 %v2638, 0.0
      %v2727 = vmax.f32 %v2641, 0.0
      %v2728 = vmax.f32 %v2646, 0.0
      %v2729 = vmax.f32 %v2649, 0.0
      %v2730 = vmax.f32 %v2654, 0.0
      %v2731 = vmax.f32 %v2657, 0.0
      %v2732 = vmax.f32 %v2662, 0.0
      %v2733 = vmax.f32 %v2665, 0.0
      %v2734 = vmax.f32 %v2670, 0.0
      %v2735 = vmax.f32 %v2673, 0.0
      %v2736 = vmax.f32 %v2678, 0.0
      %v2737 = vmax.f32 %v2681, 0.0
      %v2738 = vmax.f32 %v2686, 0.0
      %v2739 = vmax.f32 %v2689, 0.0
      %v2740 = vmax.f32 %v2694, 0.0
      %v2741 = vmax.f32 %v2697, 0.0
      %v2742 = vmax.f32 %v2702, 0.0
      %v2743 = vmax.f32 %v2705, 0.0
      %2744 = vst.msk [vmem:[#allocation3 + $0x13] sm:$0xff] %vm273, %v2708
      %2745 = vst.msk [vmem:[#allocation3 + $0x1b] sm:$0xff] %vm273, %v2709
      %vm2746 = vcmask 64514
      %2747 = vst.msk [vmem:[#allocation3 + $0x23] sm:$0xfc] %vm2746, %v2710
      %2748 = vst.msk [vmem:[#allocation3 + $0x2b] sm:$0xff] %vm273, %v2711
      %vm2749 = vcmask 58368
      %2750 = vst.msk [vmem:[#allocation3 + $0x33] sm:$0x3] %vm2749, %v2712
      %vm2751 = vcmask 64516
      %2752 = vst.msk [vmem:[#allocation3 + $0x33] sm:$0xf0] %vm2751, %v2712
      %2753 = vst.msk [vmem:[#allocation3 + $0x3b] sm:$0xff] %vm273, %v2713
      %vm2754 = vcmask 60416
      %2755 = vst.msk [vmem:[#allocation3 + $0x43] sm:$0xf] %vm2754, %v2714
      %vm2756 = vcmask 64518
      %2757 = vst.msk [vmem:[#allocation3 + $0x43] sm:$0xc0] %vm2756, %v2714
      %2758 = vst.msk [vmem:[#allocation3 + $0x4b] sm:$0xff] %vm273, %v2715
      %2759 = vst.msk [vmem:[#allocation3 + $0x53] sm:$0x3f] %vm316, %v2716
      %2760 = vst.msk [vmem:[#allocation3 + $0x5b] sm:$0xff] %vm273, %v2717
      %2761 = vst.msk [vmem:[#allocation3 + $0x63] sm:$0xff] %vm273, %v2718
      %2762 = vst.msk [vmem:[#allocation3 + $0x6b] sm:$0xfc] %vm2746, %v2719
      %2763 = vst.msk [vmem:[#allocation3 + $0x73] sm:$0xff] %vm273, %v2720
      %2764 = vst.msk [vmem:[#allocation3 + $0x7b] sm:$0x3] %vm2749, %v2721
      %2765 = vst.msk [vmem:[#allocation3 + $0x7b] sm:$0xf0] %vm2751, %v2721
      %2766 = vst.msk [vmem:[#allocation3 + $0x83] sm:$0xff] %vm273, %v2722
      %2767 = vst.msk [vmem:[#allocation3 + $0x8b] sm:$0xf] %vm2754, %v2723
      %2768 = vst.msk [vmem:[#allocation3 + $0x8b] sm:$0xc0] %vm2756, %v2723
      %2769 = vst.msk [vmem:[#allocation3 + $0x93] sm:$0xff] %vm273, %v2724
      %2770 = vst.msk [vmem:[#allocation3 + $0x9b] sm:$0x3f] %vm316, %v2725
      %2771 = vst.msk [vmem:[#allocation3 + $0xa3] sm:$0xff] %vm273, %v2726
      %2772 = vst.msk [vmem:[#allocation3 + $0xab] sm:$0xff] %vm273, %v2727
      %2773 = vst.msk [vmem:[#allocation3 + $0xb3] sm:$0xfc] %vm2746, %v2728
      %2774 = vst.msk [vmem:[#allocation3 + $0xbb] sm:$0xff] %vm273, %v2729
      %2775 = vst.msk [vmem:[#allocation3 + $0xc3] sm:$0x3] %vm2749, %v2730
      %2776 = vst.msk [vmem:[#allocation3 + $0xc3] sm:$0xf0] %vm2751, %v2730
      %2777 = vst.msk [vmem:[#allocation3 + $0xcb] sm:$0xff] %vm273, %v2731
      %2778 = vst.msk [vmem:[#allocation3 + $0xd3] sm:$0xf] %vm2754, %v2732
      %2779 = vst.msk [vmem:[#allocation3 + $0xd3] sm:$0xc0] %vm2756, %v2732
      %2780 = vst.msk [vmem:[#allocation3 + $0xdb] sm:$0xff] %vm273, %v2733
      %2781 = vst.msk [vmem:[#allocation3 + $0xe3] sm:$0x3f] %vm316, %v2734
      %2782 = vst.msk [vmem:[#allocation3 + $0xeb] sm:$0xff] %vm273, %v2735
      %2783 = vst.msk [vmem:[#allocation3 + $0xf3] sm:$0xff] %vm273, %v2736
      %2784 = vst.msk [vmem:[#allocation3 + $0xfb] sm:$0xfc] %vm2746, %v2737
      %2785 = vst.msk [vmem:[#allocation3 + $0x103] sm:$0xff] %vm273, %v2738
      %2786 = vst.msk [vmem:[#allocation3 + $0x10b] sm:$0x3] %vm2749, %v2739
      %2787 = vst.msk [vmem:[#allocation3 + $0x10b] sm:$0xf0] %vm2751, %v2739
      %2788 = vst.msk [vmem:[#allocation3 + $0x113] sm:$0xff] %vm273, %v2740
      %2789 = vst.msk [vmem:[#allocation3 + $0x11b] sm:$0xf] %vm2754, %v2741
      %2790 = vst.msk [vmem:[#allocation3 + $0x11b] sm:$0xc0] %vm2756, %v2741
      %2791 = vst.msk [vmem:[#allocation3 + $0x123] sm:$0xff] %vm273, %v2742
      %2792 = vst.msk [vmem:[#allocation3 + $0x12b] sm:$0x3f] %vm316, %v2743
      %v2793 = vld [vmem:[#allocation3] sm:$0xff]
      %v2794 = vld [vmem:[#allocation3 + $0x8] sm:$0xff]
      %v2795 = vld [vmem:[#allocation3 + $0x10] sm:$0xff]
      %v2796 = vld [vmem:[#allocation3 + $0x18] sm:$0xff]
      %v2797 = vld [vmem:[#allocation3 + $0x20] sm:$0xff]
      %v2798 = vld [vmem:[#allocation3 + $0x28] sm:$0xff]
      %v2799 = vld [vmem:[#allocation3 + $0x30] sm:$0xff]
      %v2800 = vld [vmem:[#allocation3 + $0x38] sm:$0xff]
      %v2801 = vld [vmem:[#allocation3 + $0x40] sm:$0xff]
      %v2802 = vld [vmem:[#allocation3 + $0x48] sm:$0xff]
      %v2803 = vld [vmem:[#allocation3 + $0x50] sm:$0xff]
      %v2804 = vld [vmem:[#allocation3 + $0x58] sm:$0xff]
      %v2805 = vld [vmem:[#allocation3 + $0x60] sm:$0xff]
      %v2806 = vld [vmem:[#allocation3 + $0x68] sm:$0xff]
      %v2807 = vld [vmem:[#allocation3 + $0x70] sm:$0xff]
      %v2808 = vld [vmem:[#allocation3 + $0x78] sm:$0xff]
      %v2809 = vld [vmem:[#allocation3 + $0x80] sm:$0xff]
      %v2810 = vld [vmem:[#allocation3 + $0x88] sm:$0xff]
      %v2811 = vld [vmem:[#allocation3 + $0x90] sm:$0xff]
      %v2812 = vld [vmem:[#allocation3 + $0x98] sm:$0xff]
      %v2813 = vld [vmem:[#allocation3 + $0xa0] sm:$0xff]
      %v2814 = vld [vmem:[#allocation3 + $0xa8] sm:$0xff]
      %v2815 = vld [vmem:[#allocation3 + $0xb0] sm:$0xff]
      %v2816 = vld [vmem:[#allocation3 + $0xb8] sm:$0xff]
      %v2817 = vld [vmem:[#allocation3 + $0xc0] sm:$0xff]
      %v2818 = vld [vmem:[#allocation3 + $0xc8] sm:$0xff]
      %v2819 = vld [vmem:[#allocation3 + $0xd0] sm:$0xff]
      %v2820 = vld [vmem:[#allocation3 + $0xd8] sm:$0xff]
      %v2821 = vld [vmem:[#allocation3 + $0xe0] sm:$0xff]
      %v2822 = vld [vmem:[#allocation3 + $0xe8] sm:$0xff]
      %v2823 = vld [vmem:[#allocation3 + $0xf0] sm:$0xff]
      %v2824 = vld [vmem:[#allocation3 + $0xf8] sm:$0xff]
      %v2825 = vld [vmem:[#allocation3 + $0x100] sm:$0xff]
      %v2826 = vld [vmem:[#allocation3 + $0x108] sm:$0xff]
      %v2827 = vld [vmem:[#allocation3 + $0x110] sm:$0xff]
      %v2828 = vld [vmem:[#allocation3 + $0x118] sm:$0xff]
      %v2829 = vld [vmem:[#allocation3 + $0x1] sm:$0xff]
      %v2830 = vld [vmem:[#allocation3 + $0x9] sm:$0xff]
      %v2831 = vld [vmem:[#allocation3 + $0x11] sm:$0xff]
      %v2832 = vld [vmem:[#allocation3 + $0x19] sm:$0xff]
      %v2833 = vld [vmem:[#allocation3 + $0x21] sm:$0xff]
      %v2834 = vld [vmem:[#allocation3 + $0x29] sm:$0xff]
      %v2835 = vld [vmem:[#allocation3 + $0x31] sm:$0xff]
      %v2836 = vld [vmem:[#allocation3 + $0x39] sm:$0xff]
      %v2837 = vld [vmem:[#allocation3 + $0x41] sm:$0xff]
      %v2838 = vld [vmem:[#allocation3 + $0x49] sm:$0xff]
      %v2839 = vld [vmem:[#allocation3 + $0x51] sm:$0xff]
      %v2840 = vld [vmem:[#allocation3 + $0x59] sm:$0xff]
      %v2841 = vld [vmem:[#allocation3 + $0x61] sm:$0xff]
      %v2842 = vld [vmem:[#allocation3 + $0x69] sm:$0xff]
      %v2843 = vld [vmem:[#allocation3 + $0x71] sm:$0xff]
      %v2844 = vld [vmem:[#allocation3 + $0x79] sm:$0xff]
      %v2845 = vld [vmem:[#allocation3 + $0x81] sm:$0xff]
      %v2846 = vld [vmem:[#allocation3 + $0x89] sm:$0xff]
      %v2847 = vld [vmem:[#allocation3 + $0x91] sm:$0xff]
      %v2848 = vld [vmem:[#allocation3 + $0x99] sm:$0xff]
      %v2849 = vld [vmem:[#allocation3 + $0xa1] sm:$0xff]
      %v2850 = vld [vmem:[#allocation3 + $0xa9] sm:$0xff]
      %v2851 = vld [vmem:[#allocation3 + $0xb1] sm:$0xff]
      %v2852 = vld [vmem:[#allocation3 + $0xb9] sm:$0xff]
      %v2853 = vld [vmem:[#allocation3 + $0xc1] sm:$0xff]
      %v2854 = vld [vmem:[#allocation3 + $0xc9] sm:$0xff]
      %v2855 = vld [vmem:[#allocation3 + $0xd1] sm:$0xff]
      %v2856 = vld [vmem:[#allocation3 + $0xd9] sm:$0xff]
      %v2857 = vld [vmem:[#allocation3 + $0xe1] sm:$0xff]
      %v2858 = vld [vmem:[#allocation3 + $0xe9] sm:$0xff]
      %v2859 = vld [vmem:[#allocation3 + $0xf1] sm:$0xff]
      %v2860 = vld [vmem:[#allocation3 + $0xf9] sm:$0xff]
      %v2861 = vld [vmem:[#allocation3 + $0x101] sm:$0xff]
      %v2862 = vld [vmem:[#allocation3 + $0x109] sm:$0xff]
      %v2863 = vld [vmem:[#allocation3 + $0x111] sm:$0xff]
      %v2864 = vld [vmem:[#allocation3 + $0x119] sm:$0xff]
      %v2865 = vld [vmem:[#allocation3 + $0x2] sm:$0xff]
      %v2866 = vld [vmem:[#allocation3 + $0xa] sm:$0xff]
      %v2867 = vld [vmem:[#allocation3 + $0x12] sm:$0xff]
      %v2868 = vld [vmem:[#allocation3 + $0x1a] sm:$0xff]
      %v2869 = vld [vmem:[#allocation3 + $0x22] sm:$0xff]
      %v2870 = vld [vmem:[#allocation3 + $0x2a] sm:$0xff]
      %v2871 = vld [vmem:[#allocation3 + $0x32] sm:$0xff]
      %v2872 = vld [vmem:[#allocation3 + $0x3a] sm:$0xff]
      %v2873 = vld [vmem:[#allocation3 + $0x42] sm:$0xff]
      %v2874 = vld [vmem:[#allocation3 + $0x4a] sm:$0xff]
      %v2875 = vld [vmem:[#allocation3 + $0x52] sm:$0xff]
      %v2876 = vld [vmem:[#allocation3 + $0x5a] sm:$0xff]
      %v2877 = vld [vmem:[#allocation3 + $0x62] sm:$0xff]
      %v2878 = vld [vmem:[#allocation3 + $0x6a] sm:$0xff]
      %v2879 = vld [vmem:[#allocation3 + $0x72] sm:$0xff]
      %v2880 = vld [vmem:[#allocation3 + $0x7a] sm:$0xff]
      %v2881 = vld [vmem:[#allocation3 + $0x82] sm:$0xff]
      %v2882 = vld [vmem:[#allocation3 + $0x8a] sm:$0xff]
      %v2883 = vld [vmem:[#allocation3 + $0x92] sm:$0xff]
      %v2884 = vld [vmem:[#allocation3 + $0x9a] sm:$0xff]
      %v2885 = vld [vmem:[#allocation3 + $0xa2] sm:$0xff]
      %v2886 = vld [vmem:[#allocation3 + $0xaa] sm:$0xff]
      %v2887 = vld [vmem:[#allocation3 + $0xb2] sm:$0xff]
      %v2888 = vld [vmem:[#allocation3 + $0xba] sm:$0xff]
      %v2889 = vld [vmem:[#allocation3 + $0xc2] sm:$0xff]
      %v2890 = vld [vmem:[#allocation3 + $0xca] sm:$0xff]
      %v2891 = vld [vmem:[#allocation3 + $0xd2] sm:$0xff]
      %v2892 = vld [vmem:[#allocation3 + $0xda] sm:$0xff]
      %v2893 = vld [vmem:[#allocation3 + $0xe2] sm:$0xff]
      %v2894 = vld [vmem:[#allocation3 + $0xea] sm:$0xff]
      %v2895 = vld [vmem:[#allocation3 + $0xf2] sm:$0xff]
      %v2896 = vld [vmem:[#allocation3 + $0xfa] sm:$0xff]
      %v2897 = vld [vmem:[#allocation3 + $0x102] sm:$0xff]
      %v2898 = vld [vmem:[#allocation3 + $0x10a] sm:$0xff]
      %v2899 = vld [vmem:[#allocation3 + $0x112] sm:$0xff]
      %v2900 = vld [vmem:[#allocation3 + $0x11a] sm:$0xff]
      %v2901 = vld [vmem:[#allocation3 + $0x122] sm:$0xff]
      %v2902 = vld [vmem:[#allocation3 + $0x12a] sm:$0xff]
      %v2903 = vld [vmem:[#allocation3 + $0x13] sm:$0xff]
      %v2904 = vld [vmem:[#allocation3 + $0x1b] sm:$0xff]
      %v2905 = vld [vmem:[#allocation3 + $0x23] sm:$0xff]
      %v2906 = vld [vmem:[#allocation3 + $0x2b] sm:$0xff]
      %v2907 = vld [vmem:[#allocation3 + $0x33] sm:$0xff]
      %v2908 = vld [vmem:[#allocation3 + $0x3b] sm:$0xff]
      %v2909 = vld [vmem:[#allocation3 + $0x43] sm:$0xff]
      %v2910 = vld [vmem:[#allocation3 + $0x4b] sm:$0xff]
      %v2911 = vld [vmem:[#allocation3 + $0x53] sm:$0xff]
      %v2912 = vld [vmem:[#allocation3 + $0x5b] sm:$0xff]
      %v2913 = vld [vmem:[#allocation3 + $0x63] sm:$0xff]
      %v2914 = vld [vmem:[#allocation3 + $0x6b] sm:$0xff]
      %v2915 = vld [vmem:[#allocation3 + $0x73] sm:$0xff]
      %v2916 = vld [vmem:[#allocation3 + $0x7b] sm:$0xff]
      %v2917 = vld [vmem:[#allocation3 + $0x83] sm:$0xff]
      %v2918 = vld [vmem:[#allocation3 + $0x8b] sm:$0xff]
      %v2919 = vld [vmem:[#allocation3 + $0x93] sm:$0xff]
      %v2920 = vld [vmem:[#allocation3 + $0x9b] sm:$0xff]
      %v2921 = vld [vmem:[#allocation3 + $0xa3] sm:$0xff]
      %v2922 = vld [vmem:[#allocation3 + $0xab] sm:$0xff]
      %v2923 = vld [vmem:[#allocation3 + $0xb3] sm:$0xff]
      %v2924 = vld [vmem:[#allocation3 + $0xbb] sm:$0xff]
      %v2925 = vld [vmem:[#allocation3 + $0xc3] sm:$0xff]
      %v2926 = vld [vmem:[#allocation3 + $0xcb] sm:$0xff]
      %v2927 = vld [vmem:[#allocation3 + $0xd3] sm:$0xff]
      %v2928 = vld [vmem:[#allocation3 + $0xdb] sm:$0xff]
      %v2929 = vld [vmem:[#allocation3 + $0xe3] sm:$0xff]
      %v2930 = vld [vmem:[#allocation3 + $0xeb] sm:$0xff]
      %v2931 = vld [vmem:[#allocation3 + $0xf3] sm:$0xff]
      %v2932 = vld [vmem:[#allocation3 + $0xfb] sm:$0xff]
      %v2933 = vld [vmem:[#allocation3 + $0x103] sm:$0xff]
      %v2934 = vld [vmem:[#allocation3 + $0x10b] sm:$0xff]
      %v2935 = vld [vmem:[#allocation3 + $0x113] sm:$0xff]
      %v2936 = vld [vmem:[#allocation3 + $0x11b] sm:$0xff]
      %v2937 = vld [vmem:[#allocation3 + $0x123] sm:$0xff]
      %v2938 = vld [vmem:[#allocation3 + $0x12b] sm:$0xff]
      %v2939 = vld [vmem:[#allocation3 + $0x14] sm:$0xff]
      %v2940 = vld [vmem:[#allocation3 + $0x1c] sm:$0xff]
      %v2941 = vld [vmem:[#allocation3 + $0x24] sm:$0xff]
      %v2942 = vld [vmem:[#allocation3 + $0x2c] sm:$0xff]
      %v2943 = vld [vmem:[#allocation3 + $0x34] sm:$0xff]
      %v2944 = vld [vmem:[#allocation3 + $0x3c] sm:$0xff]
      %v2945 = vld [vmem:[#allocation3 + $0x44] sm:$0xff]
      %v2946 = vld [vmem:[#allocation3 + $0x4c] sm:$0xff]
      %v2947 = vld [vmem:[#allocation3 + $0x54] sm:$0xff]
      %v2948 = vld [vmem:[#allocation3 + $0x5c] sm:$0xff]
      %v2949 = vld [vmem:[#allocation3 + $0x64] sm:$0xff]
      %v2950 = vld [vmem:[#allocation3 + $0x6c] sm:$0xff]
      %v2951 = vld [vmem:[#allocation3 + $0x74] sm:$0xff]
      %v2952 = vld [vmem:[#allocation3 + $0x7c] sm:$0xff]
      %v2953 = vld [vmem:[#allocation3 + $0x84] sm:$0xff]
      %v2954 = vld [vmem:[#allocation3 + $0x8c] sm:$0xff]
      %v2955 = vld [vmem:[#allocation3 + $0x94] sm:$0xff]
      %v2956 = vld [vmem:[#allocation3 + $0x9c] sm:$0xff]
      %v2957 = vld [vmem:[#allocation3 + $0xa4] sm:$0xff]
      %v2958 = vld [vmem:[#allocation3 + $0xac] sm:$0xff]
      %v2959 = vld [vmem:[#allocation3 + $0xb4] sm:$0xff]
      %v2960 = vld [vmem:[#allocation3 + $0xbc] sm:$0xff]
      %v2961 = vld [vmem:[#allocation3 + $0xc4] sm:$0xff]
      %v2962 = vld [vmem:[#allocation3 + $0xcc] sm:$0xff]
      %v2963 = vld [vmem:[#allocation3 + $0xd4] sm:$0xff]
      %v2964 = vld [vmem:[#allocation3 + $0xdc] sm:$0xff]
      %v2965 = vld [vmem:[#allocation3 + $0xe4] sm:$0xff]
      %v2966 = vld [vmem:[#allocation3 + $0xec] sm:$0xff]
      %v2967 = vld [vmem:[#allocation3 + $0xf4] sm:$0xff]
      %v2968 = vld [vmem:[#allocation3 + $0xfc] sm:$0xff]
      %v2969 = vld [vmem:[#allocation3 + $0x104] sm:$0xff]
      %v2970 = vld [vmem:[#allocation3 + $0x10c] sm:$0xff]
      %v2971 = vld [vmem:[#allocation3 + $0x114] sm:$0xff]
      %v2972 = vld [vmem:[#allocation3 + $0x11c] sm:$0xff]
      %v2973 = vld [vmem:[#allocation3 + $0x124] sm:$0xff]
      %v2974 = vld [vmem:[#allocation3 + $0x12c] sm:$0xff]
      %v2975 = vld [vmem:[#allocation3 + $0x134] sm:$0xff]
      %v2976 = vld [vmem:[#allocation3 + $0x13c] sm:$0xff]
      %v2977 = vld [vmem:[#allocation3 + $0x25] sm:$0xff]
      %v2978 = vld [vmem:[#allocation3 + $0x2d] sm:$0xff]
      %v2979 = vld [vmem:[#allocation3 + $0x35] sm:$0xff]
      %v2980 = vld [vmem:[#allocation3 + $0x3d] sm:$0xff]
      %v2981 = vld [vmem:[#allocation3 + $0x45] sm:$0xff]
      %v2982 = vld [vmem:[#allocation3 + $0x4d] sm:$0xff]
      %v2983 = vld [vmem:[#allocation3 + $0x55] sm:$0xff]
      %v2984 = vld [vmem:[#allocation3 + $0x5d] sm:$0xff]
      %v2985 = vld [vmem:[#allocation3 + $0x65] sm:$0xff]
      %v2986 = vld [vmem:[#allocation3 + $0x6d] sm:$0xff]
      %v2987 = vld [vmem:[#allocation3 + $0x75] sm:$0xff]
      %v2988 = vld [vmem:[#allocation3 + $0x7d] sm:$0xff]
      %v2989 = vld [vmem:[#allocation3 + $0x85] sm:$0xff]
      %v2990 = vld [vmem:[#allocation3 + $0x8d] sm:$0xff]
      %v2991 = vld [vmem:[#allocation3 + $0x95] sm:$0xff]
      %v2992 = vld [vmem:[#allocation3 + $0x9d] sm:$0xff]
      %v2993 = vld [vmem:[#allocation3 + $0xa5] sm:$0xff]
      %v2994 = vld [vmem:[#allocation3 + $0xad] sm:$0xff]
      %v2995 = vld [vmem:[#allocation3 + $0xb5] sm:$0xff]
      %v2996 = vld [vmem:[#allocation3 + $0xbd] sm:$0xff]
      %v2997 = vld [vmem:[#allocation3 + $0xc5] sm:$0xff]
      %v2998 = vld [vmem:[#allocation3 + $0xcd] sm:$0xff]
      %v2999 = vld [vmem:[#allocation3 + $0xd5] sm:$0xff]
      %v3000 = vld [vmem:[#allocation3 + $0xdd] sm:$0xff]
      %v3001 = vld [vmem:[#allocation3 + $0xe5] sm:$0xff]
      %v3002 = vld [vmem:[#allocation3 + $0xed] sm:$0xff]
      %v3003 = vld [vmem:[#allocation3 + $0xf5] sm:$0xff]
      %v3004 = vld [vmem:[#allocation3 + $0xfd] sm:$0xff]
      %v3005 = vld [vmem:[#allocation3 + $0x105] sm:$0xff]
      %v3006 = vld [vmem:[#allocation3 + $0x10d] sm:$0xff]
      %v3007 = vld [vmem:[#allocation3 + $0x115] sm:$0xff]
      %v3008 = vld [vmem:[#allocation3 + $0x11d] sm:$0xff]
      %v3009 = vld [vmem:[#allocation3 + $0x125] sm:$0xff]
      %v3010 = vld [vmem:[#allocation3 + $0x12d] sm:$0xff]
      %v3011 = vld [vmem:[#allocation3 + $0x135] sm:$0xff]
      %v3012 = vld [vmem:[#allocation3 + $0x13d] sm:$0xff]
      %v3013 = vld [vmem:[#allocation3 + $0x26] sm:$0xff]
      %v3014 = vld [vmem:[#allocation3 + $0x2e] sm:$0xff]
      %v3015 = vld [vmem:[#allocation3 + $0x36] sm:$0xff]
      %v3016 = vld [vmem:[#allocation3 + $0x3e] sm:$0xff]
      %v3017 = vld [vmem:[#allocation3 + $0x46] sm:$0xff]
      %v3018 = vld [vmem:[#allocation3 + $0x4e] sm:$0xff]
      %v3019 = vld [vmem:[#allocation3 + $0x56] sm:$0xff]
      %v3020 = vld [vmem:[#allocation3 + $0x5e] sm:$0xff]
      %v3021 = vld [vmem:[#allocation3 + $0x66] sm:$0xff]
      %v3022 = vld [vmem:[#allocation3 + $0x6e] sm:$0xff]
      %v3023 = vld [vmem:[#allocation3 + $0x76] sm:$0xff]
      %v3024 = vld [vmem:[#allocation3 + $0x7e] sm:$0xff]
      %v3025 = vld [vmem:[#allocation3 + $0x86] sm:$0xff]
      %v3026 = vld [vmem:[#allocation3 + $0x8e] sm:$0xff]
      %v3027 = vld [vmem:[#allocation3 + $0x96] sm:$0xff]
      %v3028 = vld [vmem:[#allocation3 + $0x9e] sm:$0xff]
      %v3029 = vld [vmem:[#allocation3 + $0xa6] sm:$0xff]
      %v3030 = vld [vmem:[#allocation3 + $0xae] sm:$0xff]
      %v3031 = vld [vmem:[#allocation3 + $0xb6] sm:$0xff]
      %v3032 = vld [vmem:[#allocation3 + $0xbe] sm:$0xff]
      %v3033 = vld [vmem:[#allocation3 + $0xc6] sm:$0xff]
      %v3034 = vld [vmem:[#allocation3 + $0xce] sm:$0xff]
      %v3035 = vld [vmem:[#allocation3 + $0xd6] sm:$0xff]
      %v3036 = vld [vmem:[#allocation3 + $0xde] sm:$0xff]
      %v3037 = vld [vmem:[#allocation3 + $0xe6] sm:$0xff]
      %v3038 = vld [vmem:[#allocation3 + $0xee] sm:$0xff]
      %v3039 = vld [vmem:[#allocation3 + $0xf6] sm:$0xff]
      %v3040 = vld [vmem:[#allocation3 + $0xfe] sm:$0xff]
      %v3041 = vld [vmem:[#allocation3 + $0x106] sm:$0xff]
      %v3042 = vld [vmem:[#allocation3 + $0x10e] sm:$0xff]
      %v3043 = vld [vmem:[#allocation3 + $0x116] sm:$0xff]
      %v3044 = vld [vmem:[#allocation3 + $0x11e] sm:$0xff]
      %v3045 = vld [vmem:[#allocation3 + $0x126] sm:$0xff]
      %v3046 = vld [vmem:[#allocation3 + $0x12e] sm:$0xff]
      %v3047 = vld [vmem:[#allocation3 + $0x136] sm:$0xff]
      %v3048 = vld [vmem:[#allocation3 + $0x13e] sm:$0xff]
      %3085 = vrot.lane.b32.xlu0 %v2829, 8
      %v3086 = vpop.permute.xlu0 %3085
      %3087 = vrot.lane.b32.xlu0 %v2830, 8
      %v3088 = vpop.permute.xlu0 %3087
      %3089 = vrot.lane.b32.xlu0 %v2831, 8
      %v3090 = vpop.permute.xlu0 %3089
      %3091 = vrot.lane.b32.xlu0 %v2832, 8
      %v3092 = vpop.permute.xlu0 %3091
      %3093 = vrot.lane.b32.xlu0 %v2833, 8
      %v3094 = vpop.permute.xlu0 %3093
      %3095 = vrot.lane.b32.xlu0 %v2834, 8
      %v3096 = vpop.permute.xlu0 %3095
      %3097 = vrot.lane.b32.xlu0 %v2835, 8
      %v3098 = vpop.permute.xlu0 %3097
      %3099 = vrot.lane.b32.xlu0 %v2836, 8
      %v3100 = vpop.permute.xlu0 %3099
      %3101 = vrot.lane.b32.xlu0 %v2837, 8
      %v3102 = vpop.permute.xlu0 %3101
      %3103 = vrot.lane.b32.xlu0 %v2838, 8
      %v3104 = vpop.permute.xlu0 %3103
      %3105 = vrot.lane.b32.xlu0 %v2839, 8
      %v3106 = vpop.permute.xlu0 %3105
      %3107 = vrot.lane.b32.xlu0 %v2840, 8
      %v3108 = vpop.permute.xlu0 %3107
      %3109 = vrot.lane.b32.xlu0 %v2841, 8
      %v3110 = vpop.permute.xlu0 %3109
      %3111 = vrot.lane.b32.xlu0 %v2842, 8
      %v3112 = vpop.permute.xlu0 %3111
      %3113 = vrot.lane.b32.xlu0 %v2843, 8
      %v3114 = vpop.permute.xlu0 %3113
      %3115 = vrot.lane.b32.xlu0 %v2844, 8
      %v3116 = vpop.permute.xlu0 %3115
      %3117 = vrot.lane.b32.xlu0 %v2845, 8
      %v3118 = vpop.permute.xlu0 %3117
      %3119 = vrot.lane.b32.xlu0 %v2846, 8
      %v3120 = vpop.permute.xlu0 %3119
      %3121 = vrot.lane.b32.xlu0 %v2847, 8
      %v3122 = vpop.permute.xlu0 %3121
      %3123 = vrot.lane.b32.xlu0 %v2848, 8
      %v3124 = vpop.permute.xlu0 %3123
      %3125 = vrot.lane.b32.xlu0 %v2849, 8
      %v3126 = vpop.permute.xlu0 %3125
      %3127 = vrot.lane.b32.xlu0 %v2850, 8
      %v3128 = vpop.permute.xlu0 %3127
      %3129 = vrot.lane.b32.xlu0 %v2851, 8
      %v3130 = vpop.permute.xlu0 %3129
      %3131 = vrot.lane.b32.xlu0 %v2852, 8
      %v3132 = vpop.permute.xlu0 %3131
      %3133 = vrot.lane.b32.xlu0 %v2853, 8
      %v3134 = vpop.permute.xlu0 %3133
      %3135 = vrot.lane.b32.xlu0 %v2854, 8
      %v3136 = vpop.permute.xlu0 %3135
      %3137 = vrot.lane.b32.xlu0 %v2855, 8
      %v3138 = vpop.permute.xlu0 %3137
      %3139 = vrot.lane.b32.xlu0 %v2856, 8
      %v3140 = vpop.permute.xlu0 %3139
      %3141 = vrot.lane.b32.xlu0 %v2857, 8
      %v3142 = vpop.permute.xlu0 %3141
      %3143 = vrot.lane.b32.xlu0 %v2858, 8
      %v3144 = vpop.permute.xlu0 %3143
      %3145 = vrot.lane.b32.xlu0 %v2859, 8
      %v3146 = vpop.permute.xlu0 %3145
      %3147 = vrot.lane.b32.xlu0 %v2860, 8
      %v3148 = vpop.permute.xlu0 %3147
      %3149 = vrot.lane.b32.xlu0 %v2861, 8
      %v3150 = vpop.permute.xlu0 %3149
      %3151 = vrot.lane.b32.xlu0 %v2862, 8
      %v3152 = vpop.permute.xlu0 %3151
      %3153 = vrot.lane.b32.xlu0 %v2863, 8
      %v3154 = vpop.permute.xlu0 %3153
      %3155 = vrot.lane.b32.xlu0 %v2864, 8
      %v3156 = vpop.permute.xlu0 %3155
      %3229 = vrot.lane.b32.xlu0 %v2865, 16
      %v3230 = vpop.permute.xlu0 %3229
      %3231 = vrot.lane.b32.xlu0 %v2866, 16
      %v3232 = vpop.permute.xlu0 %3231
      %3233 = vrot.lane.b32.xlu0 %v2867, 16
      %v3234 = vpop.permute.xlu0 %3233
      %3235 = vrot.lane.b32.xlu0 %v2868, 16
      %v3236 = vpop.permute.xlu0 %3235
      %3237 = vrot.lane.b32.xlu0 %v2869, 16
      %v3238 = vpop.permute.xlu0 %3237
      %3239 = vrot.lane.b32.xlu0 %v2870, 16
      %v3240 = vpop.permute.xlu0 %3239
      %3241 = vrot.lane.b32.xlu0 %v2871, 16
      %v3242 = vpop.permute.xlu0 %3241
      %3243 = vrot.lane.b32.xlu0 %v2872, 16
      %v3244 = vpop.permute.xlu0 %3243
      %3245 = vrot.lane.b32.xlu0 %v2873, 16
      %v3246 = vpop.permute.xlu0 %3245
      %3247 = vrot.lane.b32.xlu0 %v2874, 16
      %v3248 = vpop.permute.xlu0 %3247
      %3249 = vrot.lane.b32.xlu0 %v2875, 16
      %v3250 = vpop.permute.xlu0 %3249
      %3251 = vrot.lane.b32.xlu0 %v2876, 16
      %v3252 = vpop.permute.xlu0 %3251
      %3253 = vrot.lane.b32.xlu0 %v2877, 16
      %v3254 = vpop.permute.xlu0 %3253
      %3255 = vrot.lane.b32.xlu0 %v2878, 16
      %v3256 = vpop.permute.xlu0 %3255
      %3257 = vrot.lane.b32.xlu0 %v2879, 16
      %v3258 = vpop.permute.xlu0 %3257
      %3259 = vrot.lane.b32.xlu0 %v2880, 16
      %v3260 = vpop.permute.xlu0 %3259
      %3261 = vrot.lane.b32.xlu0 %v2881, 16
      %v3262 = vpop.permute.xlu0 %3261
      %3263 = vrot.lane.b32.xlu0 %v2882, 16
      %v3264 = vpop.permute.xlu0 %3263
      %3265 = vrot.lane.b32.xlu0 %v2883, 16
      %v3266 = vpop.permute.xlu0 %3265
      %3267 = vrot.lane.b32.xlu0 %v2884, 16
      %v3268 = vpop.permute.xlu0 %3267
      %3269 = vrot.lane.b32.xlu0 %v2885, 16
      %v3270 = vpop.permute.xlu0 %3269
      %3271 = vrot.lane.b32.xlu0 %v2886, 16
      %v3272 = vpop.permute.xlu0 %3271
      %3273 = vrot.lane.b32.xlu0 %v2887, 16
      %v3274 = vpop.permute.xlu0 %3273
      %3275 = vrot.lane.b32.xlu0 %v2888, 16
      %v3276 = vpop.permute.xlu0 %3275
      %3277 = vrot.lane.b32.xlu0 %v2889, 16
      %v3278 = vpop.permute.xlu0 %3277
      %3279 = vrot.lane.b32.xlu0 %v2890, 16
      %v3280 = vpop.permute.xlu0 %3279
      %3281 = vrot.lane.b32.xlu0 %v2891, 16
      %v3282 = vpop.permute.xlu0 %3281
      %3283 = vrot.lane.b32.xlu0 %v2892, 16
      %v3284 = vpop.permute.xlu0 %3283
      %3285 = vrot.lane.b32.xlu0 %v2893, 16
      %v3286 = vpop.permute.xlu0 %3285
      %3287 = vrot.lane.b32.xlu0 %v2894, 16
      %v3288 = vpop.permute.xlu0 %3287
      %3289 = vrot.lane.b32.xlu0 %v2895, 16
      %v3290 = vpop.permute.xlu0 %3289
      %3291 = vrot.lane.b32.xlu0 %v2896, 16
      %v3292 = vpop.permute.xlu0 %3291
      %3293 = vrot.lane.b32.xlu0 %v2897, 16
      %v3294 = vpop.permute.xlu0 %3293
      %3295 = vrot.lane.b32.xlu0 %v2898, 16
      %v3296 = vpop.permute.xlu0 %3295
      %3297 = vrot.lane.b32.xlu0 %v2899, 16
      %v3298 = vpop.permute.xlu0 %3297
      %3299 = vrot.lane.b32.xlu0 %v2900, 16
      %v3300 = vpop.permute.xlu0 %3299
      %3339 = vrot.lane.b32.xlu0 %v2867, 24
      %v3340 = vpop.permute.xlu0 %3339
      %3341 = vrot.lane.b32.xlu0 %v2868, 24
      %v3342 = vpop.permute.xlu0 %3341
      %3343 = vrot.lane.b32.xlu0 %v2869, 24
      %v3344 = vpop.permute.xlu0 %3343
      %3345 = vrot.lane.b32.xlu0 %v2870, 24
      %v3346 = vpop.permute.xlu0 %3345
      %3347 = vrot.lane.b32.xlu0 %v2871, 24
      %v3348 = vpop.permute.xlu0 %3347
      %3349 = vrot.lane.b32.xlu0 %v2872, 24
      %v3350 = vpop.permute.xlu0 %3349
      %3351 = vrot.lane.b32.xlu0 %v2873, 24
      %v3352 = vpop.permute.xlu0 %3351
      %3353 = vrot.lane.b32.xlu0 %v2874, 24
      %v3354 = vpop.permute.xlu0 %3353
      %3355 = vrot.lane.b32.xlu0 %v2875, 24
      %v3356 = vpop.permute.xlu0 %3355
      %3357 = vrot.lane.b32.xlu0 %v2876, 24
      %v3358 = vpop.permute.xlu0 %3357
      %3359 = vrot.lane.b32.xlu0 %v2877, 24
      %v3360 = vpop.permute.xlu0 %3359
      %3361 = vrot.lane.b32.xlu0 %v2878, 24
      %v3362 = vpop.permute.xlu0 %3361
      %3363 = vrot.lane.b32.xlu0 %v2879, 24
      %v3364 = vpop.permute.xlu0 %3363
      %3365 = vrot.lane.b32.xlu0 %v2880, 24
      %v3366 = vpop.permute.xlu0 %3365
      %3367 = vrot.lane.b32.xlu0 %v2881, 24
      %v3368 = vpop.permute.xlu0 %3367
      %3369 = vrot.lane.b32.xlu0 %v2882, 24
      %v3370 = vpop.permute.xlu0 %3369
      %3371 = vrot.lane.b32.xlu0 %v2883, 24
      %v3372 = vpop.permute.xlu0 %3371
      %3373 = vrot.lane.b32.xlu0 %v2884, 24
      %v3374 = vpop.permute.xlu0 %3373
      %3375 = vrot.lane.b32.xlu0 %v2885, 24
      %v3376 = vpop.permute.xlu0 %3375
      %3377 = vrot.lane.b32.xlu0 %v2886, 24
      %v3378 = vpop.permute.xlu0 %3377
      %3379 = vrot.lane.b32.xlu0 %v2887, 24
      %v3380 = vpop.permute.xlu0 %3379
      %3381 = vrot.lane.b32.xlu0 %v2888, 24
      %v3382 = vpop.permute.xlu0 %3381
      %3383 = vrot.lane.b32.xlu0 %v2889, 24
      %v3384 = vpop.permute.xlu0 %3383
      %3385 = vrot.lane.b32.xlu0 %v2890, 24
      %v3386 = vpop.permute.xlu0 %3385
      %3387 = vrot.lane.b32.xlu0 %v2891, 24
      %v3388 = vpop.permute.xlu0 %3387
      %3389 = vrot.lane.b32.xlu0 %v2892, 24
      %v3390 = vpop.permute.xlu0 %3389
      %3391 = vrot.lane.b32.xlu0 %v2893, 24
      %v3392 = vpop.permute.xlu0 %3391
      %3393 = vrot.lane.b32.xlu0 %v2894, 24
      %v3394 = vpop.permute.xlu0 %3393
      %3395 = vrot.lane.b32.xlu0 %v2895, 24
      %v3396 = vpop.permute.xlu0 %3395
      %3397 = vrot.lane.b32.xlu0 %v2896, 24
      %v3398 = vpop.permute.xlu0 %3397
      %3399 = vrot.lane.b32.xlu0 %v2897, 24
      %v3400 = vpop.permute.xlu0 %3399
      %3401 = vrot.lane.b32.xlu0 %v2898, 24
      %v3402 = vpop.permute.xlu0 %3401
      %3403 = vrot.lane.b32.xlu0 %v2899, 24
      %v3404 = vpop.permute.xlu0 %3403
      %3405 = vrot.lane.b32.xlu0 %v2900, 24
      %v3406 = vpop.permute.xlu0 %3405
      %3407 = vrot.lane.b32.xlu0 %v2901, 24
      %v3408 = vpop.permute.xlu0 %3407
      %3409 = vrot.lane.b32.xlu0 %v2902, 24
      %v3410 = vpop.permute.xlu0 %3409
      %3483 = vrot.lane.b32.xlu0 %v2903, 32
      %v3484 = vpop.permute.xlu0 %3483
      %3485 = vrot.lane.b32.xlu0 %v2904, 32
      %v3486 = vpop.permute.xlu0 %3485
      %3487 = vrot.lane.b32.xlu0 %v2905, 32
      %v3488 = vpop.permute.xlu0 %3487
      %3489 = vrot.lane.b32.xlu0 %v2906, 32
      %v3490 = vpop.permute.xlu0 %3489
      %3491 = vrot.lane.b32.xlu0 %v2907, 32
      %v3492 = vpop.permute.xlu0 %3491
      %3493 = vrot.lane.b32.xlu0 %v2908, 32
      %v3494 = vpop.permute.xlu0 %3493
      %3495 = vrot.lane.b32.xlu0 %v2909, 32
      %v3496 = vpop.permute.xlu0 %3495
      %3497 = vrot.lane.b32.xlu0 %v2910, 32
      %v3498 = vpop.permute.xlu0 %3497
      %3499 = vrot.lane.b32.xlu0 %v2911, 32
      %v3500 = vpop.permute.xlu0 %3499
      %3501 = vrot.lane.b32.xlu0 %v2912, 32
      %v3502 = vpop.permute.xlu0 %3501
      %3503 = vrot.lane.b32.xlu0 %v2913, 32
      %v3504 = vpop.permute.xlu0 %3503
      %3505 = vrot.lane.b32.xlu0 %v2914, 32
      %v3506 = vpop.permute.xlu0 %3505
      %3507 = vrot.lane.b32.xlu0 %v2915, 32
      %v3508 = vpop.permute.xlu0 %3507
      %3509 = vrot.lane.b32.xlu0 %v2916, 32
      %v3510 = vpop.permute.xlu0 %3509
      %3511 = vrot.lane.b32.xlu0 %v2917, 32
      %v3512 = vpop.permute.xlu0 %3511
      %3513 = vrot.lane.b32.xlu0 %v2918, 32
      %v3514 = vpop.permute.xlu0 %3513
      %3515 = vrot.lane.b32.xlu0 %v2919, 32
      %v3516 = vpop.permute.xlu0 %3515
      %3517 = vrot.lane.b32.xlu0 %v2920, 32
      %v3518 = vpop.permute.xlu0 %3517
      %3519 = vrot.lane.b32.xlu0 %v2921, 32
      %v3520 = vpop.permute.xlu0 %3519
      %3521 = vrot.lane.b32.xlu0 %v2922, 32
      %v3522 = vpop.permute.xlu0 %3521
      %3523 = vrot.lane.b32.xlu0 %v2923, 32
      %v3524 = vpop.permute.xlu0 %3523
      %3525 = vrot.lane.b32.xlu0 %v2924, 32
      %v3526 = vpop.permute.xlu0 %3525
      %3527 = vrot.lane.b32.xlu0 %v2925, 32
      %v3528 = vpop.permute.xlu0 %3527
      %3529 = vrot.lane.b32.xlu0 %v2926, 32
      %v3530 = vpop.permute.xlu0 %3529
      %3531 = vrot.lane.b32.xlu0 %v2927, 32
      %v3532 = vpop.permute.xlu0 %3531
      %3533 = vrot.lane.b32.xlu0 %v2928, 32
      %v3534 = vpop.permute.xlu0 %3533
      %3535 = vrot.lane.b32.xlu0 %v2929, 32
      %v3536 = vpop.permute.xlu0 %3535
      %3537 = vrot.lane.b32.xlu0 %v2930, 32
      %v3538 = vpop.permute.xlu0 %3537
      %3539 = vrot.lane.b32.xlu0 %v2931, 32
      %v3540 = vpop.permute.xlu0 %3539
      %3541 = vrot.lane.b32.xlu0 %v2932, 32
      %v3542 = vpop.permute.xlu0 %3541
      %3543 = vrot.lane.b32.xlu0 %v2933, 32
      %v3544 = vpop.permute.xlu0 %3543
      %3545 = vrot.lane.b32.xlu0 %v2934, 32
      %v3546 = vpop.permute.xlu0 %3545
      %3547 = vrot.lane.b32.xlu0 %v2935, 32
      %v3548 = vpop.permute.xlu0 %3547
      %3549 = vrot.lane.b32.xlu0 %v2936, 32
      %v3550 = vpop.permute.xlu0 %3549
      %3551 = vrot.lane.b32.xlu0 %v2937, 32
      %v3552 = vpop.permute.xlu0 %3551
      %3553 = vrot.lane.b32.xlu0 %v2938, 32
      %v3554 = vpop.permute.xlu0 %3553
      %3627 = vrot.lane.b32.xlu0 %v2939, 40
      %v3628 = vpop.permute.xlu0 %3627
      %3629 = vrot.lane.b32.xlu0 %v2940, 40
      %v3630 = vpop.permute.xlu0 %3629
      %3631 = vrot.lane.b32.xlu0 %v2941, 40
      %v3632 = vpop.permute.xlu0 %3631
      %3633 = vrot.lane.b32.xlu0 %v2942, 40
      %v3634 = vpop.permute.xlu0 %3633
      %3635 = vrot.lane.b32.xlu0 %v2943, 40
      %v3636 = vpop.permute.xlu0 %3635
      %3637 = vrot.lane.b32.xlu0 %v2944, 40
      %v3638 = vpop.permute.xlu0 %3637
      %3639 = vrot.lane.b32.xlu0 %v2945, 40
      %v3640 = vpop.permute.xlu0 %3639
      %3641 = vrot.lane.b32.xlu0 %v2946, 40
      %v3642 = vpop.permute.xlu0 %3641
      %3643 = vrot.lane.b32.xlu0 %v2947, 40
      %v3644 = vpop.permute.xlu0 %3643
      %3645 = vrot.lane.b32.xlu0 %v2948, 40
      %v3646 = vpop.permute.xlu0 %3645
      %3647 = vrot.lane.b32.xlu0 %v2949, 40
      %v3648 = vpop.permute.xlu0 %3647
      %3649 = vrot.lane.b32.xlu0 %v2950, 40
      %v3650 = vpop.permute.xlu0 %3649
      %3651 = vrot.lane.b32.xlu0 %v2951, 40
      %v3652 = vpop.permute.xlu0 %3651
      %3653 = vrot.lane.b32.xlu0 %v2952, 40
      %v3654 = vpop.permute.xlu0 %3653
      %3655 = vrot.lane.b32.xlu0 %v2953, 40
      %v3656 = vpop.permute.xlu0 %3655
      %3657 = vrot.lane.b32.xlu0 %v2954, 40
      %v3658 = vpop.permute.xlu0 %3657
      %3659 = vrot.lane.b32.xlu0 %v2955, 40
      %v3660 = vpop.permute.xlu0 %3659
      %3661 = vrot.lane.b32.xlu0 %v2956, 40
      %v3662 = vpop.permute.xlu0 %3661
      %3663 = vrot.lane.b32.xlu0 %v2957, 40
      %v3664 = vpop.permute.xlu0 %3663
      %3665 = vrot.lane.b32.xlu0 %v2958, 40
      %v3666 = vpop.permute.xlu0 %3665
      %3667 = vrot.lane.b32.xlu0 %v2959, 40
      %v3668 = vpop.permute.xlu0 %3667
      %3669 = vrot.lane.b32.xlu0 %v2960, 40
      %v3670 = vpop.permute.xlu0 %3669
      %3671 = vrot.lane.b32.xlu0 %v2961, 40
      %v3672 = vpop.permute.xlu0 %3671
      %3673 = vrot.lane.b32.xlu0 %v2962, 40
      %v3674 = vpop.permute.xlu0 %3673
      %3675 = vrot.lane.b32.xlu0 %v2963, 40
      %v3676 = vpop.permute.xlu0 %3675
      %3677 = vrot.lane.b32.xlu0 %v2964, 40
      %v3678 = vpop.permute.xlu0 %3677
      %3679 = vrot.lane.b32.xlu0 %v2965, 40
      %v3680 = vpop.permute.xlu0 %3679
      %3681 = vrot.lane.b32.xlu0 %v2966, 40
      %v3682 = vpop.permute.xlu0 %3681
      %3683 = vrot.lane.b32.xlu0 %v2967, 40
      %v3684 = vpop.permute.xlu0 %3683
      %3685 = vrot.lane.b32.xlu0 %v2968, 40
      %v3686 = vpop.permute.xlu0 %3685
      %3687 = vrot.lane.b32.xlu0 %v2969, 40
      %v3688 = vpop.permute.xlu0 %3687
      %3689 = vrot.lane.b32.xlu0 %v2970, 40
      %v3690 = vpop.permute.xlu0 %3689
      %3691 = vrot.lane.b32.xlu0 %v2971, 40
      %v3692 = vpop.permute.xlu0 %3691
      %3693 = vrot.lane.b32.xlu0 %v2972, 40
      %v3694 = vpop.permute.xlu0 %3693
      %3695 = vrot.lane.b32.xlu0 %v2973, 40
      %v3696 = vpop.permute.xlu0 %3695
      %3697 = vrot.lane.b32.xlu0 %v2974, 40
      %v3698 = vpop.permute.xlu0 %3697
      %3737 = vrot.lane.b32.xlu0 %v2941, 48
      %v3738 = vpop.permute.xlu0 %3737
      %3739 = vrot.lane.b32.xlu0 %v2942, 48
      %v3740 = vpop.permute.xlu0 %3739
      %3741 = vrot.lane.b32.xlu0 %v2943, 48
      %v3742 = vpop.permute.xlu0 %3741
      %3743 = vrot.lane.b32.xlu0 %v2944, 48
      %v3744 = vpop.permute.xlu0 %3743
      %3745 = vrot.lane.b32.xlu0 %v2945, 48
      %v3746 = vpop.permute.xlu0 %3745
      %3747 = vrot.lane.b32.xlu0 %v2946, 48
      %v3748 = vpop.permute.xlu0 %3747
      %3749 = vrot.lane.b32.xlu0 %v2947, 48
      %v3750 = vpop.permute.xlu0 %3749
      %3751 = vrot.lane.b32.xlu0 %v2948, 48
      %v3752 = vpop.permute.xlu0 %3751
      %3753 = vrot.lane.b32.xlu0 %v2949, 48
      %v3754 = vpop.permute.xlu0 %3753
      %3755 = vrot.lane.b32.xlu0 %v2950, 48
      %v3756 = vpop.permute.xlu0 %3755
      %3757 = vrot.lane.b32.xlu0 %v2951, 48
      %v3758 = vpop.permute.xlu0 %3757
      %3759 = vrot.lane.b32.xlu0 %v2952, 48
      %v3760 = vpop.permute.xlu0 %3759
      %3761 = vrot.lane.b32.xlu0 %v2953, 48
      %v3762 = vpop.permute.xlu0 %3761
      %3763 = vrot.lane.b32.xlu0 %v2954, 48
      %v3764 = vpop.permute.xlu0 %3763
      %3765 = vrot.lane.b32.xlu0 %v2955, 48
      %v3766 = vpop.permute.xlu0 %3765
      %3767 = vrot.lane.b32.xlu0 %v2956, 48
      %v3768 = vpop.permute.xlu0 %3767
      %3769 = vrot.lane.b32.xlu0 %v2957, 48
      %v3770 = vpop.permute.xlu0 %3769
      %3771 = vrot.lane.b32.xlu0 %v2958, 48
      %v3772 = vpop.permute.xlu0 %3771
      %3773 = vrot.lane.b32.xlu0 %v2959, 48
      %v3774 = vpop.permute.xlu0 %3773
      %3775 = vrot.lane.b32.xlu0 %v2960, 48
      %v3776 = vpop.permute.xlu0 %3775
      %3777 = vrot.lane.b32.xlu0 %v2961, 48
      %v3778 = vpop.permute.xlu0 %3777
      %3779 = vrot.lane.b32.xlu0 %v2962, 48
      %v3780 = vpop.permute.xlu0 %3779
      %3781 = vrot.lane.b32.xlu0 %v2963, 48
      %v3782 = vpop.permute.xlu0 %3781
      %3783 = vrot.lane.b32.xlu0 %v2964, 48
      %v3784 = vpop.permute.xlu0 %3783
      %3785 = vrot.lane.b32.xlu0 %v2965, 48
      %v3786 = vpop.permute.xlu0 %3785
      %3787 = vrot.lane.b32.xlu0 %v2966, 48
      %v3788 = vpop.permute.xlu0 %3787
      %3789 = vrot.lane.b32.xlu0 %v2967, 48
      %v3790 = vpop.permute.xlu0 %3789
      %3791 = vrot.lane.b32.xlu0 %v2968, 48
      %v3792 = vpop.permute.xlu0 %3791
      %3793 = vrot.lane.b32.xlu0 %v2969, 48
      %v3794 = vpop.permute.xlu0 %3793
      %3795 = vrot.lane.b32.xlu0 %v2970, 48
      %v3796 = vpop.permute.xlu0 %3795
      %3797 = vrot.lane.b32.xlu0 %v2971, 48
      %v3798 = vpop.permute.xlu0 %3797
      %3799 = vrot.lane.b32.xlu0 %v2972, 48
      %v3800 = vpop.permute.xlu0 %3799
      %3801 = vrot.lane.b32.xlu0 %v2973, 48
      %v3802 = vpop.permute.xlu0 %3801
      %3803 = vrot.lane.b32.xlu0 %v2974, 48
      %v3804 = vpop.permute.xlu0 %3803
      %3805 = vrot.lane.b32.xlu0 %v2975, 48
      %v3806 = vpop.permute.xlu0 %3805
      %3807 = vrot.lane.b32.xlu0 %v2976, 48
      %v3808 = vpop.permute.xlu0 %3807
      %3881 = vrot.lane.b32.xlu0 %v2977, 56
      %v3882 = vpop.permute.xlu0 %3881
      %3883 = vrot.lane.b32.xlu0 %v2978, 56
      %v3884 = vpop.permute.xlu0 %3883
      %3885 = vrot.lane.b32.xlu0 %v2979, 56
      %v3886 = vpop.permute.xlu0 %3885
      %3887 = vrot.lane.b32.xlu0 %v2980, 56
      %v3888 = vpop.permute.xlu0 %3887
      %3889 = vrot.lane.b32.xlu0 %v2981, 56
      %v3890 = vpop.permute.xlu0 %3889
      %3891 = vrot.lane.b32.xlu0 %v2982, 56
      %v3892 = vpop.permute.xlu0 %3891
      %3893 = vrot.lane.b32.xlu0 %v2983, 56
      %v3894 = vpop.permute.xlu0 %3893
      %3895 = vrot.lane.b32.xlu0 %v2984, 56
      %v3896 = vpop.permute.xlu0 %3895
      %3897 = vrot.lane.b32.xlu0 %v2985, 56
      %v3898 = vpop.permute.xlu0 %3897
      %3899 = vrot.lane.b32.xlu0 %v2986, 56
      %v3900 = vpop.permute.xlu0 %3899
      %3901 = vrot.lane.b32.xlu0 %v2987, 56
      %v3902 = vpop.permute.xlu0 %3901
      %3903 = vrot.lane.b32.xlu0 %v2988, 56
      %v3904 = vpop.permute.xlu0 %3903
      %3905 = vrot.lane.b32.xlu0 %v2989, 56
      %v3906 = vpop.permute.xlu0 %3905
      %3907 = vrot.lane.b32.xlu0 %v2990, 56
      %v3908 = vpop.permute.xlu0 %3907
      %3909 = vrot.lane.b32.xlu0 %v2991, 56
      %v3910 = vpop.permute.xlu0 %3909
      %3911 = vrot.lane.b32.xlu0 %v2992, 56
      %v3912 = vpop.permute.xlu0 %3911
      %3913 = vrot.lane.b32.xlu0 %v2993, 56
      %v3914 = vpop.permute.xlu0 %3913
      %3915 = vrot.lane.b32.xlu0 %v2994, 56
      %v3916 = vpop.permute.xlu0 %3915
      %3917 = vrot.lane.b32.xlu0 %v2995, 56
      %v3918 = vpop.permute.xlu0 %3917
      %3919 = vrot.lane.b32.xlu0 %v2996, 56
      %v3920 = vpop.permute.xlu0 %3919
      %3921 = vrot.lane.b32.xlu0 %v2997, 56
      %v3922 = vpop.permute.xlu0 %3921
      %3923 = vrot.lane.b32.xlu0 %v2998, 56
      %v3924 = vpop.permute.xlu0 %3923
      %3925 = vrot.lane.b32.xlu0 %v2999, 56
      %v3926 = vpop.permute.xlu0 %3925
      %3927 = vrot.lane.b32.xlu0 %v3000, 56
      %v3928 = vpop.permute.xlu0 %3927
      %3929 = vrot.lane.b32.xlu0 %v3001, 56
      %v3930 = vpop.permute.xlu0 %3929
      %3931 = vrot.lane.b32.xlu0 %v3002, 56
      %v3932 = vpop.permute.xlu0 %3931
      %3933 = vrot.lane.b32.xlu0 %v3003, 56
      %v3934 = vpop.permute.xlu0 %3933
      %3935 = vrot.lane.b32.xlu0 %v3004, 56
      %v3936 = vpop.permute.xlu0 %3935
      %3937 = vrot.lane.b32.xlu0 %v3005, 56
      %v3938 = vpop.permute.xlu0 %3937
      %3939 = vrot.lane.b32.xlu0 %v3006, 56
      %v3940 = vpop.permute.xlu0 %3939
      %3941 = vrot.lane.b32.xlu0 %v3007, 56
      %v3942 = vpop.permute.xlu0 %3941
      %3943 = vrot.lane.b32.xlu0 %v3008, 56
      %v3944 = vpop.permute.xlu0 %3943
      %3945 = vrot.lane.b32.xlu0 %v3009, 56
      %v3946 = vpop.permute.xlu0 %3945
      %3947 = vrot.lane.b32.xlu0 %v3010, 56
      %v3948 = vpop.permute.xlu0 %3947
      %3949 = vrot.lane.b32.xlu0 %v3011, 56
      %v3950 = vpop.permute.xlu0 %3949
      %3951 = vrot.lane.b32.xlu0 %v3012, 56
      %v3952 = vpop.permute.xlu0 %3951
      %4025 = vrot.lane.b32.xlu0 %v3013, 64
      %v4026 = vpop.permute.xlu0 %4025
      %4027 = vrot.lane.b32.xlu0 %v3014, 64
      %v4028 = vpop.permute.xlu0 %4027
      %4029 = vrot.lane.b32.xlu0 %v3015, 64
      %v4030 = vpop.permute.xlu0 %4029
      %4031 = vrot.lane.b32.xlu0 %v3016, 64
      %v4032 = vpop.permute.xlu0 %4031
      %4033 = vrot.lane.b32.xlu0 %v3017, 64
      %v4034 = vpop.permute.xlu0 %4033
      %4035 = vrot.lane.b32.xlu0 %v3018, 64
      %v4036 = vpop.permute.xlu0 %4035
      %4037 = vrot.lane.b32.xlu0 %v3019, 64
      %v4038 = vpop.permute.xlu0 %4037
      %4039 = vrot.lane.b32.xlu0 %v3020, 64
      %v4040 = vpop.permute.xlu0 %4039
      %4041 = vrot.lane.b32.xlu0 %v3021, 64
      %v4042 = vpop.permute.xlu0 %4041
      %4043 = vrot.lane.b32.xlu0 %v3022, 64
      %v4044 = vpop.permute.xlu0 %4043
      %4045 = vrot.lane.b32.xlu0 %v3023, 64
      %v4046 = vpop.permute.xlu0 %4045
      %4047 = vrot.lane.b32.xlu0 %v3024, 64
      %v4048 = vpop.permute.xlu0 %4047
      %4049 = vrot.lane.b32.xlu0 %v3025, 64
      %v4050 = vpop.permute.xlu0 %4049
      %4051 = vrot.lane.b32.xlu0 %v3026, 64
      %v4052 = vpop.permute.xlu0 %4051
      %4053 = vrot.lane.b32.xlu0 %v3027, 64
      %v4054 = vpop.permute.xlu0 %4053
      %4055 = vrot.lane.b32.xlu0 %v3028, 64
      %v4056 = vpop.permute.xlu0 %4055
      %4057 = vrot.lane.b32.xlu0 %v3029, 64
      %v4058 = vpop.permute.xlu0 %4057
      %4059 = vrot.lane.b32.xlu0 %v3030, 64
      %v4060 = vpop.permute.xlu0 %4059
      %4061 = vrot.lane.b32.xlu0 %v3031, 64
      %v4062 = vpop.permute.xlu0 %4061
      %4063 = vrot.lane.b32.xlu0 %v3032, 64
      %v4064 = vpop.permute.xlu0 %4063
      %4065 = vrot.lane.b32.xlu0 %v3033, 64
      %v4066 = vpop.permute.xlu0 %4065
      %4067 = vrot.lane.b32.xlu0 %v3034, 64
      %v4068 = vpop.permute.xlu0 %4067
      %4069 = vrot.lane.b32.xlu0 %v3035, 64
      %v4070 = vpop.permute.xlu0 %4069
      %4071 = vrot.lane.b32.xlu0 %v3036, 64
      %v4072 = vpop.permute.xlu0 %4071
      %4073 = vrot.lane.b32.xlu0 %v3037, 64
      %v4074 = vpop.permute.xlu0 %4073
      %4075 = vrot.lane.b32.xlu0 %v3038, 64
      %v4076 = vpop.permute.xlu0 %4075
      %4077 = vrot.lane.b32.xlu0 %v3039, 64
      %v4078 = vpop.permute.xlu0 %4077
      %4079 = vrot.lane.b32.xlu0 %v3040, 64
      %v4080 = vpop.permute.xlu0 %4079
      %4081 = vrot.lane.b32.xlu0 %v3041, 64
      %v4082 = vpop.permute.xlu0 %4081
      %4083 = vrot.lane.b32.xlu0 %v3042, 64
      %v4084 = vpop.permute.xlu0 %4083
      %4085 = vrot.lane.b32.xlu0 %v3043, 64
      %v4086 = vpop.permute.xlu0 %4085
      %4087 = vrot.lane.b32.xlu0 %v3044, 64
      %v4088 = vpop.permute.xlu0 %4087
      %4089 = vrot.lane.b32.xlu0 %v3045, 64
      %v4090 = vpop.permute.xlu0 %4089
      %4091 = vrot.lane.b32.xlu0 %v3046, 64
      %v4092 = vpop.permute.xlu0 %4091
      %4093 = vrot.lane.b32.xlu0 %v3047, 64
      %v4094 = vpop.permute.xlu0 %4093
      %4095 = vrot.lane.b32.xlu0 %v3048, 64
      %v4096 = vpop.permute.xlu0 %4095
      %v4133 = vsel %vm273, %v2793, %v3086
      %v4134 = vsel %vm273, %v2794, %v3088
      %v4135 = vsel %vm273, %v2795, %v3090
      %v4136 = vsel %vm273, %v2796, %v3092
      %v4137 = vsel %vm273, %v2797, %v3094
      %v4138 = vsel %vm273, %v2798, %v3096
      %v4139 = vsel %vm273, %v2799, %v3098
      %v4140 = vsel %vm273, %v2800, %v3100
      %v4141 = vsel %vm273, %v2801, %v3102
      %v4142 = vsel %vm273, %v2802, %v3104
      %v4143 = vsel %vm273, %v2803, %v3106
      %v4144 = vsel %vm273, %v2804, %v3108
      %v4145 = vsel %vm273, %v2805, %v3110
      %v4146 = vsel %vm273, %v2806, %v3112
      %v4147 = vsel %vm273, %v2807, %v3114
      %v4148 = vsel %vm273, %v2808, %v3116
      %v4149 = vsel %vm273, %v2809, %v3118
      %v4150 = vsel %vm273, %v2810, %v3120
      %v4151 = vsel %vm273, %v2811, %v3122
      %v4152 = vsel %vm273, %v2812, %v3124
      %v4153 = vsel %vm273, %v2813, %v3126
      %v4154 = vsel %vm273, %v2814, %v3128
      %v4155 = vsel %vm273, %v2815, %v3130
      %v4156 = vsel %vm273, %v2816, %v3132
      %v4157 = vsel %vm273, %v2817, %v3134
      %v4158 = vsel %vm273, %v2818, %v3136
      %v4159 = vsel %vm273, %v2819, %v3138
      %v4160 = vsel %vm273, %v2820, %v3140
      %v4161 = vsel %vm273, %v2821, %v3142
      %v4162 = vsel %vm273, %v2822, %v3144
      %v4163 = vsel %vm273, %v2823, %v3146
      %v4164 = vsel %vm273, %v2824, %v3148
      %v4165 = vsel %vm273, %v2825, %v3150
      %v4166 = vsel %vm273, %v2826, %v3152
      %v4167 = vsel %vm273, %v2827, %v3154
      %v4168 = vsel %vm273, %v2828, %v3156
      %v4169 = vsel %vm2152, %v4133, %v3230
      %v4170 = vsel %vm2152, %v4134, %v3232
      %v4171 = vsel %vm2152, %v4135, %v3234
      %v4172 = vsel %vm2152, %v4136, %v3236
      %v4173 = vsel %vm2152, %v4137, %v3238
      %v4174 = vsel %vm2152, %v4138, %v3240
      %v4175 = vsel %vm2152, %v4139, %v3242
      %v4176 = vsel %vm2152, %v4140, %v3244
      %v4177 = vsel %vm2152, %v4141, %v3246
      %v4178 = vsel %vm2152, %v4142, %v3248
      %v4179 = vsel %vm2152, %v4143, %v3250
      %v4180 = vsel %vm2152, %v4144, %v3252
      %v4181 = vsel %vm2152, %v4145, %v3254
      %v4182 = vsel %vm2152, %v4146, %v3256
      %v4183 = vsel %vm2152, %v4147, %v3258
      %v4184 = vsel %vm2152, %v4148, %v3260
      %v4185 = vsel %vm2152, %v4149, %v3262
      %v4186 = vsel %vm2152, %v4150, %v3264
      %v4187 = vsel %vm2152, %v4151, %v3266
      %v4188 = vsel %vm2152, %v4152, %v3268
      %v4189 = vsel %vm2152, %v4153, %v3270
      %v4190 = vsel %vm2152, %v4154, %v3272
      %v4191 = vsel %vm2152, %v4155, %v3274
      %v4192 = vsel %vm2152, %v4156, %v3276
      %v4193 = vsel %vm2152, %v4157, %v3278
      %v4194 = vsel %vm2152, %v4158, %v3280
      %v4195 = vsel %vm2152, %v4159, %v3282
      %v4196 = vsel %vm2152, %v4160, %v3284
      %v4197 = vsel %vm2152, %v4161, %v3286
      %v4198 = vsel %vm2152, %v4162, %v3288
      %v4199 = vsel %vm2152, %v4163, %v3290
      %v4200 = vsel %vm2152, %v4164, %v3292
      %v4201 = vsel %vm2152, %v4165, %v3294
      %v4202 = vsel %vm2152, %v4166, %v3296
      %v4203 = vsel %vm2152, %v4167, %v3298
      %v4204 = vsel %vm2152, %v4168, %v3300
      %v4205 = vsel %vm2189, %v4169, %v3340
      %v4206 = vsel %vm2189, %v4170, %v3342
      %v4207 = vsel %vm2189, %v4171, %v3344
      %v4208 = vsel %vm2189, %v4172, %v3346
      %v4209 = vsel %vm2189, %v4173, %v3348
      %v4210 = vsel %vm2189, %v4174, %v3350
      %v4211 = vsel %vm2189, %v4175, %v3352
      %v4212 = vsel %vm2189, %v4176, %v3354
      %v4213 = vsel %vm2189, %v4177, %v3356
      %v4214 = vsel %vm2189, %v4178, %v3358
      %v4215 = vsel %vm2189, %v4179, %v3360
      %v4216 = vsel %vm2189, %v4180, %v3362
      %v4217 = vsel %vm2189, %v4181, %v3364
      %v4218 = vsel %vm2189, %v4182, %v3366
      %v4219 = vsel %vm2189, %v4183, %v3368
      %v4220 = vsel %vm2189, %v4184, %v3370
      %v4221 = vsel %vm2189, %v4185, %v3372
      %v4222 = vsel %vm2189, %v4186, %v3374
      %v4223 = vsel %vm2189, %v4187, %v3376
      %v4224 = vsel %vm2189, %v4188, %v3378
      %v4225 = vsel %vm2189, %v4189, %v3380
      %v4226 = vsel %vm2189, %v4190, %v3382
      %v4227 = vsel %vm2189, %v4191, %v3384
      %v4228 = vsel %vm2189, %v4192, %v3386
      %v4229 = vsel %vm2189, %v4193, %v3388
      %v4230 = vsel %vm2189, %v4194, %v3390
      %v4231 = vsel %vm2189, %v4195, %v3392
      %v4232 = vsel %vm2189, %v4196, %v3394
      %v4233 = vsel %vm2189, %v4197, %v3396
      %v4234 = vsel %vm2189, %v4198, %v3398
      %v4235 = vsel %vm2189, %v4199, %v3400
      %v4236 = vsel %vm2189, %v4200, %v3402
      %v4237 = vsel %vm2189, %v4201, %v3404
      %v4238 = vsel %vm2189, %v4202, %v3406
      %v4239 = vsel %vm2189, %v4203, %v3408
      %v4240 = vsel %vm2189, %v4204, %v3410
      %v4241 = vsel %vm2226, %v4205, %v3484
      %v4242 = vsel %vm2226, %v4206, %v3486
      %v4243 = vsel %vm2226, %v4207, %v3488
      %v4244 = vsel %vm2226, %v4208, %v3490
      %v4245 = vsel %vm2226, %v4209, %v3492
      %v4246 = vsel %vm2226, %v4210, %v3494
      %v4247 = vsel %vm2226, %v4211, %v3496
      %v4248 = vsel %vm2226, %v4212, %v3498
      %v4249 = vsel %vm2226, %v4213, %v3500
      %v4250 = vsel %vm2226, %v4214, %v3502
      %v4251 = vsel %vm2226, %v4215, %v3504
      %v4252 = vsel %vm2226, %v4216, %v3506
      %v4253 = vsel %vm2226, %v4217, %v3508
      %v4254 = vsel %vm2226, %v4218, %v3510
      %v4255 = vsel %vm2226, %v4219, %v3512
      %v4256 = vsel %vm2226, %v4220, %v3514
      %v4257 = vsel %vm2226, %v4221, %v3516
      %v4258 = vsel %vm2226, %v4222, %v3518
      %v4259 = vsel %vm2226, %v4223, %v3520
      %v4260 = vsel %vm2226, %v4224, %v3522
      %v4261 = vsel %vm2226, %v4225, %v3524
      %v4262 = vsel %vm2226, %v4226, %v3526
      %v4263 = vsel %vm2226, %v4227, %v3528
      %v4264 = vsel %vm2226, %v4228, %v3530
      %v4265 = vsel %vm2226, %v4229, %v3532
      %v4266 = vsel %vm2226, %v4230, %v3534
      %v4267 = vsel %vm2226, %v4231, %v3536
      %v4268 = vsel %vm2226, %v4232, %v3538
      %v4269 = vsel %vm2226, %v4233, %v3540
      %v4270 = vsel %vm2226, %v4234, %v3542
      %v4271 = vsel %vm2226, %v4235, %v3544
      %v4272 = vsel %vm2226, %v4236, %v3546
      %v4273 = vsel %vm2226, %v4237, %v3548
      %v4274 = vsel %vm2226, %v4238, %v3550
      %v4275 = vsel %vm2226, %v4239, %v3552
      %v4276 = vsel %vm2226, %v4240, %v3554
      %v4277 = vsel %vm2263, %v4241, %v3628
      %v4278 = vsel %vm2263, %v4242, %v3630
      %v4279 = vsel %vm2263, %v4243, %v3632
      %v4280 = vsel %vm2263, %v4244, %v3634
      %v4281 = vsel %vm2263, %v4245, %v3636
      %v4282 = vsel %vm2263, %v4246, %v3638
      %v4283 = vsel %vm2263, %v4247, %v3640
      %v4284 = vsel %vm2263, %v4248, %v3642
      %v4285 = vsel %vm2263, %v4249, %v3644
      %v4286 = vsel %vm2263, %v4250, %v3646
      %v4287 = vsel %vm2263, %v4251, %v3648
      %v4288 = vsel %vm2263, %v4252, %v3650
      %v4289 = vsel %vm2263, %v4253, %v3652
      %v4290 = vsel %vm2263, %v4254, %v3654
      %v4291 = vsel %vm2263, %v4255, %v3656
      %v4292 = vsel %vm2263, %v4256, %v3658
      %v4293 = vsel %vm2263, %v4257, %v3660
      %v4294 = vsel %vm2263, %v4258, %v3662
      %v4295 = vsel %vm2263, %v4259, %v3664
      %v4296 = vsel %vm2263, %v4260, %v3666
      %v4297 = vsel %vm2263, %v4261, %v3668
      %v4298 = vsel %vm2263, %v4262, %v3670
      %v4299 = vsel %vm2263, %v4263, %v3672
      %v4300 = vsel %vm2263, %v4264, %v3674
      %v4301 = vsel %vm2263, %v4265, %v3676
      %v4302 = vsel %vm2263, %v4266, %v3678
      %v4303 = vsel %vm2263, %v4267, %v3680
      %v4304 = vsel %vm2263, %v4268, %v3682
      %v4305 = vsel %vm2263, %v4269, %v3684
      %v4306 = vsel %vm2263, %v4270, %v3686
      %v4307 = vsel %vm2263, %v4271, %v3688
      %v4308 = vsel %vm2263, %v4272, %v3690
      %v4309 = vsel %vm2263, %v4273, %v3692
      %v4310 = vsel %vm2263, %v4274, %v3694
      %v4311 = vsel %vm2263, %v4275, %v3696
      %v4312 = vsel %vm2263, %v4276, %v3698
      %v4313 = vsel %vm2300, %v4277, %v3738
      %v4314 = vsel %vm2300, %v4278, %v3740
      %v4315 = vsel %vm2300, %v4279, %v3742
      %v4316 = vsel %vm2300, %v4280, %v3744
      %v4317 = vsel %vm2300, %v4281, %v3746
      %v4318 = vsel %vm2300, %v4282, %v3748
      %v4319 = vsel %vm2300, %v4283, %v3750
      %v4320 = vsel %vm2300, %v4284, %v3752
      %v4321 = vsel %vm2300, %v4285, %v3754
      %v4322 = vsel %vm2300, %v4286, %v3756
      %v4323 = vsel %vm2300, %v4287, %v3758
      %v4324 = vsel %vm2300, %v4288, %v3760
      %v4325 = vsel %vm2300, %v4289, %v3762
      %v4326 = vsel %vm2300, %v4290, %v3764
      %v4327 = vsel %vm2300, %v4291, %v3766
      %v4328 = vsel %vm2300, %v4292, %v3768
      %v4329 = vsel %vm2300, %v4293, %v3770
      %v4330 = vsel %vm2300, %v4294, %v3772
      %v4331 = vsel %vm2300, %v4295, %v3774
      %v4332 = vsel %vm2300, %v4296, %v3776
      %v4333 = vsel %vm2300, %v4297, %v3778
      %v4334 = vsel %vm2300, %v4298, %v3780
      %v4335 = vsel %vm2300, %v4299, %v3782
      %v4336 = vsel %vm2300, %v4300, %v3784
      %v4337 = vsel %vm2300, %v4301, %v3786
      %v4338 = vsel %vm2300, %v4302, %v3788
      %v4339 = vsel %vm2300, %v4303, %v3790
      %v4340 = vsel %vm2300, %v4304, %v3792
      %v4341 = vsel %vm2300, %v4305, %v3794
      %v4342 = vsel %vm2300, %v4306, %v3796
      %v4343 = vsel %vm2300, %v4307, %v3798
      %v4344 = vsel %vm2300, %v4308, %v3800
      %v4345 = vsel %vm2300, %v4309, %v3802
      %v4346 = vsel %vm2300, %v4310, %v3804
      %v4347 = vsel %vm2300, %v4311, %v3806
      %v4348 = vsel %vm2300, %v4312, %v3808
      %v4349 = vsel %vm2337, %v4313, %v3882
      %v4350 = vsel %vm2337, %v4314, %v3884
      %v4351 = vsel %vm2337, %v4315, %v3886
      %v4352 = vsel %vm2337, %v4316, %v3888
      %v4353 = vsel %vm2337, %v4317, %v3890
      %v4354 = vsel %vm2337, %v4318, %v3892
      %v4355 = vsel %vm2337, %v4319, %v3894
      %v4356 = vsel %vm2337, %v4320, %v3896
      %v4357 = vsel %vm2337, %v4321, %v3898
      %v4358 = vsel %vm2337, %v4322, %v3900
      %v4359 = vsel %vm2337, %v4323, %v3902
      %v4360 = vsel %vm2337, %v4324, %v3904
      %v4361 = vsel %vm2337, %v4325, %v3906
      %v4362 = vsel %vm2337, %v4326, %v3908
      %v4363 = vsel %vm2337, %v4327, %v3910
      %v4364 = vsel %vm2337, %v4328, %v3912
      %v4365 = vsel %vm2337, %v4329, %v3914
      %v4366 = vsel %vm2337, %v4330, %v3916
      %v4367 = vsel %vm2337, %v4331, %v3918
      %v4368 = vsel %vm2337, %v4332, %v3920
      %v4369 = vsel %vm2337, %v4333, %v3922
      %v4370 = vsel %vm2337, %v4334, %v3924
      %v4371 = vsel %vm2337, %v4335, %v3926
      %v4372 = vsel %vm2337, %v4336, %v3928
      %v4373 = vsel %vm2337, %v4337, %v3930
      %v4374 = vsel %vm2337, %v4338, %v3932
      %v4375 = vsel %vm2337, %v4339, %v3934
      %v4376 = vsel %vm2337, %v4340, %v3936
      %v4377 = vsel %vm2337, %v4341, %v3938
      %v4378 = vsel %vm2337, %v4342, %v3940
      %v4379 = vsel %vm2337, %v4343, %v3942
      %v4380 = vsel %vm2337, %v4344, %v3944
      %v4381 = vsel %vm2337, %v4345, %v3946
      %v4382 = vsel %vm2337, %v4346, %v3948
      %v4383 = vsel %vm2337, %v4347, %v3950
      %v4384 = vsel %vm2337, %v4348, %v3952
      %v4385 = vsel %vm2374, %v4349, %v4026
      %v4386 = vsel %vm2374, %v4350, %v4028
      %v4387 = vsel %vm2374, %v4351, %v4030
      %v4388 = vsel %vm2374, %v4352, %v4032
      %v4389 = vsel %vm2374, %v4353, %v4034
      %v4390 = vsel %vm2374, %v4354, %v4036
      %v4391 = vsel %vm2374, %v4355, %v4038
      %v4392 = vsel %vm2374, %v4356, %v4040
      %v4393 = vsel %vm2374, %v4357, %v4042
      %v4394 = vsel %vm2374, %v4358, %v4044
      %v4395 = vsel %vm2374, %v4359, %v4046
      %v4396 = vsel %vm2374, %v4360, %v4048
      %v4397 = vsel %vm2374, %v4361, %v4050
      %v4398 = vsel %vm2374, %v4362, %v4052
      %v4399 = vsel %vm2374, %v4363, %v4054
      %v4400 = vsel %vm2374, %v4364, %v4056
      %v4401 = vsel %vm2374, %v4365, %v4058
      %v4402 = vsel %vm2374, %v4366, %v4060
      %v4403 = vsel %vm2374, %v4367, %v4062
      %v4404 = vsel %vm2374, %v4368, %v4064
      %v4405 = vsel %vm2374, %v4369, %v4066
      %v4406 = vsel %vm2374, %v4370, %v4068
      %v4407 = vsel %vm2374, %v4371, %v4070
      %v4408 = vsel %vm2374, %v4372, %v4072
      %v4409 = vsel %vm2374, %v4373, %v4074
      %v4410 = vsel %vm2374, %v4374, %v4076
      %v4411 = vsel %vm2374, %v4375, %v4078
      %v4412 = vsel %vm2374, %v4376, %v4080
      %v4413 = vsel %vm2374, %v4377, %v4082
      %v4414 = vsel %vm2374, %v4378, %v4084
      %v4415 = vsel %vm2374, %v4379, %v4086
      %v4416 = vsel %vm2374, %v4380, %v4088
      %v4417 = vsel %vm2374, %v4381, %v4090
      %v4418 = vsel %vm2374, %v4382, %v4092
      %v4419 = vsel %vm2374, %v4383, %v4094
      %v4420 = vsel %vm2374, %v4384, %v4096
      %v4421 = vpack.c.bf16 %v4386, %v4385
      %v4422 = vpack.c.bf16 %v4388, %v4387
      %v4423 = vpack.c.bf16 %v4390, %v4389
      %v4424 = vpack.c.bf16 %v4392, %v4391
      %v4425 = vpack.c.bf16 %v4394, %v4393
      %v4426 = vpack.c.bf16 %v4396, %v4395
      %v4427 = vpack.c.bf16 %v4398, %v4397
      %v4428 = vpack.c.bf16 %v4400, %v4399
      %v4429 = vpack.c.bf16 %v4402, %v4401
      %v4430 = vpack.c.bf16 %v4404, %v4403
      %v4431 = vpack.c.bf16 %v4406, %v4405
      %v4432 = vpack.c.bf16 %v4408, %v4407
      %v4433 = vpack.c.bf16 %v4410, %v4409
      %v4434 = vpack.c.bf16 %v4412, %v4411
      %v4435 = vpack.c.bf16 %v4414, %v4413
      %v4436 = vpack.c.bf16 %v4416, %v4415
      %v4437 = vpack.c.bf16 %v4418, %v4417
      %v4438 = vpack.c.bf16 %v4420, %v4419
      %v4439 = vld [vmem:[%s4] sm:$0xf]
      %v4440 = vld [vmem:[%s4 + $0x4] sm:$0xf]
      %v4441 = vld [vmem:[%s4 + $0x8] sm:$0xf]
      %v4442 = vld [vmem:[%s4 + $0xc] sm:$0xf]
      %v4443 = vld [vmem:[%s4 + $0x10] sm:$0xf]
      %v4444 = vld [vmem:[%s4 + $0x14] sm:$0xf]
      %v4445 = vld [vmem:[%s4 + $0x18] sm:$0xf]
      %v4446 = vld [vmem:[%s4 + $0x1c] sm:$0xf]
      %v4447 = vld [vmem:[%s4 + $0x20] sm:$0xf]
      %v4448 = vld [vmem:[%s5] sm:$0x1]
      %v4450 = vlaneseq
      %v4451 = vshrl.u32 %v4450, 7
      %v4452 = vsub.s32 0, %v4451
      %v4453 = vrot.slane %v4448, %v4452
      %v4464 = vunpack.c.l.b16 %v4439
      %v4465 = vunpack.c.l.b16 %v4440
      %v4466 = vunpack.c.l.b16 %v4441
      %v4467 = vunpack.c.l.b16 %v4442
      %v4468 = vunpack.c.l.b16 %v4443
      %v4469 = vunpack.c.l.b16 %v4444
      %v4470 = vunpack.c.l.b16 %v4445
      %v4471 = vunpack.c.l.b16 %v4446
      %v4472 = vunpack.c.l.b16 %v4447
      %v4473 = vpack.c.b16 %v4465, %v4464
      %v4474 = vpack.c.b16 %v4467, %v4466
      %v4475 = vpack.c.b16 %v4469, %v4468
      %v4476 = vpack.c.b16 %v4471, %v4470
      %v4477 = vpack.c.b16 %v4472, %v4472
      %v4483 = vsel %vm2472, %v4421, 0
      %v4486 = vsel %vm2472, %v4422, 0
      %v4489 = vsel %vm2472, %v4423, 0
      %v4492 = vsel %vm2472, %v4424, 0
      %v4495 = vsel %vm2472, %v4425, 0
      %v4498 = vsel %vm2472, %v4426, 0
      %v4501 = vsel %vm2472, %v4427, 0
      %v4504 = vsel %vm2472, %v4428, 0
      %v4507 = vsel %vm2472, %v4429, 0
      %v4510 = vsel %vm2472, %v4430, 0
      %v4513 = vsel %vm2472, %v4431, 0
      %v4516 = vsel %vm2472, %v4432, 0
      %v4519 = vsel %vm2472, %v4433, 0
      %v4522 = vsel %vm2472, %v4434, 0
      %v4525 = vsel %vm2472, %v4435, 0
      %v4528 = vsel %vm2472, %v4436, 0
      %v4531 = vsel %vm2472, %v4437, 0
      %v4534 = vsel %vm2472, %v4438, 0
      %v4537 = vsel %vm2527, %v4477, 0
      %4539 = vmatprep.subr.bf16.mxu0 0
      %4540 = vmatpush1.bf16.msra.mxu0 0
      %4541 = vmatprep.subr.bf16.mxu0 0
      %4542 = vmatpush1.bf16.msra.mxu0 0
      %4543 = vmatprep.subr.bf16.mxu0 0
      %4544 = vmatpush1.bf16.msra.mxu0 0
      %4545 = vmatprep.subr.bf16.mxu0 0
      %4546 = vmatpush1.bf16.msra.mxu0 %v4537
      %4547 = vmatprep.subr.bf16.mxu0 0
      %4548 = vmatpush1.bf16.msra.mxu0 %v4476
      %4549 = vmatprep.subr.bf16.mxu0 0
      %4550 = vmatpush1.bf16.msra.mxu0 %v4475
      %4551 = vmatprep.subr.bf16.mxu0 0
      %4552 = vmatpush1.bf16.msra.mxu0 %v4474
      %4553 = vmatprep.subr.bf16.mxu0 0
      %4554 = vmatpush1.bf16.msra.mxu0 %v4473
      %4555 = vmatprep.subr.bf16.mxu0 0
      %4556 = vmatpush2.bf16.msra.mxu0 0
      %4557 = vmatprep.subr.bf16.mxu0 0
      %4558 = vmatpush2.bf16.msra.mxu0 0
      %4559 = vmatprep.subr.bf16.mxu0 0
      %4560 = vmatpush2.bf16.msra.mxu0 0
      %4561 = vmatprep.subr.bf16.mxu0 0
      %4562 = vmatpush2.bf16.msra.mxu0 0
      %4563 = vmatprep.subr.bf16.mxu0 0
      %4564 = vmatpush2.bf16.msra.mxu0 0
      %4565 = vmatprep.subr.bf16.mxu0 0
      %4566 = vmatpush2.bf16.msra.mxu0 0
      %4567 = vmatprep.subr.bf16.mxu0 0
      %4568 = vmatpush2.bf16.msra.mxu0 0
      %4569 = vmatprep.subr.bf16.mxu0 0
      %4570 = vmatpush2.bf16.msra.mxu0 0
      %4571 = vmatprep.mubr.bf16.mxu0 0
      %4572 = vmatmul.mubr.bf16.gmra.mxu0 %v4483
      %v4573 = vpop.f32.mrf.mxu0
      %v4574 = vadd.f32 %v4453, %v4573
      %v4575 = vpop.f32.mrf.mxu0
      %v4576 = vpop.f32.mrf.mxu0
      %v4577 = vadd.f32 %v4453, %v4576
      %v4578 = vpop.f32.mrf.mxu0
      %4579 = vmatprep.mubr.bf16.mxu0 0
      %4580 = vmatmul.mubr.bf16.gmra.mxu0 %v4486
      %v4581 = vpop.f32.mrf.mxu0
      %v4582 = vadd.f32 %v4453, %v4581
      %v4583 = vpop.f32.mrf.mxu0
      %v4584 = vpop.f32.mrf.mxu0
      %v4585 = vadd.f32 %v4453, %v4584
      %v4586 = vpop.f32.mrf.mxu0
      %4587 = vmatprep.mubr.bf16.mxu0 0
      %4588 = vmatmul.mubr.bf16.gmra.mxu0 %v4489
      %v4589 = vpop.f32.mrf.mxu0
      %v4590 = vadd.f32 %v4453, %v4589
      %v4591 = vpop.f32.mrf.mxu0
      %v4592 = vpop.f32.mrf.mxu0
      %v4593 = vadd.f32 %v4453, %v4592
      %v4594 = vpop.f32.mrf.mxu0
      %4595 = vmatprep.mubr.bf16.mxu0 0
      %4596 = vmatmul.mubr.bf16.gmra.mxu0 %v4492
      %v4597 = vpop.f32.mrf.mxu0
      %v4598 = vadd.f32 %v4453, %v4597
      %v4599 = vpop.f32.mrf.mxu0
      %v4600 = vpop.f32.mrf.mxu0
      %v4601 = vadd.f32 %v4453, %v4600
      %v4602 = vpop.f32.mrf.mxu0
      %4603 = vmatprep.mubr.bf16.mxu0 0
      %4604 = vmatmul.mubr.bf16.gmra.mxu0 %v4495
      %v4605 = vpop.f32.mrf.mxu0
      %v4606 = vadd.f32 %v4453, %v4605
      %v4607 = vpop.f32.mrf.mxu0
      %v4608 = vpop.f32.mrf.mxu0
      %v4609 = vadd.f32 %v4453, %v4608
      %v4610 = vpop.f32.mrf.mxu0
      %4611 = vmatprep.mubr.bf16.mxu0 0
      %4612 = vmatmul.mubr.bf16.gmra.mxu0 %v4498
      %v4613 = vpop.f32.mrf.mxu0
      %v4614 = vadd.f32 %v4453, %v4613
      %v4615 = vpop.f32.mrf.mxu0
      %v4616 = vpop.f32.mrf.mxu0
      %v4617 = vadd.f32 %v4453, %v4616
      %v4618 = vpop.f32.mrf.mxu0
      %4619 = vmatprep.mubr.bf16.mxu0 0
      %4620 = vmatmul.mubr.bf16.gmra.mxu0 %v4501
      %v4621 = vpop.f32.mrf.mxu0
      %v4622 = vadd.f32 %v4453, %v4621
      %v4623 = vpop.f32.mrf.mxu0
      %v4624 = vpop.f32.mrf.mxu0
      %v4625 = vadd.f32 %v4453, %v4624
      %v4626 = vpop.f32.mrf.mxu0
      %4627 = vmatprep.mubr.bf16.mxu0 0
      %4628 = vmatmul.mubr.bf16.gmra.mxu0 %v4504
      %v4629 = vpop.f32.mrf.mxu0
      %v4630 = vadd.f32 %v4453, %v4629
      %v4631 = vpop.f32.mrf.mxu0
      %v4632 = vpop.f32.mrf.mxu0
      %v4633 = vadd.f32 %v4453, %v4632
      %v4634 = vpop.f32.mrf.mxu0
      %4635 = vmatprep.mubr.bf16.mxu0 0
      %4636 = vmatmul.mubr.bf16.gmra.mxu0 %v4507
      %v4637 = vpop.f32.mrf.mxu0
      %v4638 = vadd.f32 %v4453, %v4637
      %v4639 = vpop.f32.mrf.mxu0
      %v4640 = vpop.f32.mrf.mxu0
      %v4641 = vadd.f32 %v4453, %v4640
      %v4642 = vpop.f32.mrf.mxu0
      %4643 = vmatprep.mubr.bf16.mxu0 0
      %4644 = vmatmul.mubr.bf16.gmra.mxu0 %v4510
      %v4645 = vpop.f32.mrf.mxu0
      %v4646 = vadd.f32 %v4453, %v4645
      %v4647 = vpop.f32.mrf.mxu0
      %v4648 = vpop.f32.mrf.mxu0
      %v4649 = vadd.f32 %v4453, %v4648
      %v4650 = vpop.f32.mrf.mxu0
      %4651 = vmatprep.mubr.bf16.mxu0 0
      %4652 = vmatmul.mubr.bf16.gmra.mxu0 %v4513
      %v4653 = vpop.f32.mrf.mxu0
      %v4654 = vadd.f32 %v4453, %v4653
      %v4655 = vpop.f32.mrf.mxu0
      %v4656 = vpop.f32.mrf.mxu0
      %v4657 = vadd.f32 %v4453, %v4656
      %v4658 = vpop.f32.mrf.mxu0
      %4659 = vmatprep.mubr.bf16.mxu0 0
      %4660 = vmatmul.mubr.bf16.gmra.mxu0 %v4516
      %v4661 = vpop.f32.mrf.mxu0
      %v4662 = vadd.f32 %v4453, %v4661
      %v4663 = vpop.f32.mrf.mxu0
      %v4664 = vpop.f32.mrf.mxu0
      %v4665 = vadd.f32 %v4453, %v4664
      %v4666 = vpop.f32.mrf.mxu0
      %4667 = vmatprep.mubr.bf16.mxu0 0
      %4668 = vmatmul.mubr.bf16.gmra.mxu0 %v4519
      %v4669 = vpop.f32.mrf.mxu0
      %v4670 = vadd.f32 %v4453, %v4669
      %v4671 = vpop.f32.mrf.mxu0
      %v4672 = vpop.f32.mrf.mxu0
      %v4673 = vadd.f32 %v4453, %v4672
      %v4674 = vpop.f32.mrf.mxu0
      %4675 = vmatprep.mubr.bf16.mxu0 0
      %4676 = vmatmul.mubr.bf16.gmra.mxu0 %v4522
      %v4677 = vpop.f32.mrf.mxu0
      %v4678 = vadd.f32 %v4453, %v4677
      %v4679 = vpop.f32.mrf.mxu0
      %v4680 = vpop.f32.mrf.mxu0
      %v4681 = vadd.f32 %v4453, %v4680
      %v4682 = vpop.f32.mrf.mxu0
      %4683 = vmatprep.mubr.bf16.mxu0 0
      %4684 = vmatmul.mubr.bf16.gmra.mxu0 %v4525
      %v4685 = vpop.f32.mrf.mxu0
      %v4686 = vadd.f32 %v4453, %v4685
      %v4687 = vpop.f32.mrf.mxu0
      %v4688 = vpop.f32.mrf.mxu0
      %v4689 = vadd.f32 %v4453, %v4688
      %v4690 = vpop.f32.mrf.mxu0
      %4691 = vmatprep.mubr.bf16.mxu0 0
      %4692 = vmatmul.mubr.bf16.gmra.mxu0 %v4528
      %v4693 = vpop.f32.mrf.mxu0
      %v4694 = vadd.f32 %v4453, %v4693
      %v4695 = vpop.f32.mrf.mxu0
      %v4696 = vpop.f32.mrf.mxu0
      %v4697 = vadd.f32 %v4453, %v4696
      %v4698 = vpop.f32.mrf.mxu0
      %4699 = vmatprep.mubr.bf16.mxu0 0
      %4700 = vmatmul.mubr.bf16.gmra.mxu0 %v4531
      %v4701 = vpop.f32.mrf.mxu0
      %v4702 = vadd.f32 %v4453, %v4701
      %v4703 = vpop.f32.mrf.mxu0
      %v4704 = vpop.f32.mrf.mxu0
      %v4705 = vadd.f32 %v4453, %v4704
      %v4706 = vpop.f32.mrf.mxu0
      %4707 = vmatprep.mubr.bf16.mxu0 0
      %4708 = vmatmul.mubr.bf16.gmra.mxu0 %v4534
      %v4709 = vpop.f32.mrf.mxu0
      %v4710 = vadd.f32 %v4453, %v4709
      %v4711 = vpop.f32.mrf.mxu0
      %v4712 = vpop.f32.mrf.mxu0
      %v4713 = vadd.f32 %v4453, %v4712
      %v4714 = vpop.f32.mrf.mxu0
      %4715 = vdwg.mxu0
      %v4716 = vmax.f32 %v4574, 0.0
      %v4717 = vmax.f32 %v4577, 0.0
      %v4718 = vmax.f32 %v4582, 0.0
      %v4719 = vmax.f32 %v4585, 0.0
      %v4720 = vmax.f32 %v4590, 0.0
      %v4721 = vmax.f32 %v4593, 0.0
      %v4722 = vmax.f32 %v4598, 0.0
      %v4723 = vmax.f32 %v4601, 0.0
      %v4724 = vmax.f32 %v4606, 0.0
      %v4725 = vmax.f32 %v4609, 0.0
      %v4726 = vmax.f32 %v4614, 0.0
      %v4727 = vmax.f32 %v4617, 0.0
      %v4728 = vmax.f32 %v4622, 0.0
      %v4729 = vmax.f32 %v4625, 0.0
      %v4730 = vmax.f32 %v4630, 0.0
      %v4731 = vmax.f32 %v4633, 0.0
      %v4732 = vmax.f32 %v4638, 0.0
      %v4733 = vmax.f32 %v4641, 0.0
      %v4734 = vmax.f32 %v4646, 0.0
      %v4735 = vmax.f32 %v4649, 0.0
      %v4736 = vmax.f32 %v4654, 0.0
      %v4737 = vmax.f32 %v4657, 0.0
      %v4738 = vmax.f32 %v4662, 0.0
      %v4739 = vmax.f32 %v4665, 0.0
      %v4740 = vmax.f32 %v4670, 0.0
      %v4741 = vmax.f32 %v4673, 0.0
      %v4742 = vmax.f32 %v4678, 0.0
      %v4743 = vmax.f32 %v4681, 0.0
      %v4744 = vmax.f32 %v4686, 0.0
      %v4745 = vmax.f32 %v4689, 0.0
      %v4746 = vmax.f32 %v4694, 0.0
      %v4747 = vmax.f32 %v4697, 0.0
      %v4748 = vmax.f32 %v4702, 0.0
      %v4749 = vmax.f32 %v4705, 0.0
      %v4750 = vmax.f32 %v4710, 0.0
      %v4751 = vmax.f32 %v4713, 0.0
      %4752 = vst.msk [vmem:[%s271] sm:$0xff] %vm273, %v4716
      %4753 = vst.msk [vmem:[%s271 + $0x8] sm:$0xff] %vm273, %v4717
      %s4754 = scalar_lea.vmem %s271, 16
      %4755 = vst.msk [vmem:[%s4754 - $0x2] sm:$0xfc] %vm2746, %v4718
      %4756 = vst.msk [vmem:[%s4754 + $0x6] sm:$0xff] %vm273, %v4719
      %4757 = vst.msk [vmem:[%s4754 + $0xe] sm:$0x3] %vm2749, %v4720
      %s4758 = scalar_lea.vmem %s271, 32
      %4759 = vst.msk [vmem:[%s4758 - $0x4] sm:$0xf0] %vm2751, %v4720
      %4760 = vst.msk [vmem:[%s4758 + $0x4] sm:$0xff] %vm273, %v4721
      %4761 = vst.msk [vmem:[%s4758 + $0xc] sm:$0xf] %vm2754, %v4722
      %s4762 = scalar_lea.vmem %s271, 48
      %4763 = vst.msk [vmem:[%s4762 - $0x6] sm:$0xc0] %vm2756, %v4722
      %4764 = vst.msk [vmem:[%s4762 + $0x2] sm:$0xff] %vm273, %v4723
      %4765 = vst.msk [vmem:[%s4762 + $0xa] sm:$0x3f] %vm316, %v4724
      %s4766 = scalar_lea.vmem %s271, 64
      %4767 = vst.msk [vmem:[%s4766] sm:$0xff] %vm273, %v4725
      %4768 = vst.msk [vmem:[%s4766 + $0x8] sm:$0xff] %vm273, %v4726
      %s4769 = scalar_lea.vmem %s271, 80
      %4770 = vst.msk [vmem:[%s4769 - $0x2] sm:$0xfc] %vm2746, %v4727
      %4771 = vst.msk [vmem:[%s4769 + $0x6] sm:$0xff] %vm273, %v4728
      %4772 = vst.msk [vmem:[%s4769 + $0xe] sm:$0x3] %vm2749, %v4729
      %s4773 = scalar_lea.vmem %s271, 96
      %4774 = vst.msk [vmem:[%s4773 - $0x4] sm:$0xf0] %vm2751, %v4729
      %4775 = vst.msk [vmem:[%s4773 + $0x4] sm:$0xff] %vm273, %v4730
      %4776 = vst.msk [vmem:[%s4773 + $0xc] sm:$0xf] %vm2754, %v4731
      %s4777 = scalar_lea.vmem %s271, 112
      %4778 = vst.msk [vmem:[%s4777 - $0x6] sm:$0xc0] %vm2756, %v4731
      %4779 = vst.msk [vmem:[%s4777 + $0x2] sm:$0xff] %vm273, %v4732
      %4780 = vst.msk [vmem:[%s4777 + $0xa] sm:$0x3f] %vm316, %v4733
      %s4781 = scalar_lea.vmem %s271, 128
      %4782 = vst.msk [vmem:[%s4781] sm:$0xff] %vm273, %v4734
      %4783 = vst.msk [vmem:[%s4781 + $0x8] sm:$0xff] %vm273, %v4735
      %s4784 = scalar_lea.vmem %s271, 144
      %4785 = vst.msk [vmem:[%s4784 - $0x2] sm:$0xfc] %vm2746, %v4736
      %4786 = vst.msk [vmem:[%s4784 + $0x6] sm:$0xff] %vm273, %v4737
      %4787 = vst.msk [vmem:[%s4784 + $0xe] sm:$0x3] %vm2749, %v4738
      %s4788 = scalar_lea.vmem %s271, 160
      %4789 = vst.msk [vmem:[%s4788 - $0x4] sm:$0xf0] %vm2751, %v4738
      %4790 = vst.msk [vmem:[%s4788 + $0x4] sm:$0xff] %vm273, %v4739
      %4791 = vst.msk [vmem:[%s4788 + $0xc] sm:$0xf] %vm2754, %v4740
      %s4792 = scalar_lea.vmem %s271, 176
      %4793 = vst.msk [vmem:[%s4792 - $0x6] sm:$0xc0] %vm2756, %v4740
      %4794 = vst.msk [vmem:[%s4792 + $0x2] sm:$0xff] %vm273, %v4741
      %4795 = vst.msk [vmem:[%s4792 + $0xa] sm:$0x3f] %vm316, %v4742
      %s4796 = scalar_lea.vmem %s271, 192
      %4797 = vst.msk [vmem:[%s4796] sm:$0xff] %vm273, %v4743
      %4798 = vst.msk [vmem:[%s4796 + $0x8] sm:$0xff] %vm273, %v4744
      %s4799 = scalar_lea.vmem %s271, 208
      %4800 = vst.msk [vmem:[%s4799 - $0x2] sm:$0xfc] %vm2746, %v4745
      %4801 = vst.msk [vmem:[%s4799 + $0x6] sm:$0xff] %vm273, %v4746
      %4802 = vst.msk [vmem:[%s4799 + $0xe] sm:$0x3] %vm2749, %v4747
      %s4803 = scalar_lea.vmem %s271, 224
      %4804 = vst.msk [vmem:[%s4803 - $0x4] sm:$0xf0] %vm2751, %v4747
      %4805 = vst.msk [vmem:[%s4803 + $0x4] sm:$0xff] %vm273, %v4748
      %4806 = vst.msk [vmem:[%s4803 + $0xc] sm:$0xf] %vm2754, %v4749
      %s4807 = scalar_lea.vmem %s271, 240
      %4808 = vst.msk [vmem:[%s4807 - $0x6] sm:$0xc0] %vm2756, %v4749
      %4809 = vst.msk [vmem:[%s4807 + $0x2] sm:$0xff] %vm273, %v4750
      %4810 = vst.msk [vmem:[%s4807 + $0xa] sm:$0x3f] %vm316, %v4751
      %p4811 = scmp.lt.s32.totalorder %s17, 1
      %s4812 = scalar_select %p4811, %s17, 1
      %s4813 = smul.addr %s4812, 32
      %s4814 = smul.addr %s4813, 8
      %s4815 = scalar_lea.vmem %s6, %s4814
      // Predicated region
      $region45: #{decoder_block_forward.1} parent=43 // pred_check
        %p4816 = pneg %p171
      $region46: #{decoder_block_forward.1} parent=43 // pred_check_branch
        %4818 = sbr.rel (%p4816) target = $region48
      $region47: #{decoder_block_forward.1} parent=43 // pred_region
        _
      $region48: #{decoder_block_forward.1} parent=43 // pred_fallthru
        _
    $region44: #{decoder_block_forward.1} parent=5 // pred_fallthru
      _
    %p4819 = scmp.le.s32.totalorder 2, %s12
    // Predicated region
    $region49: #{decoder_block_forward.1} parent=5 // pred_check
      %p4820 = pneg %p4819
    $region50: #{decoder_block_forward.1} parent=5 // pred_check_branch
      %4822 = sbr.rel (%p4820) target = $region52
    $region51: #{decoder_block_forward.1} parent=5 // pred_region
      %s4823 = ssub.s32 %s12, 2
      // Predicated region
      $region53: #{decoder_block_forward.1} parent=51 // pred_check
        %p4824 = pneg %p177
      $region54: #{decoder_block_forward.1} parent=51 // pred_check_branch
        %4826 = sbr.rel (%p4824) target = $region56
      $region55: #{decoder_block_forward.1} parent=51 // pred_region
        %p4827 = scmp.lt.s32.totalorder %s18, 1
        %s4828 = scalar_select %p4827, %s18, 1
        %s4829 = smul.addr %s4828, 32
        %s4830 = smul.addr %s4829, 8
        %s4831 = scalar_lea.vmem %s6, %s4830
      $region56: #{decoder_block_forward.1} parent=51 // pred_fallthru
        _
    $region52: #{decoder_block_forward.1} parent=5 // pred_fallthru
      _
  $region6: #{decoder_block_forward.1} parent=0 // loop_footer
    %s16 = sadd.s32 1, %s12
  $region7: #{decoder_block_forward.1} parent=0 // loop_footer_branch
    %11 = sbr.rel target = $region3
  $region8: #{decoder_block_forward.1} parent=0 // loop_exit
    _

</llo_original>
